<compile_context>
chip_gen: v7x
topology: tpu7x:2x2x1
jax: 0.10.0
libtpu: 0.0.40
codegen_flags: <defaults>
</compile_context>

<pallas_src>
import math

import jax
import jax.numpy as jnp
from jax import lax
from jax.experimental import pallas as pl
from jax.experimental.pallas import tpu as pltpu

# ---- model hyper-parameters (small, consistent with the module) ----
N_BLOCKS = 2
D_MODEL = 32
N_HEADS = 4
D_HEAD = D_MODEL // N_HEADS
D_FF = 64
SEQ = 8
BATCH = 2
EPS = 1e-6

# lane-column assignment inside the per-block bias/LN slab (shape (96, 8))
C_BQKV, C_FFB1, C_LN1_A, C_LN1_B, C_LN2_A, C_LN2_B, C_BO, C_FFB2 = range(8)
VEC_ROWS = 3 * D_MODEL          # 96 rows: holds bqkv (96) / ff_b1 (64) / 32-vectors


def _layernorm_cols(x, a, b):
    """LayerNorm over the feature axis, which is axis 0 (sublanes) in the
    transposed (d_model, tokens) activation layout.
    Matches the PyTorch LayerNorm in the spec: unbiased std (N-1) and a
    (std + eps) denominator.  Exact divide (no approx reciprocal) — LN feeds
    every residual, keep it tight (review correctness concern)."""
    d = x.shape[0]
    mean = jnp.mean(x, axis=0, keepdims=True)
    diff = x - mean
    var = jnp.sum(diff * diff, axis=0, keepdims=True) * (1.0 / (d - 1))
    std = jnp.sqrt(var)
    return a * diff / (std + EPS) + b


def transformer_stack_kernel(bias_ref, x_ref, wqkv_ref, ffw1_ref, wo_ref,
                             ffw2_ref, vec_ref, o_ref):
    # One grid step == one batch element.  Activations stay transposed as
    # (d_model, seq): head channels live on the sublane axis, so every per-head
    # slice below is a free 8-row sublane slice (no lane shuffles / stacks).
    x = x_ref[...].astype(jnp.float32)                          # (D_MODEL, SEQ)
    att_bias = bias_ref[...]                                    # (SEQ, SEQ) additive
    # rows are (head, query) pairs -> one softmax pass covers all heads
    bias_rows = jnp.concatenate([att_bias] * N_HEADS, axis=0)   # (H*SEQ, SEQ)

    for blk in range(N_BLOCKS):                                 # static unroll
        wqkv_t = wqkv_ref[blk]                                  # (96, 32) bf16
        ffw1_t = ffw1_ref[blk]                                  # (64, 32) bf16
        wo_t   = wo_ref[blk]                                    # (32, 32) bf16
        ffw2_t = ffw2_ref[blk]                                  # (32, 64) bf16
        vec    = vec_ref[blk]                                   # (96, 8)  f32

        bqkv  = vec[:, C_BQKV:C_BQKV + 1]                       # (96, 1)
        ff_b1 = vec[0:D_FF, C_FFB1:C_FFB1 + 1]                  # (64, 1)
        ln1_a = vec[0:D_MODEL, C_LN1_A:C_LN1_A + 1]
        ln1_b = vec[0:D_MODEL, C_LN1_B:C_LN1_B + 1]
        ln2_a = vec[0:D_MODEL, C_LN2_A:C_LN2_A + 1]
        ln2_b = vec[0:D_MODEL, C_LN2_B:C_LN2_B + 1]
        bo    = vec[0:D_MODEL, C_BO:C_BO + 1]
        ff_b2 = vec[0:D_MODEL, C_FFB2:C_FFB2 + 1]

        # ---------- self-attention sublayer (pre-LN residual) ----------
        xn = _layernorm_cols(x, ln1_a, ln1_b)
        # fused QKV projection, bf16 operands / f32 accumulation, transposed:
        qkv = jnp.dot(wqkv_t, xn.astype(jnp.bfloat16),
                      preferred_element_type=jnp.float32) + bqkv   # (96, SEQ) f32

        # scores per head; q/k slices are free sublane slices of qkv
        # (1/sqrt(d_head) scale already folded into the Q weights/bias)
        s_rows = []
        for h in range(N_HEADS):
            q_h = qkv[h * D_HEAD:(h + 1) * D_HEAD, :]              # (D_HEAD, SEQ)
            k_h = qkv[(N_HEADS + h) * D_HEAD:(N_HEADS + h + 1) * D_HEAD, :]
            s_rows.append(jnp.dot(jnp.transpose(q_h), k_h,
                                  preferred_element_type=jnp.float32))  # (SEQ, SEQ)
        s_all = jnp.concatenate(s_rows, axis=0) + bias_rows         # (H*SEQ, SEQ)

        # softmax over keys (lanes), all heads at once; approx reciprocal is
        # fine for the denominator (EUP slot, otherwise idle)
        s_all = s_all - jnp.max(s_all, axis=-1, keepdims=True)
        p_all = jnp.exp(s_all)
        p_all = p_all * pl.reciprocal(jnp.sum(p_all, axis=-1, keepdims=True),
                                      approx=True)

        # P @ V per head directly in transposed (d_head, seq) layout, then ONE
        # fused output projection instead of 4 tiny per-head projections.
        o_rows = []
        for h in range(N_HEADS):
            v_h = qkv[(2 * N_HEADS + h) * D_HEAD:(2 * N_HEADS + h + 1) * D_HEAD, :]
            p_h = p_all[h * SEQ:(h + 1) * SEQ, :]                  # free sublane slice
            o_rows.append(lax.dot_general(
                v_h.astype(jnp.bfloat16), p_h.astype(jnp.bfloat16),
                (((1,), (1,)), ((), ())),                          # contract over keys
                preferred_element_type=jnp.float32))               # (D_HEAD, SEQ)
        o_flat = jnp.concatenate(o_rows, axis=0)                   # (D_MODEL, SEQ)
        attn = jnp.dot(wo_t, o_flat.astype(jnp.bfloat16),
                       preferred_element_type=jnp.float32)         # (D_MODEL, SEQ)
        x = x + attn + bo
        # TODO(synk): dropout inside the residual sublayers is omitted (eval / p=0).

        # ---------- position-wise feed-forward sublayer (pre-LN residual) ----------
        xn = _layernorm_cols(x, ln2_a, ln2_b)
        h1 = jnp.maximum(
            jnp.dot(ffw1_t, xn.astype(jnp.bfloat16),
                    preferred_element_type=jnp.float32) + ff_b1, 0.0)   # (D_FF, SEQ)
        x = x + jnp.dot(ffw2_t, h1.astype(jnp.bfloat16),
                        preferred_element_type=jnp.float32) + ff_b2

    # ---------- final LayerNorm of the stack ----------
    fin = vec_ref[N_BLOCKS]                                         # (96, 8)
    out = _layernorm_cols(x, fin[0:D_MODEL, 0:1], fin[0:D_MODEL, 1:2])
    o_ref[...] = out.astype(o_ref.dtype)


# ------------------------- wrapper-side packing -------------------------

def _attention_bias(mask):
    """(BATCH, SEQ, SEQ) {0,1} mask -> additive bias (0 keep / -1e9 masked)."""
    return jnp.where(mask > 0.5, 0.0, -1e9).astype(jnp.float32)


def pack_params(params):
    """Pre-transpose weights for the transposed-activation kernel, fold the
    1/sqrt(d_head) scale into Q, cast matmul weights to bf16, and pack all
    bias / LayerNorm vectors into one small f32 column slab."""
    (ln1_a, ln1_b, wq, bq, wk, bk, wv, bv, wo, bo,
     ln2_a, ln2_b, ff_w1, ff_b1, ff_w2, ff_b2, lnf_a, lnf_b) = params

    inv = jnp.float32(1.0 / math.sqrt(D_HEAD))
    wqkv_t = jnp.concatenate(
        [jnp.swapaxes(wq * inv, 1, 2), jnp.swapaxes(wk, 1, 2),
         jnp.swapaxes(wv, 1, 2)], axis=1).astype(jnp.bfloat16)       # (NB, 96, 32)
    ffw1_t = jnp.swapaxes(ff_w1, 1, 2).astype(jnp.bfloat16)          # (NB, 64, 32)
    wo_t   = jnp.swapaxes(wo, 1, 2).astype(jnp.bfloat16)             # (NB, 32, 32)
    ffw2_t = jnp.swapaxes(ff_w2, 1, 2).astype(jnp.bfloat16)          # (NB, 32, 64)

    bqkv = jnp.concatenate([bq * inv, bk, bv], axis=-1)              # (NB, 96)

    vec = jnp.zeros((N_BLOCKS + 1, VEC_ROWS, 8), jnp.float32)
    vec = vec.at[:N_BLOCKS, :, C_BQKV].set(bqkv)
    vec = vec.at[:N_BLOCKS, :D_FF, C_FFB1].set(ff_b1)
    vec = vec.at[:N_BLOCKS, :D_MODEL, C_LN1_A].set(ln1_a)
    vec = vec.at[:N_BLOCKS, :D_MODEL, C_LN1_B].set(ln1_b)
    vec = vec.at[:N_BLOCKS, :D_MODEL, C_LN2_A].set(ln2_a)
    vec = vec.at[:N_BLOCKS, :D_MODEL, C_LN2_B].set(ln2_b)
    vec = vec.at[:N_BLOCKS, :D_MODEL, C_BO].set(bo)
    vec = vec.at[:N_BLOCKS, :D_MODEL, C_FFB2].set(ff_b2)
    vec = vec.at[N_BLOCKS, :D_MODEL, 0].set(lnf_a.reshape(-1))
    vec = vec.at[N_BLOCKS, :D_MODEL, 1].set(lnf_b.reshape(-1))
    return wqkv_t, ffw1_t, wo_t, ffw2_t, vec


def transformer_stack(x, mask, packed):
    """x: (BATCH, SEQ, D_MODEL) f32; mask: (BATCH, SEQ, SEQ) (1 keep / 0 mask)."""
    wqkv_t, ffw1_t, wo_t, ffw2_t, vec = packed
    att_bias = _attention_bias(mask)                         # (B, S, S)
    x_t = jnp.swapaxes(x, 1, 2).astype(jnp.float32)          # (B, D_MODEL, S)

    def const_spec(arr):                                     # whole array, every step
        nd = arr.ndim
        return pl.BlockSpec(arr.shape, lambda b, _nd=nd: (0,) * _nd)

    out_t = pl.pallas_call(
        transformer_stack_kernel,
        out_shape=jax.ShapeDtypeStruct((BATCH, D_MODEL, SEQ), jnp.float32),
        grid_spec=pltpu.PrefetchScalarGridSpec(
            num_scalar_prefetch=0,
            grid=(BATCH,),                                   # 1 batch element / step
            in_specs=[
                pl.BlockSpec((None, SEQ, SEQ), lambda b: (b, 0, 0)),
                pl.BlockSpec((None, D_MODEL, SEQ), lambda b: (b, 0, 0)),
                const_spec(wqkv_t), const_spec(ffw1_t),
                const_spec(wo_t), const_spec(ffw2_t), const_spec(vec),
            ],
            out_specs=pl.BlockSpec((None, D_MODEL, SEQ), lambda b: (b, 0, 0)),
        ),
        compiler_params=pltpu.CompilerParams(
            dimension_semantics=("parallel",)),              # 2 TCs on v7x
    )(att_bias, x_t, wqkv_t, ffw1_t, wo_t, ffw2_t, vec)

    return jnp.swapaxes(out_t, 1, 2)                         # (B, S, D_MODEL)


def init_params(key):
    """Deterministic synthetic parameters (shapes follow the module's __init__)."""
    ks = jax.random.split(key, 12)

    def rnd(k, shape, s=0.02):
        return (s * jax.random.normal(k, shape)).astype(jnp.float32)

    ln1_a = jnp.ones((N_BLOCKS, D_MODEL), jnp.float32)
    ln1_b = jnp.zeros((N_BLOCKS, D_MODEL), jnp.float32)
    ln2_a = jnp.ones((N_BLOCKS, D_MODEL), jnp.float32)
    ln2_b = jnp.zeros((N_BLOCKS, D_MODEL), jnp.float32)

    wq = rnd(ks[0], (N_BLOCKS, D_MODEL, D_MODEL))
    wk = rnd(ks[1], (N_BLOCKS, D_MODEL, D_MODEL))
    wv = rnd(ks[2], (N_BLOCKS, D_MODEL, D_MODEL))
    wo = rnd(ks[3], (N_BLOCKS, D_MODEL, D_MODEL))
    bq = rnd(ks[4], (N_BLOCKS, D_MODEL), 0.01)
    bk = rnd(ks[5], (N_BLOCKS, D_MODEL), 0.01)
    bv = rnd(ks[6], (N_BLOCKS, D_MODEL), 0.01)
    bo = rnd(ks[7], (N_BLOCKS, D_MODEL), 0.01)

    ff_w1 = rnd(ks[8], (N_BLOCKS, D_MODEL, D_FF))
    ff_b1 = rnd(ks[9], (N_BLOCKS, D_FF), 0.01)
    ff_w2 = rnd(ks[10], (N_BLOCKS, D_FF, D_MODEL))
    ff_b2 = rnd(ks[11], (N_BLOCKS, D_MODEL), 0.01)

    lnf_a = jnp.ones((1, D_MODEL), jnp.float32)    # final LayerNorm a_2
    lnf_b = jnp.zeros((1, D_MODEL), jnp.float32)   # final LayerNorm b_2

    return (ln1_a, ln1_b, wq, bq, wk, bk, wv, bv, wo, bo,
            ln2_a, ln2_b, ff_w1, ff_b1, ff_w2, ff_b2,
            lnf_a, lnf_b)


if __name__ == "__main__":
    key = jax.random.PRNGKey(0)
    kx, kp = jax.random.split(key)

    x = jax.random.normal(kx, (BATCH, SEQ, D_MODEL), dtype=jnp.float32)
    # causal mask, broadcast over batch (1 = attend, 0 = masked)
    causal = jnp.tril(jnp.ones((SEQ, SEQ), jnp.float32))
    mask = jnp.broadcast_to(causal, (BATCH, SEQ, SEQ))

    params = init_params(kp)
    packed = pack_params(params)

    out = transformer_stack(x, mask, packed)
    out = jax.block_until_ready(out)

    assert out.shape == (BATCH, SEQ, D_MODEL)
    assert bool(jnp.all(jnp.isfinite(out)))
    print("KERNEL_OK")
</pallas_src>

<mosaic_0001>
module attributes {stable_mosaic.version = 11 : i64} {
  func.func @transformer_stack_kernel(%arg0: i32, %arg1: memref<1x8x8xf32, #tpu.memory_space<vmem>>, %arg2: memref<1x32x8xf32, #tpu.memory_space<vmem>>, %arg3: memref<2x96x32xbf16, #tpu.memory_space<vmem>>, %arg4: memref<2x64x32xbf16, #tpu.memory_space<vmem>>, %arg5: memref<2x32x32xbf16, #tpu.memory_space<vmem>>, %arg6: memref<2x32x64xbf16, #tpu.memory_space<vmem>>, %arg7: memref<3x96x8xf32, #tpu.memory_space<vmem>>, %arg8: memref<1x32x8xf32, #tpu.memory_space<vmem>>) attributes {dimension_semantics = [#tpu.dimension_semantics<parallel>], iteration_bounds = array<i64: 2>, scalar_prefetch = 0 : i64, scratch_operands = 0 : i64, tpu.core_type = #tpu.core_type<tc>, window_params = [{transform_indices = @transform_0, window_bounds = array<i64: 1, 8, 8>}, {transform_indices = @transform_1, window_bounds = array<i64: 1, 32, 8>}, {pipeline_mode = #tpu.pipeline_mode<synchronous>, transform_indices = @transform_2, window_bounds = array<i64: 2, 96, 32>}, {pipeline_mode = #tpu.pipeline_mode<synchronous>, transform_indices = @transform_3, window_bounds = array<i64: 2, 64, 32>}, {pipeline_mode = #tpu.pipeline_mode<synchronous>, transform_indices = @transform_4, window_bounds = array<i64: 2, 32, 32>}, {pipeline_mode = #tpu.pipeline_mode<synchronous>, transform_indices = @transform_5, window_bounds = array<i64: 2, 32, 64>}, {pipeline_mode = #tpu.pipeline_mode<synchronous>, transform_indices = @transform_6, window_bounds = array<i64: 3, 96, 8>}, {transform_indices = @transform_7, window_bounds = array<i64: 1, 32, 8>}]} {
    %c0 = arith.constant 0 : index
    %c0_0 = arith.constant 0 : index
    %c0_1 = arith.constant 0 : index
    %0 = vector.load %arg2[%c0, %c0_0, %c0_1] : memref<1x32x8xf32, #tpu.memory_space<vmem>>, vector<1x32x8xf32>
    %1 = vector.shape_cast %0 : vector<1x32x8xf32> to vector<32x8xf32>
    %c0_2 = arith.constant 0 : index
    %c0_3 = arith.constant 0 : index
    %c0_4 = arith.constant 0 : index
    %2 = vector.load %arg1[%c0_2, %c0_3, %c0_4] : memref<1x8x8xf32, #tpu.memory_space<vmem>>, vector<1x8x8xf32>
    %3 = vector.shape_cast %2 : vector<1x8x8xf32> to vector<8x8xf32>
    %4 = tpu.concatenate %3, %3, %3, %3 in 0 : vector<8x8xf32>, vector<8x8xf32>, vector<8x8xf32>, vector<8x8xf32> -> vector<32x8xf32>
    %c0_5 = arith.constant 0 : index
    %c0_6 = arith.constant 0 : index
    %c0_7 = arith.constant 0 : index
    %5 = vector.load %arg3[%c0_5, %c0_6, %c0_7] : memref<2x96x32xbf16, #tpu.memory_space<vmem>>, vector<1x96x32xbf16>
    %6 = vector.shape_cast %5 : vector<1x96x32xbf16> to vector<96x32xbf16>
    %c0_8 = arith.constant 0 : index
    %c0_9 = arith.constant 0 : index
    %c0_10 = arith.constant 0 : index
    %7 = vector.load %arg4[%c0_8, %c0_9, %c0_10] : memref<2x64x32xbf16, #tpu.memory_space<vmem>>, vector<1x64x32xbf16>
    %8 = vector.shape_cast %7 : vector<1x64x32xbf16> to vector<64x32xbf16>
    %c0_11 = arith.constant 0 : index
    %c0_12 = arith.constant 0 : index
    %c0_13 = arith.constant 0 : index
    %9 = vector.load %arg5[%c0_11, %c0_12, %c0_13] : memref<2x32x32xbf16, #tpu.memory_space<vmem>>, vector<1x32x32xbf16>
    %10 = vector.shape_cast %9 : vector<1x32x32xbf16> to vector<32x32xbf16>
    %c0_14 = arith.constant 0 : index
    %c0_15 = arith.constant 0 : index
    %c0_16 = arith.constant 0 : index
    %11 = vector.load %arg6[%c0_14, %c0_15, %c0_16] : memref<2x32x64xbf16, #tpu.memory_space<vmem>>, vector<1x32x64xbf16>
    %12 = vector.shape_cast %11 : vector<1x32x64xbf16> to vector<32x64xbf16>
    %c0_17 = arith.constant 0 : index
    %c0_18 = arith.constant 0 : index
    %c0_19 = arith.constant 0 : index
    %13 = vector.load %arg7[%c0_17, %c0_18, %c0_19] : memref<3x96x8xf32, #tpu.memory_space<vmem>>, vector<1x96x8xf32>
    %14 = vector.shape_cast %13 : vector<1x96x8xf32> to vector<96x8xf32>
    %15 = vector.extract_strided_slice %14 {offsets = [0, 0], sizes = [96, 1], strides = [1, 1]} : vector<96x8xf32> to vector<96x1xf32>
    %16 = vector.extract_strided_slice %14 {offsets = [0, 1], sizes = [64, 1], strides = [1, 1]} : vector<96x8xf32> to vector<64x1xf32>
    %17 = vector.extract_strided_slice %14 {offsets = [0, 2], sizes = [32, 1], strides = [1, 1]} : vector<96x8xf32> to vector<32x1xf32>
    %18 = vector.extract_strided_slice %14 {offsets = [0, 3], sizes = [32, 1], strides = [1, 1]} : vector<96x8xf32> to vector<32x1xf32>
    %19 = vector.extract_strided_slice %14 {offsets = [0, 4], sizes = [32, 1], strides = [1, 1]} : vector<96x8xf32> to vector<32x1xf32>
    %20 = vector.extract_strided_slice %14 {offsets = [0, 5], sizes = [32, 1], strides = [1, 1]} : vector<96x8xf32> to vector<32x1xf32>
    %21 = vector.extract_strided_slice %14 {offsets = [0, 6], sizes = [32, 1], strides = [1, 1]} : vector<96x8xf32> to vector<32x1xf32>
    %22 = vector.extract_strided_slice %14 {offsets = [0, 7], sizes = [32, 1], strides = [1, 1]} : vector<96x8xf32> to vector<32x1xf32>
    %cst = arith.constant dense<0.000000e+00> : vector<8xf32>
    %23 = vector.multi_reduction <add>, %1, %cst [0] : vector<32x8xf32> to vector<8xf32>
    %24 = vector.shape_cast %23 : vector<8xf32> to vector<1x8xf32>
    %cst_20 = arith.constant 3.200000e+01 : f32
    %25 = vector.broadcast %cst_20 : f32 to vector<1x8xf32>
    %26 = arith.divf %24, %25 : vector<1x8xf32>
    %27 = vector.broadcast %26 : vector<1x8xf32> to vector<32x8xf32>
    %28 = arith.subf %1, %27 : vector<32x8xf32>
    %29 = arith.mulf %28, %28 : vector<32x8xf32>
    %cst_21 = arith.constant dense<0.000000e+00> : vector<8xf32>
    %30 = vector.multi_reduction <add>, %29, %cst_21 [0] : vector<32x8xf32> to vector<8xf32>
    %31 = vector.shape_cast %30 : vector<8xf32> to vector<1x8xf32>
    %cst_22 = arith.constant 0.0322580636 : f32
    %32 = vector.broadcast %cst_22 : f32 to vector<1x8xf32>
    %33 = arith.mulf %31, %32 : vector<1x8xf32>
    %34 = math.sqrt %33 : vector<1x8xf32>
    %35 = vector.broadcast %17 : vector<32x1xf32> to vector<32x8xf32>
    %36 = arith.mulf %35, %28 : vector<32x8xf32>
    %cst_23 = arith.constant 9.99999997E-7 : f32
    %37 = vector.broadcast %cst_23 : f32 to vector<1x8xf32>
    %38 = arith.addf %34, %37 : vector<1x8xf32>
    %39 = vector.broadcast %38 : vector<1x8xf32> to vector<32x8xf32>
    %40 = arith.divf %36, %39 : vector<32x8xf32>
    %41 = vector.broadcast %18 : vector<32x1xf32> to vector<32x8xf32>
    %42 = arith.addf %40, %41 : vector<32x8xf32>
    %43 = arith.truncf %42 : vector<32x8xf32> to vector<32x8xbf16>
    %cst_24 = arith.constant dense<0.000000e+00> : vector<96x8xf32>
    %44 = tpu.matmul %6, %43, %cst_24 {dimension_numbers = #tpu.dot_dimension_numbers<[1], [0], [0], [1], [0, 0, 1, 1], [], []>} : vector<96x32xbf16>, vector<32x8xbf16>, vector<96x8xf32> -> vector<96x8xf32>
    %45 = vector.broadcast %15 : vector<96x1xf32> to vector<96x8xf32>
    %46 = arith.addf %44, %45 : vector<96x8xf32>
    %47 = vector.extract_strided_slice %46 {offsets = [0, 0], sizes = [8, 8], strides = [1, 1]} : vector<96x8xf32> to vector<8x8xf32>
    %48 = vector.extract_strided_slice %46 {offsets = [32, 0], sizes = [8, 8], strides = [1, 1]} : vector<96x8xf32> to vector<8x8xf32>
    %49 = tpu.transpose %47, [1, 0] : vector<8x8xf32> -> vector<8x8xf32>
    %cst_25 = arith.constant dense<0.000000e+00> : vector<8x8xf32>
    %50 = tpu.matmul %49, %48, %cst_25 {dimension_numbers = #tpu.dot_dimension_numbers<[1], [0], [0], [1], [0, 0, 1, 1], [], []>} : vector<8x8xf32>, vector<8x8xf32>, vector<8x8xf32> -> vector<8x8xf32>
    %51 = vector.extract_strided_slice %46 {offsets = [8, 0], sizes = [8, 8], strides = [1, 1]} : vector<96x8xf32> to vector<8x8xf32>
    %52 = vector.extract_strided_slice %46 {offsets = [40, 0], sizes = [8, 8], strides = [1, 1]} : vector<96x8xf32> to vector<8x8xf32>
    %53 = tpu.transpose %51, [1, 0] : vector<8x8xf32> -> vector<8x8xf32>
    %cst_26 = arith.constant dense<0.000000e+00> : vector<8x8xf32>
    %54 = tpu.matmul %53, %52, %cst_26 {dimension_numbers = #tpu.dot_dimension_numbers<[1], [0], [0], [1], [0, 0, 1, 1], [], []>} : vector<8x8xf32>, vector<8x8xf32>, vector<8x8xf32> -> vector<8x8xf32>
    %55 = vector.extract_strided_slice %46 {offsets = [16, 0], sizes = [8, 8], strides = [1, 1]} : vector<96x8xf32> to vector<8x8xf32>
    %56 = vector.extract_strided_slice %46 {offsets = [48, 0], sizes = [8, 8], strides = [1, 1]} : vector<96x8xf32> to vector<8x8xf32>
    %57 = tpu.transpose %55, [1, 0] : vector<8x8xf32> -> vector<8x8xf32>
    %cst_27 = arith.constant dense<0.000000e+00> : vector<8x8xf32>
    %58 = tpu.matmul %57, %56, %cst_27 {dimension_numbers = #tpu.dot_dimension_numbers<[1], [0], [0], [1], [0, 0, 1, 1], [], []>} : vector<8x8xf32>, vector<8x8xf32>, vector<8x8xf32> -> vector<8x8xf32>
    %59 = vector.extract_strided_slice %46 {offsets = [24, 0], sizes = [8, 8], strides = [1, 1]} : vector<96x8xf32> to vector<8x8xf32>
    %60 = vector.extract_strided_slice %46 {offsets = [56, 0], sizes = [8, 8], strides = [1, 1]} : vector<96x8xf32> to vector<8x8xf32>
    %61 = tpu.transpose %59, [1, 0] : vector<8x8xf32> -> vector<8x8xf32>
    %cst_28 = arith.constant dense<0.000000e+00> : vector<8x8xf32>
    %62 = tpu.matmul %61, %60, %cst_28 {dimension_numbers = #tpu.dot_dimension_numbers<[1], [0], [0], [1], [0, 0, 1, 1], [], []>} : vector<8x8xf32>, vector<8x8xf32>, vector<8x8xf32> -> vector<8x8xf32>
    %63 = tpu.concatenate %50, %54, %58, %62 in 0 : vector<8x8xf32>, vector<8x8xf32>, vector<8x8xf32>, vector<8x8xf32> -> vector<32x8xf32>
    %64 = arith.addf %63, %4 : vector<32x8xf32>
    %cst_29 = arith.constant dense<0xFF800000> : vector<32xf32>
    %65 = vector.multi_reduction <maximumf>, %64, %cst_29 [1] : vector<32x8xf32> to vector<32xf32>
    %66 = vector.shape_cast %65 : vector<32xf32> to vector<32x1xf32>
    %67 = vector.broadcast %66 : vector<32x1xf32> to vector<32x8xf32>
    %68 = arith.subf %64, %67 : vector<32x8xf32>
    %69 = math.exp %68 : vector<32x8xf32>
    %cst_30 = arith.constant dense<0.000000e+00> : vector<32xf32>
    %70 = vector.multi_reduction <add>, %69, %cst_30 [1] : vector<32x8xf32> to vector<32xf32>
    %71 = vector.shape_cast %70 : vector<32xf32> to vector<32x1xf32>
    %72 = tpu.reciprocal %71 {approx = true} : vector<32x1xf32> -> vector<32x1xf32>
    %73 = vector.broadcast %72 : vector<32x1xf32> to vector<32x8xf32>
    %74 = arith.mulf %69, %73 : vector<32x8xf32>
    %75 = vector.extract_strided_slice %46 {offsets = [64, 0], sizes = [8, 8], strides = [1, 1]} : vector<96x8xf32> to vector<8x8xf32>
    %76 = vector.extract_strided_slice %74 {offsets = [0, 0], sizes = [8, 8], strides = [1, 1]} : vector<32x8xf32> to vector<8x8xf32>
    %77 = arith.truncf %75 : vector<8x8xf32> to vector<8x8xbf16>
    %78 = arith.truncf %76 : vector<8x8xf32> to vector<8x8xbf16>
    %cst_31 = arith.constant dense<0.000000e+00> : vector<8x8xf32>
    %79 = tpu.matmul %77, %78, %cst_31 {dimension_numbers = #tpu.dot_dimension_numbers<[1], [1], [0], [0], [0, 0, 1, 0], [], []>} : vector<8x8xbf16>, vector<8x8xbf16>, vector<8x8xf32> -> vector<8x8xf32>
    %80 = vector.extract_strided_slice %46 {offsets = [72, 0], sizes = [8, 8], strides = [1, 1]} : vector<96x8xf32> to vector<8x8xf32>
    %81 = vector.extract_strided_slice %74 {offsets = [8, 0], sizes = [8, 8], strides = [1, 1]} : vector<32x8xf32> to vector<8x8xf32>
    %82 = arith.truncf %80 : vector<8x8xf32> to vector<8x8xbf16>
    %83 = arith.truncf %81 : vector<8x8xf32> to vector<8x8xbf16>
    %cst_32 = arith.constant dense<0.000000e+00> : vector<8x8xf32>
    %84 = tpu.matmul %82, %83, %cst_32 {dimension_numbers = #tpu.dot_dimension_numbers<[1], [1], [0], [0], [0, 0, 1, 0], [], []>} : vector<8x8xbf16>, vector<8x8xbf16>, vector<8x8xf32> -> vector<8x8xf32>
    %85 = vector.extract_strided_slice %46 {offsets = [80, 0], sizes = [8, 8], strides = [1, 1]} : vector<96x8xf32> to vector<8x8xf32>
    %86 = vector.extract_strided_slice %74 {offsets = [16, 0], sizes = [8, 8], strides = [1, 1]} : vector<32x8xf32> to vector<8x8xf32>
    %87 = arith.truncf %85 : vector<8x8xf32> to vector<8x8xbf16>
    %88 = arith.truncf %86 : vector<8x8xf32> to vector<8x8xbf16>
    %cst_33 = arith.constant dense<0.000000e+00> : vector<8x8xf32>
    %89 = tpu.matmul %87, %88, %cst_33 {dimension_numbers = #tpu.dot_dimension_numbers<[1], [1], [0], [0], [0, 0, 1, 0], [], []>} : vector<8x8xbf16>, vector<8x8xbf16>, vector<8x8xf32> -> vector<8x8xf32>
    %90 = vector.extract_strided_slice %46 {offsets = [88, 0], sizes = [8, 8], strides = [1, 1]} : vector<96x8xf32> to vector<8x8xf32>
    %91 = vector.extract_strided_slice %74 {offsets = [24, 0], sizes = [8, 8], strides = [1, 1]} : vector<32x8xf32> to vector<8x8xf32>
    %92 = arith.truncf %90 : vector<8x8xf32> to vector<8x8xbf16>
    %93 = arith.truncf %91 : vector<8x8xf32> to vector<8x8xbf16>
    %cst_34 = arith.constant dense<0.000000e+00> : vector<8x8xf32>
    %94 = tpu.matmul %92, %93, %cst_34 {dimension_numbers = #tpu.dot_dimension_numbers<[1], [1], [0], [0], [0, 0, 1, 0], [], []>} : vector<8x8xbf16>, vector<8x8xbf16>, vector<8x8xf32> -> vector<8x8xf32>
    %95 = tpu.concatenate %79, %84, %89, %94 in 0 : vector<8x8xf32>, vector<8x8xf32>, vector<8x8xf32>, vector<8x8xf32> -> vector<32x8xf32>
    %96 = arith.truncf %95 : vector<32x8xf32> to vector<32x8xbf16>
    %cst_35 = arith.constant dense<0.000000e+00> : vector<32x8xf32>
    %97 = tpu.matmul %10, %96, %cst_35 {dimension_numbers = #tpu.dot_dimension_numbers<[1], [0], [0], [1], [0, 0, 1, 1], [], []>} : vector<32x32xbf16>, vector<32x8xbf16>, vector<32x8xf32> -> vector<32x8xf32>
    %98 = arith.addf %1, %97 : vector<32x8xf32>
    %99 = vector.broadcast %21 : vector<32x1xf32> to vector<32x8xf32>
    %100 = arith.addf %98, %99 : vector<32x8xf32>
    %cst_36 = arith.constant dense<0.000000e+00> : vector<8xf32>
    %101 = vector.multi_reduction <add>, %100, %cst_36 [0] : vector<32x8xf32> to vector<8xf32>
    %102 = vector.shape_cast %101 : vector<8xf32> to vector<1x8xf32>
    %cst_37 = arith.constant 3.200000e+01 : f32
    %103 = vector.broadcast %cst_37 : f32 to vector<1x8xf32>
    %104 = arith.divf %102, %103 : vector<1x8xf32>
    %105 = vector.broadcast %104 : vector<1x8xf32> to vector<32x8xf32>
    %106 = arith.subf %100, %105 : vector<32x8xf32>
    %107 = arith.mulf %106, %106 : vector<32x8xf32>
    %cst_38 = arith.constant dense<0.000000e+00> : vector<8xf32>
    %108 = vector.multi_reduction <add>, %107, %cst_38 [0] : vector<32x8xf32> to vector<8xf32>
    %109 = vector.shape_cast %108 : vector<8xf32> to vector<1x8xf32>
    %cst_39 = arith.constant 0.0322580636 : f32
    %110 = vector.broadcast %cst_39 : f32 to vector<1x8xf32>
    %111 = arith.mulf %109, %110 : vector<1x8xf32>
    %112 = math.sqrt %111 : vector<1x8xf32>
    %113 = vector.broadcast %19 : vector<32x1xf32> to vector<32x8xf32>
    %114 = arith.mulf %113, %106 : vector<32x8xf32>
    %cst_40 = arith.constant 9.99999997E-7 : f32
    %115 = vector.broadcast %cst_40 : f32 to vector<1x8xf32>
    %116 = arith.addf %112, %115 : vector<1x8xf32>
    %117 = vector.broadcast %116 : vector<1x8xf32> to vector<32x8xf32>
    %118 = arith.divf %114, %117 : vector<32x8xf32>
    %119 = vector.broadcast %20 : vector<32x1xf32> to vector<32x8xf32>
    %120 = arith.addf %118, %119 : vector<32x8xf32>
    %121 = arith.truncf %120 : vector<32x8xf32> to vector<32x8xbf16>
    %cst_41 = arith.constant dense<0.000000e+00> : vector<64x8xf32>
    %122 = tpu.matmul %8, %121, %cst_41 {dimension_numbers = #tpu.dot_dimension_numbers<[1], [0], [0], [1], [0, 0, 1, 1], [], []>} : vector<64x32xbf16>, vector<32x8xbf16>, vector<64x8xf32> -> vector<64x8xf32>
    %123 = vector.broadcast %16 : vector<64x1xf32> to vector<64x8xf32>
    %124 = arith.addf %122, %123 : vector<64x8xf32>
    %cst_42 = arith.constant 0.000000e+00 : f32
    %125 = vector.broadcast %cst_42 : f32 to vector<64x8xf32>
    %126 = arith.maximumf %124, %125 : vector<64x8xf32>
    %127 = arith.truncf %126 : vector<64x8xf32> to vector<64x8xbf16>
    %cst_43 = arith.constant dense<0.000000e+00> : vector<32x8xf32>
    %128 = tpu.matmul %12, %127, %cst_43 {dimension_numbers = #tpu.dot_dimension_numbers<[1], [0], [0], [1], [0, 0, 1, 1], [], []>} : vector<32x64xbf16>, vector<64x8xbf16>, vector<32x8xf32> -> vector<32x8xf32>
    %129 = arith.addf %100, %128 : vector<32x8xf32>
    %130 = vector.broadcast %22 : vector<32x1xf32> to vector<32x8xf32>
    %131 = arith.addf %129, %130 : vector<32x8xf32>
    %c1 = arith.constant 1 : index
    %c0_44 = arith.constant 0 : index
    %c0_45 = arith.constant 0 : index
    %132 = vector.load %arg3[%c1, %c0_44, %c0_45] : memref<2x96x32xbf16, #tpu.memory_space<vmem>>, vector<1x96x32xbf16>
    %133 = vector.shape_cast %132 : vector<1x96x32xbf16> to vector<96x32xbf16>
    %c1_46 = arith.constant 1 : index
    %c0_47 = arith.constant 0 : index
    %c0_48 = arith.constant 0 : index
    %134 = vector.load %arg4[%c1_46, %c0_47, %c0_48] : memref<2x64x32xbf16, #tpu.memory_space<vmem>>, vector<1x64x32xbf16>
    %135 = vector.shape_cast %134 : vector<1x64x32xbf16> to vector<64x32xbf16>
    %c1_49 = arith.constant 1 : index
    %c0_50 = arith.constant 0 : index
    %c0_51 = arith.constant 0 : index
    %136 = vector.load %arg5[%c1_49, %c0_50, %c0_51] : memref<2x32x32xbf16, #tpu.memory_space<vmem>>, vector<1x32x32xbf16>
    %137 = vector.shape_cast %136 : vector<1x32x32xbf16> to vector<32x32xbf16>
    %c1_52 = arith.constant 1 : index
    %c0_53 = arith.constant 0 : index
    %c0_54 = arith.constant 0 : index
    %138 = vector.load %arg6[%c1_52, %c0_53, %c0_54] : memref<2x32x64xbf16, #tpu.memory_space<vmem>>, vector<1x32x64xbf16>
    %139 = vector.shape_cast %138 : vector<1x32x64xbf16> to vector<32x64xbf16>
    %c1_55 = arith.constant 1 : index
    %c0_56 = arith.constant 0 : index
    %c0_57 = arith.constant 0 : index
    %140 = vector.load %arg7[%c1_55, %c0_56, %c0_57] : memref<3x96x8xf32, #tpu.memory_space<vmem>>, vector<1x96x8xf32>
    %141 = vector.shape_cast %140 : vector<1x96x8xf32> to vector<96x8xf32>
    %142 = vector.extract_strided_slice %141 {offsets = [0, 0], sizes = [96, 1], strides = [1, 1]} : vector<96x8xf32> to vector<96x1xf32>
    %143 = vector.extract_strided_slice %141 {offsets = [0, 1], sizes = [64, 1], strides = [1, 1]} : vector<96x8xf32> to vector<64x1xf32>
    %144 = vector.extract_strided_slice %141 {offsets = [0, 2], sizes = [32, 1], strides = [1, 1]} : vector<96x8xf32> to vector<32x1xf32>
    %145 = vector.extract_strided_slice %141 {offsets = [0, 3], sizes = [32, 1], strides = [1, 1]} : vector<96x8xf32> to vector<32x1xf32>
    %146 = vector.extract_strided_slice %141 {offsets = [0, 4], sizes = [32, 1], strides = [1, 1]} : vector<96x8xf32> to vector<32x1xf32>
    %147 = vector.extract_strided_slice %141 {offsets = [0, 5], sizes = [32, 1], strides = [1, 1]} : vector<96x8xf32> to vector<32x1xf32>
    %148 = vector.extract_strided_slice %141 {offsets = [0, 6], sizes = [32, 1], strides = [1, 1]} : vector<96x8xf32> to vector<32x1xf32>
    %149 = vector.extract_strided_slice %141 {offsets = [0, 7], sizes = [32, 1], strides = [1, 1]} : vector<96x8xf32> to vector<32x1xf32>
    %cst_58 = arith.constant dense<0.000000e+00> : vector<8xf32>
    %150 = vector.multi_reduction <add>, %131, %cst_58 [0] : vector<32x8xf32> to vector<8xf32>
    %151 = vector.shape_cast %150 : vector<8xf32> to vector<1x8xf32>
    %cst_59 = arith.constant 3.200000e+01 : f32
    %152 = vector.broadcast %cst_59 : f32 to vector<1x8xf32>
    %153 = arith.divf %151, %152 : vector<1x8xf32>
    %154 = vector.broadcast %153 : vector<1x8xf32> to vector<32x8xf32>
    %155 = arith.subf %131, %154 : vector<32x8xf32>
    %156 = arith.mulf %155, %155 : vector<32x8xf32>
    %cst_60 = arith.constant dense<0.000000e+00> : vector<8xf32>
    %157 = vector.multi_reduction <add>, %156, %cst_60 [0] : vector<32x8xf32> to vector<8xf32>
    %158 = vector.shape_cast %157 : vector<8xf32> to vector<1x8xf32>
    %cst_61 = arith.constant 0.0322580636 : f32
    %159 = vector.broadcast %cst_61 : f32 to vector<1x8xf32>
    %160 = arith.mulf %158, %159 : vector<1x8xf32>
    %161 = math.sqrt %160 : vector<1x8xf32>
    %162 = vector.broadcast %144 : vector<32x1xf32> to vector<32x8xf32>
    %163 = arith.mulf %162, %155 : vector<32x8xf32>
    %cst_62 = arith.constant 9.99999997E-7 : f32
    %164 = vector.broadcast %cst_62 : f32 to vector<1x8xf32>
    %165 = arith.addf %161, %164 : vector<1x8xf32>
    %166 = vector.broadcast %165 : vector<1x8xf32> to vector<32x8xf32>
    %167 = arith.divf %163, %166 : vector<32x8xf32>
    %168 = vector.broadcast %145 : vector<32x1xf32> to vector<32x8xf32>
    %169 = arith.addf %167, %168 : vector<32x8xf32>
    %170 = arith.truncf %169 : vector<32x8xf32> to vector<32x8xbf16>
    %cst_63 = arith.constant dense<0.000000e+00> : vector<96x8xf32>
    %171 = tpu.matmul %133, %170, %cst_63 {dimension_numbers = #tpu.dot_dimension_numbers<[1], [0], [0], [1], [0, 0, 1, 1], [], []>} : vector<96x32xbf16>, vector<32x8xbf16>, vector<96x8xf32> -> vector<96x8xf32>
    %172 = vector.broadcast %142 : vector<96x1xf32> to vector<96x8xf32>
    %173 = arith.addf %171, %172 : vector<96x8xf32>
    %174 = vector.extract_strided_slice %173 {offsets = [0, 0], sizes = [8, 8], strides = [1, 1]} : vector<96x8xf32> to vector<8x8xf32>
    %175 = vector.extract_strided_slice %173 {offsets = [32, 0], sizes = [8, 8], strides = [1, 1]} : vector<96x8xf32> to vector<8x8xf32>
    %176 = tpu.transpose %174, [1, 0] : vector<8x8xf32> -> vector<8x8xf32>
    %cst_64 = arith.constant dense<0.000000e+00> : vector<8x8xf32>
    %177 = tpu.matmul %176, %175, %cst_64 {dimension_numbers = #tpu.dot_dimension_numbers<[1], [0], [0], [1], [0, 0, 1, 1], [], []>} : vector<8x8xf32>, vector<8x8xf32>, vector<8x8xf32> -> vector<8x8xf32>
    %178 = vector.extract_strided_slice %173 {offsets = [8, 0], sizes = [8, 8], strides = [1, 1]} : vector<96x8xf32> to vector<8x8xf32>
    %179 = vector.extract_strided_slice %173 {offsets = [40, 0], sizes = [8, 8], strides = [1, 1]} : vector<96x8xf32> to vector<8x8xf32>
    %180 = tpu.transpose %178, [1, 0] : vector<8x8xf32> -> vector<8x8xf32>
    %cst_65 = arith.constant dense<0.000000e+00> : vector<8x8xf32>
    %181 = tpu.matmul %180, %179, %cst_65 {dimension_numbers = #tpu.dot_dimension_numbers<[1], [0], [0], [1], [0, 0, 1, 1], [], []>} : vector<8x8xf32>, vector<8x8xf32>, vector<8x8xf32> -> vector<8x8xf32>
    %182 = vector.extract_strided_slice %173 {offsets = [16, 0], sizes = [8, 8], strides = [1, 1]} : vector<96x8xf32> to vector<8x8xf32>
    %183 = vector.extract_strided_slice %173 {offsets = [48, 0], sizes = [8, 8], strides = [1, 1]} : vector<96x8xf32> to vector<8x8xf32>
    %184 = tpu.transpose %182, [1, 0] : vector<8x8xf32> -> vector<8x8xf32>
    %cst_66 = arith.constant dense<0.000000e+00> : vector<8x8xf32>
    %185 = tpu.matmul %184, %183, %cst_66 {dimension_numbers = #tpu.dot_dimension_numbers<[1], [0], [0], [1], [0, 0, 1, 1], [], []>} : vector<8x8xf32>, vector<8x8xf32>, vector<8x8xf32> -> vector<8x8xf32>
    %186 = vector.extract_strided_slice %173 {offsets = [24, 0], sizes = [8, 8], strides = [1, 1]} : vector<96x8xf32> to vector<8x8xf32>
    %187 = vector.extract_strided_slice %173 {offsets = [56, 0], sizes = [8, 8], strides = [1, 1]} : vector<96x8xf32> to vector<8x8xf32>
    %188 = tpu.transpose %186, [1, 0] : vector<8x8xf32> -> vector<8x8xf32>
    %cst_67 = arith.constant dense<0.000000e+00> : vector<8x8xf32>
    %189 = tpu.matmul %188, %187, %cst_67 {dimension_numbers = #tpu.dot_dimension_numbers<[1], [0], [0], [1], [0, 0, 1, 1], [], []>} : vector<8x8xf32>, vector<8x8xf32>, vector<8x8xf32> -> vector<8x8xf32>
    %190 = tpu.concatenate %177, %181, %185, %189 in 0 : vector<8x8xf32>, vector<8x8xf32>, vector<8x8xf32>, vector<8x8xf32> -> vector<32x8xf32>
    %191 = arith.addf %190, %4 : vector<32x8xf32>
    %cst_68 = arith.constant dense<0xFF800000> : vector<32xf32>
    %192 = vector.multi_reduction <maximumf>, %191, %cst_68 [1] : vector<32x8xf32> to vector<32xf32>
    %193 = vector.shape_cast %192 : vector<32xf32> to vector<32x1xf32>
    %194 = vector.broadcast %193 : vector<32x1xf32> to vector<32x8xf32>
    %195 = arith.subf %191, %194 : vector<32x8xf32>
    %196 = math.exp %195 : vector<32x8xf32>
    %cst_69 = arith.constant dense<0.000000e+00> : vector<32xf32>
    %197 = vector.multi_reduction <add>, %196, %cst_69 [1] : vector<32x8xf32> to vector<32xf32>
    %198 = vector.shape_cast %197 : vector<32xf32> to vector<32x1xf32>
    %199 = tpu.reciprocal %198 {approx = true} : vector<32x1xf32> -> vector<32x1xf32>
    %200 = vector.broadcast %199 : vector<32x1xf32> to vector<32x8xf32>
    %201 = arith.mulf %196, %200 : vector<32x8xf32>
    %202 = vector.extract_strided_slice %173 {offsets = [64, 0], sizes = [8, 8], strides = [1, 1]} : vector<96x8xf32> to vector<8x8xf32>
    %203 = vector.extract_strided_slice %201 {offsets = [0, 0], sizes = [8, 8], strides = [1, 1]} : vector<32x8xf32> to vector<8x8xf32>
    %204 = arith.truncf %202 : vector<8x8xf32> to vector<8x8xbf16>
    %205 = arith.truncf %203 : vector<8x8xf32> to vector<8x8xbf16>
    %cst_70 = arith.constant dense<0.000000e+00> : vector<8x8xf32>
    %206 = tpu.matmul %204, %205, %cst_70 {dimension_numbers = #tpu.dot_dimension_numbers<[1], [1], [0], [0], [0, 0, 1, 0], [], []>} : vector<8x8xbf16>, vector<8x8xbf16>, vector<8x8xf32> -> vector<8x8xf32>
    %207 = vector.extract_strided_slice %173 {offsets = [72, 0], sizes = [8, 8], strides = [1, 1]} : vector<96x8xf32> to vector<8x8xf32>
    %208 = vector.extract_strided_slice %201 {offsets = [8, 0], sizes = [8, 8], strides = [1, 1]} : vector<32x8xf32> to vector<8x8xf32>
    %209 = arith.truncf %207 : vector<8x8xf32> to vector<8x8xbf16>
    %210 = arith.truncf %208 : vector<8x8xf32> to vector<8x8xbf16>
    %cst_71 = arith.constant dense<0.000000e+00> : vector<8x8xf32>
    %211 = tpu.matmul %209, %210, %cst_71 {dimension_numbers = #tpu.dot_dimension_numbers<[1], [1], [0], [0], [0, 0, 1, 0], [], []>} : vector<8x8xbf16>, vector<8x8xbf16>, vector<8x8xf32> -> vector<8x8xf32>
    %212 = vector.extract_strided_slice %173 {offsets = [80, 0], sizes = [8, 8], strides = [1, 1]} : vector<96x8xf32> to vector<8x8xf32>
    %213 = vector.extract_strided_slice %201 {offsets = [16, 0], sizes = [8, 8], strides = [1, 1]} : vector<32x8xf32> to vector<8x8xf32>
    %214 = arith.truncf %212 : vector<8x8xf32> to vector<8x8xbf16>
    %215 = arith.truncf %213 : vector<8x8xf32> to vector<8x8xbf16>
    %cst_72 = arith.constant dense<0.000000e+00> : vector<8x8xf32>
    %216 = tpu.matmul %214, %215, %cst_72 {dimension_numbers = #tpu.dot_dimension_numbers<[1], [1], [0], [0], [0, 0, 1, 0], [], []>} : vector<8x8xbf16>, vector<8x8xbf16>, vector<8x8xf32> -> vector<8x8xf32>
    %217 = vector.extract_strided_slice %173 {offsets = [88, 0], sizes = [8, 8], strides = [1, 1]} : vector<96x8xf32> to vector<8x8xf32>
    %218 = vector.extract_strided_slice %201 {offsets = [24, 0], sizes = [8, 8], strides = [1, 1]} : vector<32x8xf32> to vector<8x8xf32>
    %219 = arith.truncf %217 : vector<8x8xf32> to vector<8x8xbf16>
    %220 = arith.truncf %218 : vector<8x8xf32> to vector<8x8xbf16>
    %cst_73 = arith.constant dense<0.000000e+00> : vector<8x8xf32>
    %221 = tpu.matmul %219, %220, %cst_73 {dimension_numbers = #tpu.dot_dimension_numbers<[1], [1], [0], [0], [0, 0, 1, 0], [], []>} : vector<8x8xbf16>, vector<8x8xbf16>, vector<8x8xf32> -> vector<8x8xf32>
    %222 = tpu.concatenate %206, %211, %216, %221 in 0 : vector<8x8xf32>, vector<8x8xf32>, vector<8x8xf32>, vector<8x8xf32> -> vector<32x8xf32>
    %223 = arith.truncf %222 : vector<32x8xf32> to vector<32x8xbf16>
    %cst_74 = arith.constant dense<0.000000e+00> : vector<32x8xf32>
    %224 = tpu.matmul %137, %223, %cst_74 {dimension_numbers = #tpu.dot_dimension_numbers<[1], [0], [0], [1], [0, 0, 1, 1], [], []>} : vector<32x32xbf16>, vector<32x8xbf16>, vector<32x8xf32> -> vector<32x8xf32>
    %225 = arith.addf %131, %224 : vector<32x8xf32>
    %226 = vector.broadcast %148 : vector<32x1xf32> to vector<32x8xf32>
    %227 = arith.addf %225, %226 : vector<32x8xf32>
    %cst_75 = arith.constant dense<0.000000e+00> : vector<8xf32>
    %228 = vector.multi_reduction <add>, %227, %cst_75 [0] : vector<32x8xf32> to vector<8xf32>
    %229 = vector.shape_cast %228 : vector<8xf32> to vector<1x8xf32>
    %cst_76 = arith.constant 3.200000e+01 : f32
    %230 = vector.broadcast %cst_76 : f32 to vector<1x8xf32>
    %231 = arith.divf %229, %230 : vector<1x8xf32>
    %232 = vector.broadcast %231 : vector<1x8xf32> to vector<32x8xf32>
    %233 = arith.subf %227, %232 : vector<32x8xf32>
    %234 = arith.mulf %233, %233 : vector<32x8xf32>
    %cst_77 = arith.constant dense<0.000000e+00> : vector<8xf32>
    %235 = vector.multi_reduction <add>, %234, %cst_77 [0] : vector<32x8xf32> to vector<8xf32>
    %236 = vector.shape_cast %235 : vector<8xf32> to vector<1x8xf32>
    %cst_78 = arith.constant 0.0322580636 : f32
    %237 = vector.broadcast %cst_78 : f32 to vector<1x8xf32>
    %238 = arith.mulf %236, %237 : vector<1x8xf32>
    %239 = math.sqrt %238 : vector<1x8xf32>
    %240 = vector.broadcast %146 : vector<32x1xf32> to vector<32x8xf32>
    %241 = arith.mulf %240, %233 : vector<32x8xf32>
    %cst_79 = arith.constant 9.99999997E-7 : f32
    %242 = vector.broadcast %cst_79 : f32 to vector<1x8xf32>
    %243 = arith.addf %239, %242 : vector<1x8xf32>
    %244 = vector.broadcast %243 : vector<1x8xf32> to vector<32x8xf32>
    %245 = arith.divf %241, %244 : vector<32x8xf32>
    %246 = vector.broadcast %147 : vector<32x1xf32> to vector<32x8xf32>
    %247 = arith.addf %245, %246 : vector<32x8xf32>
    %248 = arith.truncf %247 : vector<32x8xf32> to vector<32x8xbf16>
    %cst_80 = arith.constant dense<0.000000e+00> : vector<64x8xf32>
    %249 = tpu.matmul %135, %248, %cst_80 {dimension_numbers = #tpu.dot_dimension_numbers<[1], [0], [0], [1], [0, 0, 1, 1], [], []>} : vector<64x32xbf16>, vector<32x8xbf16>, vector<64x8xf32> -> vector<64x8xf32>
    %250 = vector.broadcast %143 : vector<64x1xf32> to vector<64x8xf32>
    %251 = arith.addf %249, %250 : vector<64x8xf32>
    %cst_81 = arith.constant 0.000000e+00 : f32
    %252 = vector.broadcast %cst_81 : f32 to vector<64x8xf32>
    %253 = arith.maximumf %251, %252 : vector<64x8xf32>
    %254 = arith.truncf %253 : vector<64x8xf32> to vector<64x8xbf16>
    %cst_82 = arith.constant dense<0.000000e+00> : vector<32x8xf32>
    %255 = tpu.matmul %139, %254, %cst_82 {dimension_numbers = #tpu.dot_dimension_numbers<[1], [0], [0], [1], [0, 0, 1, 1], [], []>} : vector<32x64xbf16>, vector<64x8xbf16>, vector<32x8xf32> -> vector<32x8xf32>
    %256 = arith.addf %227, %255 : vector<32x8xf32>
    %257 = vector.broadcast %149 : vector<32x1xf32> to vector<32x8xf32>
    %258 = arith.addf %256, %257 : vector<32x8xf32>
    %c2 = arith.constant 2 : index
    %c0_83 = arith.constant 0 : index
    %c0_84 = arith.constant 0 : index
    %259 = vector.load %arg7[%c2, %c0_83, %c0_84] : memref<3x96x8xf32, #tpu.memory_space<vmem>>, vector<1x96x8xf32>
    %260 = vector.shape_cast %259 : vector<1x96x8xf32> to vector<96x8xf32>
    %261 = vector.extract_strided_slice %260 {offsets = [0, 0], sizes = [32, 1], strides = [1, 1]} : vector<96x8xf32> to vector<32x1xf32>
    %262 = vector.extract_strided_slice %260 {offsets = [0, 1], sizes = [32, 1], strides = [1, 1]} : vector<96x8xf32> to vector<32x1xf32>
    %cst_85 = arith.constant dense<0.000000e+00> : vector<8xf32>
    %263 = vector.multi_reduction <add>, %258, %cst_85 [0] : vector<32x8xf32> to vector<8xf32>
    %264 = vector.shape_cast %263 : vector<8xf32> to vector<1x8xf32>
    %cst_86 = arith.constant 3.200000e+01 : f32
    %265 = vector.broadcast %cst_86 : f32 to vector<1x8xf32>
    %266 = arith.divf %264, %265 : vector<1x8xf32>
    %267 = vector.broadcast %266 : vector<1x8xf32> to vector<32x8xf32>
    %268 = arith.subf %258, %267 : vector<32x8xf32>
    %269 = arith.mulf %268, %268 : vector<32x8xf32>
    %cst_87 = arith.constant dense<0.000000e+00> : vector<8xf32>
    %270 = vector.multi_reduction <add>, %269, %cst_87 [0] : vector<32x8xf32> to vector<8xf32>
    %271 = vector.shape_cast %270 : vector<8xf32> to vector<1x8xf32>
    %cst_88 = arith.constant 0.0322580636 : f32
    %272 = vector.broadcast %cst_88 : f32 to vector<1x8xf32>
    %273 = arith.mulf %271, %272 : vector<1x8xf32>
    %274 = math.sqrt %273 : vector<1x8xf32>
    %275 = vector.broadcast %261 : vector<32x1xf32> to vector<32x8xf32>
    %276 = arith.mulf %275, %268 : vector<32x8xf32>
    %cst_89 = arith.constant 9.99999997E-7 : f32
    %277 = vector.broadcast %cst_89 : f32 to vector<1x8xf32>
    %278 = arith.addf %274, %277 : vector<1x8xf32>
    %279 = vector.broadcast %278 : vector<1x8xf32> to vector<32x8xf32>
    %280 = arith.divf %276, %279 : vector<32x8xf32>
    %281 = vector.broadcast %262 : vector<32x1xf32> to vector<32x8xf32>
    %282 = arith.addf %280, %281 : vector<32x8xf32>
    %c0_90 = arith.constant 0 : index
    %c0_91 = arith.constant 0 : index
    %c0_92 = arith.constant 0 : index
    %283 = vector.load %arg8[%c0_90, %c0_91, %c0_92] : memref<1x32x8xf32, #tpu.memory_space<vmem>>, vector<1x32x8xf32>
    %284 = vector.shape_cast %283 : vector<1x32x8xf32> to vector<32x8xf32>
    %285 = vector.shape_cast %282 : vector<32x8xf32> to vector<1x32x8xf32>
    tpu.vector_store %arg8[%c0_90, %c0_91, %c0_92], %285 {strides = array<i32>} : memref<1x32x8xf32, #tpu.memory_space<vmem>>, vector<1x32x8xf32>,
    return
  }
  func.func @transform_0(%arg0: i32) -> (i32, i32, i32) {
    %c0_i32 = arith.constant 0 : i32
    %c0_i32_0 = arith.constant 0 : i32
    %c0_i32_1 = arith.constant 0 : i32
    return %arg0, %c0_i32, %c0_i32_0 : i32, i32, i32
  }
  func.func @transform_1(%arg0: i32) -> (i32, i32, i32) {
    %c0_i32 = arith.constant 0 : i32
    %c0_i32_0 = arith.constant 0 : i32
    %c0_i32_1 = arith.constant 0 : i32
    return %arg0, %c0_i32, %c0_i32_0 : i32, i32, i32
  }
  func.func @transform_2(%arg0: i32) -> (i32, i32, i32) {
    %c0_i32 = arith.constant 0 : i32
    %c0_i32_0 = arith.constant 0 : i32
    %c0_i32_1 = arith.constant 0 : i32
    %c0_i32_2 = arith.constant 0 : i32
    return %c0_i32, %c0_i32_0, %c0_i32_1 : i32, i32, i32
  }
  func.func @transform_3(%arg0: i32) -> (i32, i32, i32) {
    %c0_i32 = arith.constant 0 : i32
    %c0_i32_0 = arith.constant 0 : i32
    %c0_i32_1 = arith.constant 0 : i32
    %c0_i32_2 = arith.constant 0 : i32
    return %c0_i32, %c0_i32_0, %c0_i32_1 : i32, i32, i32
  }
  func.func @transform_4(%arg0: i32) -> (i32, i32, i32) {
    %c0_i32 = arith.constant 0 : i32
    %c0_i32_0 = arith.constant 0 : i32
    %c0_i32_1 = arith.constant 0 : i32
    %c0_i32_2 = arith.constant 0 : i32
    return %c0_i32, %c0_i32_0, %c0_i32_1 : i32, i32, i32
  }
  func.func @transform_5(%arg0: i32) -> (i32, i32, i32) {
    %c0_i32 = arith.constant 0 : i32
    %c0_i32_0 = arith.constant 0 : i32
    %c0_i32_1 = arith.constant 0 : i32
    %c0_i32_2 = arith.constant 0 : i32
    return %c0_i32, %c0_i32_0, %c0_i32_1 : i32, i32, i32
  }
  func.func @transform_6(%arg0: i32) -> (i32, i32, i32) {
    %c0_i32 = arith.constant 0 : i32
    %c0_i32_0 = arith.constant 0 : i32
    %c0_i32_1 = arith.constant 0 : i32
    %c0_i32_2 = arith.constant 0 : i32
    return %c0_i32, %c0_i32_0, %c0_i32_1 : i32, i32, i32
  }
  func.func @transform_7(%arg0: i32) -> (i32, i32, i32) {
    %c0_i32 = arith.constant 0 : i32
    %c0_i32_0 = arith.constant 0 : i32
    %c0_i32_1 = arith.constant 0 : i32
    return %arg0, %c0_i32, %c0_i32_0 : i32, i32, i32
  }
}

</mosaic_0001>

<llo_original>
// kernel: tpu_custom_call.1
$region0: #{tpu_custom_call.1}
  #allocation0 [shape = 'u32[]', space=smem, size = 0x4, offset = 0x4, fixed_abs, tag = 'smem constant byte address 0x4 - core index']
  #allocation1 [shape = 'u32[144,128]{1,0:T(1,128)}', space=vmem, size = 0x12000, scoped, tag = 'internal scratch']
  %s0 = inlined_call_operand.vmem [shape: f32[2,8,8], index: 0, kind: input, shape index: {}]
  %s1 = inlined_call_operand.vmem [shape: f32[2,32,8], index: 1, kind: input, shape index: {}]
  %s2 = inlined_call_operand.vmem [shape: bf16[2,96,32], index: 2, kind: input, shape index: {}]
  %s3 = inlined_call_operand.vmem [shape: bf16[2,64,32], index: 3, kind: input, shape index: {}]
  %s4 = inlined_call_operand.vmem [shape: bf16[2,32,32], index: 4, kind: input, shape index: {}]
  %s5 = inlined_call_operand.vmem [shape: bf16[2,32,64], index: 5, kind: input, shape index: {}]
  %s6 = inlined_call_operand.vmem [shape: f32[3,96,8], index: 6, kind: input, shape index: {}]
  %s7 = inlined_call_operand.vmem [shape: f32[2,32,8], index: 7, kind: output, shape index: {}]
  %s8 = sld [smem:[#allocation0]]
  $region61: #{tpu_custom_call.1} parent=0
    _
  %s10 = ssub.s32 1, %s8
  %s11 = scalar_select 0, %s10, %s8
  loop: start=0, step=1, limit=4
  $region2: #{tpu_custom_call.1} parent=0 // loop_pre_header
    _
  $region3: #{tpu_custom_call.1} parent=0 // loop_header
    %s13 = sphi 0, %s17
    %p14 = scmp.ge.s32.totalorder %s13, 4
    %s23 = sphi 0, %s25
    %s26 = sphi 0, %s23
    %s27 = sphi 0, %s26
    %s43 = sphi 0, %s27
    %s49 = sphi 0, %s51
    %s52 = sphi 0, %s49
    %s53 = sphi 0, %s52
    %s69 = sphi 0, %s53
    %s73 = sphi 0, %s73
    %s75 = sphi 0, %s73
    %s76 = sphi 0, %s75
    %s90 = sphi 0, %s76
    %s94 = sphi 0, %s94
    %s96 = sphi 0, %s94
    %s97 = sphi 0, %s96
    %s111 = sphi 0, %s97
    %s115 = sphi 0, %s115
    %s117 = sphi 0, %s115
    %s118 = sphi 0, %s117
    %s132 = sphi 0, %s118
    %s136 = sphi 0, %s136
    %s138 = sphi 0, %s136
    %s139 = sphi 0, %s138
    %s153 = sphi 0, %s139
    %s157 = sphi 0, %s157
    %s159 = sphi 0, %s157
    %s160 = sphi 0, %s159
    %s174 = sphi 0, %s160
    %s180 = sphi 0, %s182
    %s183 = sphi 0, %s180
    %s184 = sphi 0, %s183
    %s200 = sphi 0, %s184
  $region4: #{tpu_custom_call.1} parent=0 // loop_header_branch
    %16 = sbr.rel (%p14) target = $region8
  $region5: #{tpu_custom_call.1} parent=0 // loop_body
    %s18 = ssub.s32 %s13, 1
    %s19 = ssub.s32 %s13, 2
    %s20 = sadd.s32 %s13, 1
    %s21 = ssub.s32 %s13, %s20
    %p22 = scmp.eq.s32.totalorder %s21, 0
    %s24 = sadd.s32 %s23, 1
    %s25 = scalar_select %p22, %s23, %s24
    %p28 = pneg %p22
    %p29 = scmp.eq.s32.totalorder %s13, 1
    %p30 = por %p28, %p29
    %p31 = scmp.ne.s32.totalorder %s23, %s26
    %p32 = scmp.eq.s32.totalorder %s13, 0
    %p33 = por %p31, %p32
    %p34 = scmp.ne.s32.totalorder %s23, %s26
    %p35 = scmp.eq.s32.totalorder %s18, 1
    %p36 = por %p34, %p35
    %p37 = scmp.ne.s32.totalorder %s26, %s27
    %p38 = scmp.eq.s32.totalorder %s18, 0
    %p39 = por %p37, %p38
    %p40 = scmp.ne.s32.totalorder %s26, %s27
    %p41 = scmp.eq.s32.totalorder %s19, 1
    %p42 = por %p40, %p41
    %p44 = scmp.ne.s32.totalorder %s27, %s43
    %p45 = scmp.eq.s32.totalorder %s19, 0
    %p46 = por %p44, %p45
    %s47 = ssub.s32 %s13, %s20
    %p48 = scmp.eq.s32.totalorder %s47, 0
    %s50 = sadd.s32 %s49, 1
    %s51 = scalar_select %p48, %s49, %s50
    %p54 = pneg %p48
    %p55 = scmp.eq.s32.totalorder %s13, 1
    %p56 = por %p54, %p55
    %p57 = scmp.ne.s32.totalorder %s49, %s52
    %p58 = scmp.eq.s32.totalorder %s13, 0
    %p59 = por %p57, %p58
    %p60 = scmp.ne.s32.totalorder %s49, %s52
    %p61 = scmp.eq.s32.totalorder %s18, 1
    %p62 = por %p60, %p61
    %p63 = scmp.ne.s32.totalorder %s52, %s53
    %p64 = scmp.eq.s32.totalorder %s18, 0
    %p65 = por %p63, %p64
    %p66 = scmp.ne.s32.totalorder %s52, %s53
    %p67 = scmp.eq.s32.totalorder %s19, 1
    %p68 = por %p66, %p67
    %p70 = scmp.ne.s32.totalorder %s53, %s69
    %p71 = scmp.eq.s32.totalorder %s19, 0
    %p72 = por %p70, %p71
    %s74 = sadd.s32 %s73, 1
    %p77 = scmp.eq.s32.totalorder %s13, 1
    %p78 = scmp.ne.s32.totalorder %s73, %s75
    %p79 = scmp.eq.s32.totalorder %s13, 0
    %p80 = por %p78, %p79
    %p81 = scmp.ne.s32.totalorder %s73, %s75
    %p82 = scmp.eq.s32.totalorder %s18, 1
    %p83 = por %p81, %p82
    %p84 = scmp.ne.s32.totalorder %s75, %s76
    %p85 = scmp.eq.s32.totalorder %s18, 0
    %p86 = por %p84, %p85
    %p87 = scmp.ne.s32.totalorder %s75, %s76
    %p88 = scmp.eq.s32.totalorder %s19, 1
    %p89 = por %p87, %p88
    %p91 = scmp.ne.s32.totalorder %s76, %s90
    %p92 = scmp.eq.s32.totalorder %s19, 0
    %p93 = por %p91, %p92
    %s95 = sadd.s32 %s94, 1
    %p98 = scmp.eq.s32.totalorder %s13, 1
    %p99 = scmp.ne.s32.totalorder %s94, %s96
    %p100 = scmp.eq.s32.totalorder %s13, 0
    %p101 = por %p99, %p100
    %p102 = scmp.ne.s32.totalorder %s94, %s96
    %p103 = scmp.eq.s32.totalorder %s18, 1
    %p104 = por %p102, %p103
    %p105 = scmp.ne.s32.totalorder %s96, %s97
    %p106 = scmp.eq.s32.totalorder %s18, 0
    %p107 = por %p105, %p106
    %p108 = scmp.ne.s32.totalorder %s96, %s97
    %p109 = scmp.eq.s32.totalorder %s19, 1
    %p110 = por %p108, %p109
    %p112 = scmp.ne.s32.totalorder %s97, %s111
    %p113 = scmp.eq.s32.totalorder %s19, 0
    %p114 = por %p112, %p113
    %s116 = sadd.s32 %s115, 1
    %p119 = scmp.eq.s32.totalorder %s13, 1
    %p120 = scmp.ne.s32.totalorder %s115, %s117
    %p121 = scmp.eq.s32.totalorder %s13, 0
    %p122 = por %p120, %p121
    %p123 = scmp.ne.s32.totalorder %s115, %s117
    %p124 = scmp.eq.s32.totalorder %s18, 1
    %p125 = por %p123, %p124
    %p126 = scmp.ne.s32.totalorder %s117, %s118
    %p127 = scmp.eq.s32.totalorder %s18, 0
    %p128 = por %p126, %p127
    %p129 = scmp.ne.s32.totalorder %s117, %s118
    %p130 = scmp.eq.s32.totalorder %s19, 1
    %p131 = por %p129, %p130
    %p133 = scmp.ne.s32.totalorder %s118, %s132
    %p134 = scmp.eq.s32.totalorder %s19, 0
    %p135 = por %p133, %p134
    %s137 = sadd.s32 %s136, 1
    %p140 = scmp.eq.s32.totalorder %s13, 1
    %p141 = scmp.ne.s32.totalorder %s136, %s138
    %p142 = scmp.eq.s32.totalorder %s13, 0
    %p143 = por %p141, %p142
    %p144 = scmp.ne.s32.totalorder %s136, %s138
    %p145 = scmp.eq.s32.totalorder %s18, 1
    %p146 = por %p144, %p145
    %p147 = scmp.ne.s32.totalorder %s138, %s139
    %p148 = scmp.eq.s32.totalorder %s18, 0
    %p149 = por %p147, %p148
    %p150 = scmp.ne.s32.totalorder %s138, %s139
    %p151 = scmp.eq.s32.totalorder %s19, 1
    %p152 = por %p150, %p151
    %p154 = scmp.ne.s32.totalorder %s139, %s153
    %p155 = scmp.eq.s32.totalorder %s19, 0
    %p156 = por %p154, %p155
    %s158 = sadd.s32 %s157, 1
    %p161 = scmp.eq.s32.totalorder %s13, 1
    %p162 = scmp.ne.s32.totalorder %s157, %s159
    %p163 = scmp.eq.s32.totalorder %s13, 0
    %p164 = por %p162, %p163
    %p165 = scmp.ne.s32.totalorder %s157, %s159
    %p166 = scmp.eq.s32.totalorder %s18, 1
    %p167 = por %p165, %p166
    %p168 = scmp.ne.s32.totalorder %s159, %s160
    %p169 = scmp.eq.s32.totalorder %s18, 0
    %p170 = por %p168, %p169
    %p171 = scmp.ne.s32.totalorder %s159, %s160
    %p172 = scmp.eq.s32.totalorder %s19, 1
    %p173 = por %p171, %p172
    %p175 = scmp.ne.s32.totalorder %s160, %s174
    %p176 = scmp.eq.s32.totalorder %s19, 0
    %p177 = por %p175, %p176
    %s178 = ssub.s32 %s13, %s20
    %p179 = scmp.eq.s32.totalorder %s178, 0
    %s181 = sadd.s32 %s180, 1
    %s182 = scalar_select %p179, %s180, %s181
    %p185 = pneg %p179
    %p186 = scmp.eq.s32.totalorder %s13, 1
    %p187 = por %p185, %p186
    %p188 = scmp.ne.s32.totalorder %s180, %s183
    %p189 = scmp.eq.s32.totalorder %s13, 0
    %p190 = por %p188, %p189
    %p191 = scmp.ne.s32.totalorder %s180, %s183
    %p192 = scmp.eq.s32.totalorder %s18, 1
    %p193 = por %p191, %p192
    %p194 = scmp.ne.s32.totalorder %s183, %s184
    %p195 = scmp.eq.s32.totalorder %s18, 0
    %p196 = por %p194, %p195
    %p197 = scmp.ne.s32.totalorder %s183, %s184
    %p198 = scmp.eq.s32.totalorder %s19, 1
    %p199 = por %p197, %p198
    %p201 = scmp.ne.s32.totalorder %s184, %s200
    %p202 = scmp.eq.s32.totalorder %s19, 0
    %p203 = por %p201, %p202
    %p204 = scmp.le.s32.totalorder 1, %s13
    %p205 = scmp.lt.s32.totalorder %s13, 3
    %p206 = pnand %p204, %p205
    %p207 = pneg %p206
    // Predicated region
    $region9: #{tpu_custom_call.1} parent=5 // pred_check
      _
    $region10: #{tpu_custom_call.1} parent=5 // pred_check_branch
      %209 = sbr.rel (%p206) target = $region12
    $region11: #{tpu_custom_call.1} parent=5 // pred_region
      %s210 = ssub.s32 %s13, 1
      // Predicated region
      $region13: #{tpu_custom_call.1} parent=11 // pred_check
        %p211 = pneg %p86
      $region14: #{tpu_custom_call.1} parent=11 // pred_check_branch
        %213 = sbr.rel (%p211) target = $region16
      $region15: #{tpu_custom_call.1} parent=11 // pred_region
        _
      $region16: #{tpu_custom_call.1} parent=11 // pred_fallthru
        _
      // Predicated region
      $region17: #{tpu_custom_call.1} parent=11 // pred_check
        %p214 = pneg %p107
      $region18: #{tpu_custom_call.1} parent=11 // pred_check_branch
        %216 = sbr.rel (%p214) target = $region20
      $region19: #{tpu_custom_call.1} parent=11 // pred_region
        _
      $region20: #{tpu_custom_call.1} parent=11 // pred_fallthru
        _
      // Predicated region
      $region21: #{tpu_custom_call.1} parent=11 // pred_check
        %p217 = pneg %p128
      $region22: #{tpu_custom_call.1} parent=11 // pred_check_branch
        %219 = sbr.rel (%p217) target = $region24
      $region23: #{tpu_custom_call.1} parent=11 // pred_region
        _
      $region24: #{tpu_custom_call.1} parent=11 // pred_fallthru
        _
      // Predicated region
      $region25: #{tpu_custom_call.1} parent=11 // pred_check
        %p220 = pneg %p149
      $region26: #{tpu_custom_call.1} parent=11 // pred_check_branch
        %222 = sbr.rel (%p220) target = $region28
      $region27: #{tpu_custom_call.1} parent=11 // pred_region
        _
      $region28: #{tpu_custom_call.1} parent=11 // pred_fallthru
        _
      // Predicated region
      $region29: #{tpu_custom_call.1} parent=11 // pred_check
        %p223 = pneg %p170
      $region30: #{tpu_custom_call.1} parent=11 // pred_check_branch
        %225 = sbr.rel (%p223) target = $region32
      $region31: #{tpu_custom_call.1} parent=11 // pred_region
        _
      $region32: #{tpu_custom_call.1} parent=11 // pred_fallthru
        _
    $region12: #{tpu_custom_call.1} parent=5 // pred_fallthru
      _
    %p226 = scmp.lt.s32.totalorder %s13, 2
    // Predicated region
    $region33: #{tpu_custom_call.1} parent=5 // pred_check
      %p227 = pneg %p226
    $region34: #{tpu_custom_call.1} parent=5 // pred_check_branch
      %229 = sbr.rel (%p227) target = $region36
    $region35: #{tpu_custom_call.1} parent=5 // pred_region
      // Predicated region
      $region37: #{tpu_custom_call.1} parent=35 // pred_check
        %p230 = pneg %p33
      $region38: #{tpu_custom_call.1} parent=35 // pred_check_branch
        %232 = sbr.rel (%p230) target = $region40
      $region39: #{tpu_custom_call.1} parent=35 // pred_region
        %p233 = scmp.lt.s32.totalorder %s13, 1
        %s234 = scalar_select %p233, %s13, 1
        %s235 = smul.addr %s234, 8
        %s236 = scalar_lea.vmem %s0, %s235
      $region40: #{tpu_custom_call.1} parent=35 // pred_fallthru
        _
      // Predicated region
      $region41: #{tpu_custom_call.1} parent=35 // pred_check
        %p237 = pneg %p59
      $region42: #{tpu_custom_call.1} parent=35 // pred_check_branch
        %239 = sbr.rel (%p237) target = $region44
      $region43: #{tpu_custom_call.1} parent=35 // pred_region
        %p240 = scmp.lt.s32.totalorder %s13, 1
        %s241 = scalar_select %p240, %s13, 1
        %s242 = smul.addr %s241, 4
        %s243 = smul.addr %s242, 8
        %s244 = scalar_lea.vmem %s1, %s243
      $region44: #{tpu_custom_call.1} parent=35 // pred_fallthru
        _
    $region36: #{tpu_custom_call.1} parent=5 // pred_fallthru
      _
    %p245 = scmp.le.s32.totalorder 1, %s13
    %p246 = scmp.lt.s32.totalorder %s13, 3
    %p247 = pnand %p245, %p246
    %p248 = pneg %p247
    // Predicated region
    $region45: #{tpu_custom_call.1} parent=5 // pred_check
      _
    $region46: #{tpu_custom_call.1} parent=5 // pred_check_branch
      %250 = sbr.rel (%p247) target = $region48
    $region47: #{tpu_custom_call.1} parent=5 // pred_region
      %s251 = ssub.s32 %s13, 1
      %p252 = scmp.lt.s32.totalorder %s18, 1
      %s253 = scalar_select %p252, %s18, 1
      %s254 = smul.addr %s253, 8
      %s255 = scalar_lea.vmem %s0, %s254
      %p256 = pneg %p39
      %p257 = pneg %p36
      %p258 = scmp.lt.s32.totalorder %s18, 1
      %s259 = scalar_select %p258, %s18, 1
      %s260 = smul.addr %s259, 4
      %s261 = smul.addr %s260, 8
      %s262 = scalar_lea.vmem %s1, %s261
      %p263 = pneg %p65
      %p264 = pneg %p62
      %p265 = pneg %p86
      %p266 = pneg %p83
      %p267 = pneg %p107
      %p268 = pneg %p104
      %p269 = pneg %p128
      %p270 = pneg %p125
      %p271 = pneg %p149
      %p272 = pneg %p146
      %p273 = pneg %p170
      %p274 = pneg %p167
      %p275 = pneg %p196
      %p276 = pneg %p193
      %p277 = scmp.lt.s32.totalorder %s18, 1
      %s278 = scalar_select %p277, %s18, 1
      %s279 = smul.addr %s278, 4
      %s280 = smul.addr %s279, 8
      %s281 = scalar_lea.vmem %s7, %s280
      %p282 = scmp.lt.s32.totalorder %s18, 1
      %s283 = scalar_select %p282, %s18, 1
      %s284 = smul.addr %s283, 8
      %s285 = scalar_lea.vmem %s0, %s284
      %p286 = scmp.lt.s32.totalorder %s18, 1
      %s287 = scalar_select %p286, %s18, 1
      %s288 = smul.addr %s287, 4
      %s289 = smul.addr %s288, 8
      %s290 = scalar_lea.vmem %s1, %s289
      %p291 = scmp.lt.s32.totalorder %s18, 1
      %s292 = scalar_select %p291, %s18, 1
      %s293 = smul.addr %s292, 4
      %s294 = smul.addr %s293, 8
      %s295 = scalar_lea.vmem %s7, %s294
      %v297 = vld [vmem:[%s290] sm:$0xff]
      %v298 = vld [vmem:[%s290 + $0x8] sm:$0xff]
      %v299 = vld [vmem:[%s290 + $0x10] sm:$0xff]
      %v300 = vld [vmem:[%s290 + $0x18] sm:$0xff]
      %v301 = vld [vmem:[%s285] sm:$0xff]
      %v302 = vld [vmem:[%s2] sm:$0xf]
      %v303 = vld [vmem:[%s2 + $0x4] sm:$0xf]
      %v304 = vld [vmem:[%s2 + $0x8] sm:$0xf]
      %v305 = vld [vmem:[%s2 + $0xc] sm:$0xf]
      %v306 = vld [vmem:[%s2 + $0x10] sm:$0xf]
      %v307 = vld [vmem:[%s2 + $0x14] sm:$0xf]
      %v308 = vld [vmem:[%s2 + $0x18] sm:$0xf]
      %v309 = vld [vmem:[%s2 + $0x1c] sm:$0xf]
      %v310 = vld [vmem:[%s2 + $0x20] sm:$0xf]
      %v311 = vld [vmem:[%s2 + $0x24] sm:$0xf]
      %v312 = vld [vmem:[%s2 + $0x28] sm:$0xf]
      %v313 = vld [vmem:[%s2 + $0x2c] sm:$0xf]
      %v314 = vld [vmem:[%s3] sm:$0xf]
      %v315 = vld [vmem:[%s3 + $0x4] sm:$0xf]
      %v316 = vld [vmem:[%s3 + $0x8] sm:$0xf]
      %v317 = vld [vmem:[%s3 + $0xc] sm:$0xf]
      %v318 = vld [vmem:[%s3 + $0x10] sm:$0xf]
      %v319 = vld [vmem:[%s3 + $0x14] sm:$0xf]
      %v320 = vld [vmem:[%s3 + $0x18] sm:$0xf]
      %v321 = vld [vmem:[%s3 + $0x1c] sm:$0xf]
      %v322 = vld [vmem:[%s4] sm:$0xf]
      %v323 = vld [vmem:[%s4 + $0x4] sm:$0xf]
      %v324 = vld [vmem:[%s4 + $0x8] sm:$0xf]
      %v325 = vld [vmem:[%s4 + $0xc] sm:$0xf]
      %v326 = vld [vmem:[%s5] sm:$0xf]
      %v327 = vld [vmem:[%s5 + $0x4] sm:$0xf]
      %v328 = vld [vmem:[%s5 + $0x8] sm:$0xf]
      %v329 = vld [vmem:[%s5 + $0xc] sm:$0xf]
      %v330 = vld [vmem:[%s6] sm:$0xff]
      %v331 = vld [vmem:[%s6 + $0x8] sm:$0xff]
      %v332 = vld [vmem:[%s6 + $0x10] sm:$0xff]
      %v333 = vld [vmem:[%s6 + $0x18] sm:$0xff]
      %v334 = vld [vmem:[%s6 + $0x20] sm:$0xff]
      %v335 = vld [vmem:[%s6 + $0x28] sm:$0xff]
      %v336 = vld [vmem:[%s6 + $0x30] sm:$0xff]
      %v337 = vld [vmem:[%s6 + $0x38] sm:$0xff]
      %v338 = vld [vmem:[%s6 + $0x40] sm:$0xff]
      %v339 = vld [vmem:[%s6 + $0x48] sm:$0xff]
      %v340 = vld [vmem:[%s6 + $0x50] sm:$0xff]
      %v341 = vld [vmem:[%s6 + $0x58] sm:$0xff]
      %vm342 = vcmask 64512
      %v343 = vsel %vm342, %v297, 0.0
      %v344 = vsel %vm342, %v298, 0.0
      %v345 = vadd.f32 %v343, %v344
      %v346 = vsel %vm342, %v299, 0.0
      %v347 = vadd.f32 %v345, %v346
      %v348 = vsel %vm342, %v300, 0.0
      %v349 = vadd.f32 %v347, %v348
      %v350 = vrot.slane %v349, 4
      %v351 = vadd.f32 %v349, %v350
      %v352 = vrot.slane %v351, 2
      %v353 = vadd.f32 %v351, %v352
      %v354 = vrot.slane %v353, 1
      %v355 = vadd.f32 %v353, %v354
      %v356 = vrcp.pop 32.0
      %v357 = vmul.f32 %v355, %v356
      %v358 = vsub.f32 %v297, %v357
      %v359 = vsub.f32 %v298, %v357
      %v360 = vsub.f32 %v299, %v357
      %v361 = vsub.f32 %v300, %v357
      %v362 = vmul.f32 %v358, %v358
      %v363 = vmul.f32 %v359, %v359
      %v364 = vmul.f32 %v360, %v360
      %v365 = vmul.f32 %v361, %v361
      %v366 = vsel %vm342, %v362, 0.0
      %v367 = vsel %vm342, %v363, 0.0
      %v368 = vadd.f32 %v366, %v367
      %v369 = vsel %vm342, %v364, 0.0
      %v370 = vadd.f32 %v368, %v369
      %v371 = vsel %vm342, %v365, 0.0
      %v372 = vadd.f32 %v370, %v371
      %v373 = vrot.slane %v372, 4
      %v374 = vadd.f32 %v372, %v373
      %v375 = vrot.slane %v374, 2
      %v376 = vadd.f32 %v374, %v375
      %v377 = vrot.slane %v376, 1
      %v378 = vadd.f32 %v376, %v377
      %v379 = vmul.f32 %v378, 0.032258064
      %v380 = vrsqrt.pop %v379
      %v381 = vmul.f32 %v379, %v380
      %vm382 = vcmp.eq.f32.partialorder %v379, inf
      %v383 = vsel %vm382, %v379, %v381
      %vm384 = vcmp.eq.f32.partialorder %v379, 0.0
      %v385 = vand.u32 %v379, 2147483648
      %v386 = vsel %vm384, %v385, %v383
      %388 = vset.pattern.permute.xlu0 2
      %389 = vperm.xlu0 %388, %v330
      %v390 = vpop.permute.xlu0 %389
      %393 = vset.pattern.permute.xlu0 2
      %394 = vperm.xlu0 %393, %v331
      %v395 = vpop.permute.xlu0 %394
      %398 = vset.pattern.permute.xlu0 2
      %399 = vperm.xlu0 %398, %v332
      %v400 = vpop.permute.xlu0 %399
      %403 = vset.pattern.permute.xlu0 2
      %404 = vperm.xlu0 %403, %v333
      %v405 = vpop.permute.xlu0 %404
      %v407 = vmul.f32 %v390, %v358
      %v408 = vmul.f32 %v395, %v359
      %v409 = vmul.f32 %v400, %v360
      %v410 = vmul.f32 %v405, %v361
      %v411 = vadd.f32 %v386, 1e-06
      %v412 = vrcp.pop %v411
      %v413 = vmul.f32 %v407, %v412
      %v414 = vmul.f32 %v408, %v412
      %v415 = vmul.f32 %v409, %v412
      %v416 = vmul.f32 %v410, %v412
      %417 = vset.pattern.permute.xlu0 3
      %418 = vperm.xlu0 %417, %v330
      %v419 = vpop.permute.xlu0 %418
      %421 = vset.pattern.permute.xlu0 3
      %422 = vperm.xlu0 %421, %v331
      %v423 = vpop.permute.xlu0 %422
      %425 = vset.pattern.permute.xlu0 3
      %426 = vperm.xlu0 %425, %v332
      %v427 = vpop.permute.xlu0 %426
      %429 = vset.pattern.permute.xlu0 3
      %430 = vperm.xlu0 %429, %v333
      %v431 = vpop.permute.xlu0 %430
      %v433 = vadd.f32 %v413, %v419
      %v434 = vadd.f32 %v414, %v423
      %v435 = vadd.f32 %v415, %v427
      %v436 = vadd.f32 %v416, %v431
      %v437 = vpack.c.bf16 %v434, %v433
      %v438 = vpack.c.bf16 %v436, %v435
      %439 = vset.pattern.permute.xlu0 0
      %440 = vperm.xlu0 %439, %v330
      %v441 = vpop.permute.xlu0 %440
      %443 = vset.pattern.permute.xlu0 0
      %444 = vperm.xlu0 %443, %v331
      %v445 = vpop.permute.xlu0 %444
      %447 = vset.pattern.permute.xlu0 0
      %448 = vperm.xlu0 %447, %v332
      %v449 = vpop.permute.xlu0 %448
      %451 = vset.pattern.permute.xlu0 0
      %452 = vperm.xlu0 %451, %v333
      %v453 = vpop.permute.xlu0 %452
      %456 = vset.pattern.permute.xlu0 0
      %457 = vperm.xlu0 %456, %v334
      %v458 = vpop.permute.xlu0 %457
      %461 = vset.pattern.permute.xlu0 0
      %462 = vperm.xlu0 %461, %v335
      %v463 = vpop.permute.xlu0 %462
      %466 = vset.pattern.permute.xlu0 0
      %467 = vperm.xlu0 %466, %v336
      %v468 = vpop.permute.xlu0 %467
      %471 = vset.pattern.permute.xlu0 0
      %472 = vperm.xlu0 %471, %v337
      %v473 = vpop.permute.xlu0 %472
      %476 = vset.pattern.permute.xlu0 0
      %477 = vperm.xlu0 %476, %v338
      %v478 = vpop.permute.xlu0 %477
      %481 = vset.pattern.permute.xlu0 0
      %482 = vperm.xlu0 %481, %v339
      %v483 = vpop.permute.xlu0 %482
      %486 = vset.pattern.permute.xlu0 0
      %487 = vperm.xlu0 %486, %v340
      %v488 = vpop.permute.xlu0 %487
      %491 = vset.pattern.permute.xlu0 0
      %492 = vperm.xlu0 %491, %v341
      %v493 = vpop.permute.xlu0 %492
      %v507 = vunpack.c.l.b16 %v302
      %v508 = vunpack.c.l.b16 %v303
      %v509 = vunpack.c.l.b16 %v304
      %v510 = vunpack.c.l.b16 %v305
      %v511 = vunpack.c.l.b16 %v306
      %v512 = vunpack.c.l.b16 %v307
      %v513 = vunpack.c.l.b16 %v308
      %v514 = vunpack.c.l.b16 %v309
      %v515 = vunpack.c.l.b16 %v310
      %v516 = vunpack.c.l.b16 %v311
      %v517 = vunpack.c.l.b16 %v312
      %v518 = vunpack.c.l.b16 %v313
      %v519 = vpack.c.b16 %v508, %v507
      %v520 = vpack.c.b16 %v510, %v509
      %v521 = vpack.c.b16 %v512, %v511
      %v522 = vpack.c.b16 %v514, %v513
      %v523 = vpack.c.b16 %v516, %v515
      %v524 = vpack.c.b16 %v518, %v517
      %vm525 = vcmask 261120
      %v527 = vsel %vm525, %v519, 0
      %v530 = vsel %vm525, %v520, 0
      %v533 = vsel %vm525, %v521, 0
      %v536 = vsel %vm525, %v522, 0
      %v539 = vsel %vm525, %v523, 0
      %v542 = vsel %vm525, %v524, 0
      %544 = vmatprep.subr.bf16.mxu0 0
      %545 = vmatpush1.bf16.msra.mxu0 %v437
      %546 = vmatprep.subr.bf16.mxu0 0
      %547 = vmatpush1.bf16.msra.mxu0 %v438
      %548 = vmatprep.subr.bf16.mxu0 0
      %549 = vmatpush1.bf16.msra.mxu0 0
      %550 = vmatprep.subr.bf16.mxu0 0
      %551 = vmatpush1.bf16.msra.mxu0 0
      %552 = vmatprep.subr.bf16.mxu0 0
      %553 = vmatpush1.bf16.msra.mxu0 0
      %554 = vmatprep.subr.bf16.mxu0 0
      %555 = vmatpush1.bf16.msra.mxu0 0
      %556 = vmatprep.subr.bf16.mxu0 0
      %557 = vmatpush1.bf16.msra.mxu0 0
      %558 = vmatprep.subr.bf16.mxu0 0
      %559 = vmatpush1.bf16.msra.mxu0 0
      %560 = vmatprep.subr.bf16.mxu0 0
      %561 = vmatpush1.bf16.msra.mxu0 0
      %562 = vmatprep.subr.bf16.mxu0 0
      %563 = vmatpush1.bf16.msra.mxu0 0
      %564 = vmatprep.subr.bf16.mxu0 0
      %565 = vmatpush1.bf16.msra.mxu0 0
      %566 = vmatprep.subr.bf16.mxu0 0
      %567 = vmatpush1.bf16.msra.mxu0 0
      %568 = vmatprep.subr.bf16.mxu0 0
      %569 = vmatpush1.bf16.msra.mxu0 0
      %570 = vmatprep.subr.bf16.mxu0 0
      %571 = vmatpush1.bf16.msra.mxu0 0
      %572 = vmatprep.subr.bf16.mxu0 0
      %573 = vmatpush1.bf16.msra.mxu0 0
      %574 = vmatprep.subr.bf16.mxu0 0
      %575 = vmatpush1.bf16.msra.mxu0 0
      %576 = vmatprep.mubr.bf16.mxu0 0
      %577 = vmatmul.mubr.bf16.gmra.mrb[0].mxu0 %v527
      %v578 = vpop.f32.mrb[0].mxu0
      %v579 = vadd.f32 %v441, %v578
      %v580 = vpop.f32.mrb[0].mxu0
      %v581 = vpop.f32.mrb[0].mxu0
      %v582 = vadd.f32 %v445, %v581
      %v583 = vpop.f32.mrb[0].mxu0
      %584 = vmatprep.mubr.bf16.mxu0 0
      %585 = vmatmul.mubr.bf16.gmra.mrb[0].mxu0 %v530
      %v586 = vpop.f32.mrb[0].mxu0
      %v587 = vadd.f32 %v449, %v586
      %v588 = vpop.f32.mrb[0].mxu0
      %v589 = vpop.f32.mrb[0].mxu0
      %v590 = vadd.f32 %v453, %v589
      %v591 = vpop.f32.mrb[0].mxu0
      %592 = vmatprep.mubr.bf16.mxu0 0
      %593 = vmatmul.mubr.bf16.gmra.mrb[0].mxu0 %v533
      %v594 = vpop.f32.mrb[0].mxu0
      %v595 = vadd.f32 %v458, %v594
      %v596 = vpop.f32.mrb[0].mxu0
      %v597 = vpop.f32.mrb[0].mxu0
      %v598 = vadd.f32 %v463, %v597
      %v599 = vpop.f32.mrb[0].mxu0
      %600 = vmatprep.mubr.bf16.mxu0 0
      %601 = vmatmul.mubr.bf16.gmra.mrb[0].mxu0 %v536
      %v602 = vpop.f32.mrb[0].mxu0
      %v603 = vadd.f32 %v468, %v602
      %v604 = vpop.f32.mrb[0].mxu0
      %v605 = vpop.f32.mrb[0].mxu0
      %v606 = vadd.f32 %v473, %v605
      %v607 = vpop.f32.mrb[0].mxu0
      %608 = vmatprep.mubr.bf16.mxu0 0
      %609 = vmatmul.mubr.bf16.gmra.mrb[0].mxu0 %v539
      %v610 = vpop.f32.mrb[0].mxu0
      %v611 = vadd.f32 %v478, %v610
      %v612 = vpop.f32.mrb[0].mxu0
      %v613 = vpop.f32.mrb[0].mxu0
      %v614 = vadd.f32 %v483, %v613
      %v615 = vpop.f32.mrb[0].mxu0
      %616 = vmatprep.mubr.bf16.mxu0 0
      %617 = vmatmul.mubr.bf16.gmra.mrb[0].mxu0 %v542
      %v618 = vpop.f32.mrb[0].mxu0
      %v619 = vadd.f32 %v488, %v618
      %v620 = vpop.f32.mrb[0].mxu0
      %v621 = vpop.f32.mrb[0].mxu0
      %v622 = vadd.f32 %v493, %v621
      %v623 = vpop.f32.mrb[0].mxu0
      %624 = vdwg.mxu0
      %625 = vxpose.xlu0.b32.start [1/16] %v579, 128
      %626 = vxpose.xlu0.b32.cont [2/16] 0.0, 128
      %627 = vxpose.xlu0.b32.cont [3/16] 0.0, 128
      %628 = vxpose.xlu0.b32.cont [4/16] 0.0, 128
      %629 = vxpose.xlu0.b32.cont [5/16] 0.0, 128
      %630 = vxpose.xlu0.b32.cont [6/16] 0.0, 128
      %631 = vxpose.xlu0.b32.cont [7/16] 0.0, 128
      %632 = vxpose.xlu0.b32.cont [8/16] 0.0, 128
      %633 = vxpose.xlu0.b32.cont [9/16] 0.0, 128
      %634 = vxpose.xlu0.b32.cont [10/16] 0.0, 128
      %635 = vxpose.xlu0.b32.cont [11/16] 0.0, 128
      %636 = vxpose.xlu0.b32.cont [12/16] 0.0, 128
      %637 = vxpose.xlu0.b32.cont [13/16] 0.0, 128
      %638 = vxpose.xlu0.b32.cont [14/16] 0.0, 128
      %639 = vxpose.xlu0.b32.cont [15/16] 0.0, 128
      %640 = vxpose.xlu0.b32.end [16/16] 0.0, 128
      %v641 = vpop.trf.xlu0
      %v642 = vpop.trf.xlu0
      %v643 = vpop.trf.xlu0
      %v644 = vpop.trf.xlu0
      %v645 = vpop.trf.xlu0
      %v646 = vpop.trf.xlu0
      %v647 = vpop.trf.xlu0
      %v648 = vpop.trf.xlu0
      %v649 = vpop.trf.xlu0
      %v650 = vpop.trf.xlu0
      %v651 = vpop.trf.xlu0
      %v652 = vpop.trf.xlu0
      %v653 = vpop.trf.xlu0
      %v654 = vpop.trf.xlu0
      %v655 = vpop.trf.xlu0
      %v656 = vpop.trf.xlu0
      %v658 = vsel %vm342, %v641, 0
      %660 = vmatprep.subr.mxu0 0.0
      %661 = vmatpush1.msra.mxu0 %v595
      %662 = vmatprep.subr.mxu0 0.0
      %663 = vmatpush1.msra.mxu0 0.0
      %664 = vmatprep.subr.mxu0 0.0
      %665 = vmatpush1.msra.mxu0 0.0
      %666 = vmatprep.subr.mxu0 0.0
      %667 = vmatpush1.msra.mxu0 0.0
      %668 = vmatprep.subr.mxu0 0.0
      %669 = vmatpush1.msra.mxu0 0.0
      %670 = vmatprep.subr.mxu0 0.0
      %671 = vmatpush1.msra.mxu0 0.0
      %672 = vmatprep.subr.mxu0 0.0
      %673 = vmatpush1.msra.mxu0 0.0
      %674 = vmatprep.subr.mxu0 0.0
      %675 = vmatpush1.msra.mxu0 0.0
      %676 = vmatprep.subr.mxu0 0.0
      %677 = vmatpush1.msra.mxu0 0.0
      %678 = vmatprep.subr.mxu0 0.0
      %679 = vmatpush1.msra.mxu0 0.0
      %680 = vmatprep.subr.mxu0 0.0
      %681 = vmatpush1.msra.mxu0 0.0
      %682 = vmatprep.subr.mxu0 0.0
      %683 = vmatpush1.msra.mxu0 0.0
      %684 = vmatprep.subr.mxu0 0.0
      %685 = vmatpush1.msra.mxu0 0.0
      %686 = vmatprep.subr.mxu0 0.0
      %687 = vmatpush1.msra.mxu0 0.0
      %688 = vmatprep.subr.mxu0 0.0
      %689 = vmatpush1.msra.mxu0 0.0
      %690 = vmatprep.subr.mxu0 0.0
      %691 = vmatpush1.msra.mxu0 0.0
      %692 = vmatprep.subr.mxu0 0.0
      %693 = vmatpush1.msra.mxu0 0.0
      %694 = vmatprep.subr.mxu0 0.0
      %695 = vmatpush1.msra.mxu0 0.0
      %696 = vmatprep.subr.mxu0 0.0
      %697 = vmatpush1.msra.mxu0 0.0
      %698 = vmatprep.subr.mxu0 0.0
      %699 = vmatpush1.msra.mxu0 0.0
      %700 = vmatprep.subr.mxu0 0.0
      %701 = vmatpush1.msra.mxu0 0.0
      %702 = vmatprep.subr.mxu0 0.0
      %703 = vmatpush1.msra.mxu0 0.0
      %704 = vmatprep.subr.mxu0 0.0
      %705 = vmatpush1.msra.mxu0 0.0
      %706 = vmatprep.subr.mxu0 0.0
      %707 = vmatpush1.msra.mxu0 0.0
      %708 = vmatprep.subr.mxu0 0.0
      %709 = vmatpush1.msra.mxu0 0.0
      %710 = vmatprep.subr.mxu0 0.0
      %711 = vmatpush1.msra.mxu0 0.0
      %712 = vmatprep.subr.mxu0 0.0
      %713 = vmatpush1.msra.mxu0 0.0
      %714 = vmatprep.subr.mxu0 0.0
      %715 = vmatpush1.msra.mxu0 0.0
      %716 = vmatprep.subr.mxu0 0.0
      %717 = vmatpush1.msra.mxu0 0.0
      %718 = vmatprep.subr.mxu0 0.0
      %719 = vmatpush1.msra.mxu0 0.0
      %720 = vmatprep.subr.mxu0 0.0
      %721 = vmatpush1.msra.mxu0 0.0
      %722 = vmatprep.subr.mxu0 0.0
      %723 = vmatpush1.msra.mxu0 0.0
      %724 = vmatprep.mubr.f32.mxu0 0.0
      %725 = vmatmul.mubr.f32.gmra.mrb[0].mxu0 %v658
      %v726 = vpop.f32.mrb[0].mxu0
      %v727 = vadd.f32 0.0, %v726
      %v728 = vpop.f32.mrb[0].mxu0
      %729 = vdwg.mxu0
      %730 = vxpose.xlu0.b32.start [1/16] %v582, 128
      %731 = vxpose.xlu0.b32.cont [2/16] 0.0, 128
      %732 = vxpose.xlu0.b32.cont [3/16] 0.0, 128
      %733 = vxpose.xlu0.b32.cont [4/16] 0.0, 128
      %734 = vxpose.xlu0.b32.cont [5/16] 0.0, 128
      %735 = vxpose.xlu0.b32.cont [6/16] 0.0, 128
      %736 = vxpose.xlu0.b32.cont [7/16] 0.0, 128
      %737 = vxpose.xlu0.b32.cont [8/16] 0.0, 128
      %738 = vxpose.xlu0.b32.cont [9/16] 0.0, 128
      %739 = vxpose.xlu0.b32.cont [10/16] 0.0, 128
      %740 = vxpose.xlu0.b32.cont [11/16] 0.0, 128
      %741 = vxpose.xlu0.b32.cont [12/16] 0.0, 128
      %742 = vxpose.xlu0.b32.cont [13/16] 0.0, 128
      %743 = vxpose.xlu0.b32.cont [14/16] 0.0, 128
      %744 = vxpose.xlu0.b32.cont [15/16] 0.0, 128
      %745 = vxpose.xlu0.b32.end [16/16] 0.0, 128
      %v746 = vpop.trf.xlu0
      %v747 = vpop.trf.xlu0
      %v748 = vpop.trf.xlu0
      %v749 = vpop.trf.xlu0
      %v750 = vpop.trf.xlu0
      %v751 = vpop.trf.xlu0
      %v752 = vpop.trf.xlu0
      %v753 = vpop.trf.xlu0
      %v754 = vpop.trf.xlu0
      %v755 = vpop.trf.xlu0
      %v756 = vpop.trf.xlu0
      %v757 = vpop.trf.xlu0
      %v758 = vpop.trf.xlu0
      %v759 = vpop.trf.xlu0
      %v760 = vpop.trf.xlu0
      %v761 = vpop.trf.xlu0
      %v763 = vsel %vm342, %v746, 0
      %765 = vmatprep.subr.mxu0 0.0
      %766 = vmatpush1.msra.mxu0 %v598
      %767 = vmatprep.subr.mxu0 0.0
      %768 = vmatpush1.msra.mxu0 0.0
      %769 = vmatprep.subr.mxu0 0.0
      %770 = vmatpush1.msra.mxu0 0.0
      %771 = vmatprep.subr.mxu0 0.0
      %772 = vmatpush1.msra.mxu0 0.0
      %773 = vmatprep.subr.mxu0 0.0
      %774 = vmatpush1.msra.mxu0 0.0
      %775 = vmatprep.subr.mxu0 0.0
      %776 = vmatpush1.msra.mxu0 0.0
      %777 = vmatprep.subr.mxu0 0.0
      %778 = vmatpush1.msra.mxu0 0.0
      %779 = vmatprep.subr.mxu0 0.0
      %780 = vmatpush1.msra.mxu0 0.0
      %781 = vmatprep.subr.mxu0 0.0
      %782 = vmatpush1.msra.mxu0 0.0
      %783 = vmatprep.subr.mxu0 0.0
      %784 = vmatpush1.msra.mxu0 0.0
      %785 = vmatprep.subr.mxu0 0.0
      %786 = vmatpush1.msra.mxu0 0.0
      %787 = vmatprep.subr.mxu0 0.0
      %788 = vmatpush1.msra.mxu0 0.0
      %789 = vmatprep.subr.mxu0 0.0
      %790 = vmatpush1.msra.mxu0 0.0
      %791 = vmatprep.subr.mxu0 0.0
      %792 = vmatpush1.msra.mxu0 0.0
      %793 = vmatprep.subr.mxu0 0.0
      %794 = vmatpush1.msra.mxu0 0.0
      %795 = vmatprep.subr.mxu0 0.0
      %796 = vmatpush1.msra.mxu0 0.0
      %797 = vmatprep.subr.mxu0 0.0
      %798 = vmatpush1.msra.mxu0 0.0
      %799 = vmatprep.subr.mxu0 0.0
      %800 = vmatpush1.msra.mxu0 0.0
      %801 = vmatprep.subr.mxu0 0.0
      %802 = vmatpush1.msra.mxu0 0.0
      %803 = vmatprep.subr.mxu0 0.0
      %804 = vmatpush1.msra.mxu0 0.0
      %805 = vmatprep.subr.mxu0 0.0
      %806 = vmatpush1.msra.mxu0 0.0
      %807 = vmatprep.subr.mxu0 0.0
      %808 = vmatpush1.msra.mxu0 0.0
      %809 = vmatprep.subr.mxu0 0.0
      %810 = vmatpush1.msra.mxu0 0.0
      %811 = vmatprep.subr.mxu0 0.0
      %812 = vmatpush1.msra.mxu0 0.0
      %813 = vmatprep.subr.mxu0 0.0
      %814 = vmatpush1.msra.mxu0 0.0
      %815 = vmatprep.subr.mxu0 0.0
      %816 = vmatpush1.msra.mxu0 0.0
      %817 = vmatprep.subr.mxu0 0.0
      %818 = vmatpush1.msra.mxu0 0.0
      %819 = vmatprep.subr.mxu0 0.0
      %820 = vmatpush1.msra.mxu0 0.0
      %821 = vmatprep.subr.mxu0 0.0
      %822 = vmatpush1.msra.mxu0 0.0
      %823 = vmatprep.subr.mxu0 0.0
      %824 = vmatpush1.msra.mxu0 0.0
      %825 = vmatprep.subr.mxu0 0.0
      %826 = vmatpush1.msra.mxu0 0.0
      %827 = vmatprep.subr.mxu0 0.0
      %828 = vmatpush1.msra.mxu0 0.0
      %829 = vmatprep.mubr.f32.mxu0 0.0
      %830 = vmatmul.mubr.f32.gmra.mrb[0].mxu0 %v763
      %v831 = vpop.f32.mrb[0].mxu0
      %v832 = vadd.f32 0.0, %v831
      %v833 = vpop.f32.mrb[0].mxu0
      %834 = vdwg.mxu0
      %835 = vxpose.xlu0.b32.start [1/16] %v587, 128
      %836 = vxpose.xlu0.b32.cont [2/16] 0.0, 128
      %837 = vxpose.xlu0.b32.cont [3/16] 0.0, 128
      %838 = vxpose.xlu0.b32.cont [4/16] 0.0, 128
      %839 = vxpose.xlu0.b32.cont [5/16] 0.0, 128
      %840 = vxpose.xlu0.b32.cont [6/16] 0.0, 128
      %841 = vxpose.xlu0.b32.cont [7/16] 0.0, 128
      %842 = vxpose.xlu0.b32.cont [8/16] 0.0, 128
      %843 = vxpose.xlu0.b32.cont [9/16] 0.0, 128
      %844 = vxpose.xlu0.b32.cont [10/16] 0.0, 128
      %845 = vxpose.xlu0.b32.cont [11/16] 0.0, 128
      %846 = vxpose.xlu0.b32.cont [12/16] 0.0, 128
      %847 = vxpose.xlu0.b32.cont [13/16] 0.0, 128
      %848 = vxpose.xlu0.b32.cont [14/16] 0.0, 128
      %849 = vxpose.xlu0.b32.cont [15/16] 0.0, 128
      %850 = vxpose.xlu0.b32.end [16/16] 0.0, 128
      %v851 = vpop.trf.xlu0
      %v852 = vpop.trf.xlu0
      %v853 = vpop.trf.xlu0
      %v854 = vpop.trf.xlu0
      %v855 = vpop.trf.xlu0
      %v856 = vpop.trf.xlu0
      %v857 = vpop.trf.xlu0
      %v858 = vpop.trf.xlu0
      %v859 = vpop.trf.xlu0
      %v860 = vpop.trf.xlu0
      %v861 = vpop.trf.xlu0
      %v862 = vpop.trf.xlu0
      %v863 = vpop.trf.xlu0
      %v864 = vpop.trf.xlu0
      %v865 = vpop.trf.xlu0
      %v866 = vpop.trf.xlu0
      %v868 = vsel %vm342, %v851, 0
      %870 = vmatprep.subr.mxu0 0.0
      %871 = vmatpush1.msra.mxu0 %v603
      %872 = vmatprep.subr.mxu0 0.0
      %873 = vmatpush1.msra.mxu0 0.0
      %874 = vmatprep.subr.mxu0 0.0
      %875 = vmatpush1.msra.mxu0 0.0
      %876 = vmatprep.subr.mxu0 0.0
      %877 = vmatpush1.msra.mxu0 0.0
      %878 = vmatprep.subr.mxu0 0.0
      %879 = vmatpush1.msra.mxu0 0.0
      %880 = vmatprep.subr.mxu0 0.0
      %881 = vmatpush1.msra.mxu0 0.0
      %882 = vmatprep.subr.mxu0 0.0
      %883 = vmatpush1.msra.mxu0 0.0
      %884 = vmatprep.subr.mxu0 0.0
      %885 = vmatpush1.msra.mxu0 0.0
      %886 = vmatprep.subr.mxu0 0.0
      %887 = vmatpush1.msra.mxu0 0.0
      %888 = vmatprep.subr.mxu0 0.0
      %889 = vmatpush1.msra.mxu0 0.0
      %890 = vmatprep.subr.mxu0 0.0
      %891 = vmatpush1.msra.mxu0 0.0
      %892 = vmatprep.subr.mxu0 0.0
      %893 = vmatpush1.msra.mxu0 0.0
      %894 = vmatprep.subr.mxu0 0.0
      %895 = vmatpush1.msra.mxu0 0.0
      %896 = vmatprep.subr.mxu0 0.0
      %897 = vmatpush1.msra.mxu0 0.0
      %898 = vmatprep.subr.mxu0 0.0
      %899 = vmatpush1.msra.mxu0 0.0
      %900 = vmatprep.subr.mxu0 0.0
      %901 = vmatpush1.msra.mxu0 0.0
      %902 = vmatprep.subr.mxu0 0.0
      %903 = vmatpush1.msra.mxu0 0.0
      %904 = vmatprep.subr.mxu0 0.0
      %905 = vmatpush1.msra.mxu0 0.0
      %906 = vmatprep.subr.mxu0 0.0
      %907 = vmatpush1.msra.mxu0 0.0
      %908 = vmatprep.subr.mxu0 0.0
      %909 = vmatpush1.msra.mxu0 0.0
      %910 = vmatprep.subr.mxu0 0.0
      %911 = vmatpush1.msra.mxu0 0.0
      %912 = vmatprep.subr.mxu0 0.0
      %913 = vmatpush1.msra.mxu0 0.0
      %914 = vmatprep.subr.mxu0 0.0
      %915 = vmatpush1.msra.mxu0 0.0
      %916 = vmatprep.subr.mxu0 0.0
      %917 = vmatpush1.msra.mxu0 0.0
      %918 = vmatprep.subr.mxu0 0.0
      %919 = vmatpush1.msra.mxu0 0.0
      %920 = vmatprep.subr.mxu0 0.0
      %921 = vmatpush1.msra.mxu0 0.0
      %922 = vmatprep.subr.mxu0 0.0
      %923 = vmatpush1.msra.mxu0 0.0
      %924 = vmatprep.subr.mxu0 0.0
      %925 = vmatpush1.msra.mxu0 0.0
      %926 = vmatprep.subr.mxu0 0.0
      %927 = vmatpush1.msra.mxu0 0.0
      %928 = vmatprep.subr.mxu0 0.0
      %929 = vmatpush1.msra.mxu0 0.0
      %930 = vmatprep.subr.mxu0 0.0
      %931 = vmatpush1.msra.mxu0 0.0
      %932 = vmatprep.subr.mxu0 0.0
      %933 = vmatpush1.msra.mxu0 0.0
      %934 = vmatprep.mubr.f32.mxu0 0.0
      %935 = vmatmul.mubr.f32.gmra.mrb[0].mxu0 %v868
      %v936 = vpop.f32.mrb[0].mxu0
      %v937 = vadd.f32 0.0, %v936
      %v938 = vpop.f32.mrb[0].mxu0
      %939 = vdwg.mxu0
      %940 = vxpose.xlu0.b32.start [1/16] %v590, 128
      %941 = vxpose.xlu0.b32.cont [2/16] 0.0, 128
      %942 = vxpose.xlu0.b32.cont [3/16] 0.0, 128
      %943 = vxpose.xlu0.b32.cont [4/16] 0.0, 128
      %944 = vxpose.xlu0.b32.cont [5/16] 0.0, 128
      %945 = vxpose.xlu0.b32.cont [6/16] 0.0, 128
      %946 = vxpose.xlu0.b32.cont [7/16] 0.0, 128
      %947 = vxpose.xlu0.b32.cont [8/16] 0.0, 128
      %948 = vxpose.xlu0.b32.cont [9/16] 0.0, 128
      %949 = vxpose.xlu0.b32.cont [10/16] 0.0, 128
      %950 = vxpose.xlu0.b32.cont [11/16] 0.0, 128
      %951 = vxpose.xlu0.b32.cont [12/16] 0.0, 128
      %952 = vxpose.xlu0.b32.cont [13/16] 0.0, 128
      %953 = vxpose.xlu0.b32.cont [14/16] 0.0, 128
      %954 = vxpose.xlu0.b32.cont [15/16] 0.0, 128
      %955 = vxpose.xlu0.b32.end [16/16] 0.0, 128
      %v956 = vpop.trf.xlu0
      %v957 = vpop.trf.xlu0
      %v958 = vpop.trf.xlu0
      %v959 = vpop.trf.xlu0
      %v960 = vpop.trf.xlu0
      %v961 = vpop.trf.xlu0
      %v962 = vpop.trf.xlu0
      %v963 = vpop.trf.xlu0
      %v964 = vpop.trf.xlu0
      %v965 = vpop.trf.xlu0
      %v966 = vpop.trf.xlu0
      %v967 = vpop.trf.xlu0
      %v968 = vpop.trf.xlu0
      %v969 = vpop.trf.xlu0
      %v970 = vpop.trf.xlu0
      %v971 = vpop.trf.xlu0
      %v973 = vsel %vm342, %v956, 0
      %975 = vmatprep.subr.mxu0 0.0
      %976 = vmatpush1.msra.mxu0 %v606
      %977 = vmatprep.subr.mxu0 0.0
      %978 = vmatpush1.msra.mxu0 0.0
      %979 = vmatprep.subr.mxu0 0.0
      %980 = vmatpush1.msra.mxu0 0.0
      %981 = vmatprep.subr.mxu0 0.0
      %982 = vmatpush1.msra.mxu0 0.0
      %983 = vmatprep.subr.mxu0 0.0
      %984 = vmatpush1.msra.mxu0 0.0
      %985 = vmatprep.subr.mxu0 0.0
      %986 = vmatpush1.msra.mxu0 0.0
      %987 = vmatprep.subr.mxu0 0.0
      %988 = vmatpush1.msra.mxu0 0.0
      %989 = vmatprep.subr.mxu0 0.0
      %990 = vmatpush1.msra.mxu0 0.0
      %991 = vmatprep.subr.mxu0 0.0
      %992 = vmatpush1.msra.mxu0 0.0
      %993 = vmatprep.subr.mxu0 0.0
      %994 = vmatpush1.msra.mxu0 0.0
      %995 = vmatprep.subr.mxu0 0.0
      %996 = vmatpush1.msra.mxu0 0.0
      %997 = vmatprep.subr.mxu0 0.0
      %998 = vmatpush1.msra.mxu0 0.0
      %999 = vmatprep.subr.mxu0 0.0
      %1000 = vmatpush1.msra.mxu0 0.0
      %1001 = vmatprep.subr.mxu0 0.0
      %1002 = vmatpush1.msra.mxu0 0.0
      %1003 = vmatprep.subr.mxu0 0.0
      %1004 = vmatpush1.msra.mxu0 0.0
      %1005 = vmatprep.subr.mxu0 0.0
      %1006 = vmatpush1.msra.mxu0 0.0
      %1007 = vmatprep.subr.mxu0 0.0
      %1008 = vmatpush1.msra.mxu0 0.0
      %1009 = vmatprep.subr.mxu0 0.0
      %1010 = vmatpush1.msra.mxu0 0.0
      %1011 = vmatprep.subr.mxu0 0.0
      %1012 = vmatpush1.msra.mxu0 0.0
      %1013 = vmatprep.subr.mxu0 0.0
      %1014 = vmatpush1.msra.mxu0 0.0
      %1015 = vmatprep.subr.mxu0 0.0
      %1016 = vmatpush1.msra.mxu0 0.0
      %1017 = vmatprep.subr.mxu0 0.0
      %1018 = vmatpush1.msra.mxu0 0.0
      %1019 = vmatprep.subr.mxu0 0.0
      %1020 = vmatpush1.msra.mxu0 0.0
      %1021 = vmatprep.subr.mxu0 0.0
      %1022 = vmatpush1.msra.mxu0 0.0
      %1023 = vmatprep.subr.mxu0 0.0
      %1024 = vmatpush1.msra.mxu0 0.0
      %1025 = vmatprep.subr.mxu0 0.0
      %1026 = vmatpush1.msra.mxu0 0.0
      %1027 = vmatprep.subr.mxu0 0.0
      %1028 = vmatpush1.msra.mxu0 0.0
      %1029 = vmatprep.subr.mxu0 0.0
      %1030 = vmatpush1.msra.mxu0 0.0
      %1031 = vmatprep.subr.mxu0 0.0
      %1032 = vmatpush1.msra.mxu0 0.0
      %1033 = vmatprep.subr.mxu0 0.0
      %1034 = vmatpush1.msra.mxu0 0.0
      %1035 = vmatprep.subr.mxu0 0.0
      %1036 = vmatpush1.msra.mxu0 0.0
      %1037 = vmatprep.subr.mxu0 0.0
      %1038 = vmatpush1.msra.mxu0 0.0
      %1039 = vmatprep.mubr.f32.mxu0 0.0
      %1040 = vmatmul.mubr.f32.gmra.mrb[0].mxu0 %v973
      %v1041 = vpop.f32.mrb[0].mxu0
      %v1042 = vadd.f32 0.0, %v1041
      %v1043 = vpop.f32.mrb[0].mxu0
      %1044 = vdwg.mxu0
      %v1045 = vadd.f32 %v727, %v301
      %v1046 = vadd.f32 %v832, %v301
      %v1047 = vadd.f32 %v937, %v301
      %v1048 = vadd.f32 %v1042, %v301
      %v1049 = vsel %vm342, %v1045, -inf
      %1050 = vmax.xlane.f32.xlu0 %v1049
      %v1051 = vpop.xlane.xlu0 %1050
      %v1052 = vsel %vm342, %v1046, -inf
      %1053 = vmax.xlane.f32.xlu0 %v1052
      %v1054 = vpop.xlane.xlu0 %1053
      %v1055 = vsel %vm342, %v1047, -inf
      %1056 = vmax.xlane.f32.xlu0 %v1055
      %v1057 = vpop.xlane.xlu0 %1056
      %v1058 = vsel %vm342, %v1048, -inf
      %1059 = vmax.xlane.f32.xlu0 %v1058
      %v1060 = vpop.xlane.xlu0 %1059
      %v1061 = vsub.f32 %v1045, %v1051
      %v1062 = vsub.f32 %v1046, %v1054
      %v1063 = vsub.f32 %v1047, %v1057
      %v1064 = vsub.f32 %v1048, %v1060
      %v1065 = vmul.f32 %v1061, 1.442695
      %v1066 = vpow.pop %v1065
      %v1067 = vmul.f32 %v1062, 1.442695
      %v1068 = vpow.pop %v1067
      %v1069 = vmul.f32 %v1063, 1.442695
      %v1070 = vpow.pop %v1069
      %v1071 = vmul.f32 %v1064, 1.442695
      %v1072 = vpow.pop %v1071
      %v1073 = vsel %vm342, %v1066, 0.0
      %1074 = vadd.xlane.f32.xlu0 %v1073
      %v1075 = vpop.xlane.xlu0 %1074
      %v1076 = vsel %vm342, %v1068, 0.0
      %1077 = vadd.xlane.f32.xlu0 %v1076
      %v1078 = vpop.xlane.xlu0 %1077
      %v1079 = vsel %vm342, %v1070, 0.0
      %1080 = vadd.xlane.f32.xlu0 %v1079
      %v1081 = vpop.xlane.xlu0 %1080
      %v1082 = vsel %vm342, %v1072, 0.0
      %1083 = vadd.xlane.f32.xlu0 %v1082
      %v1084 = vpop.xlane.xlu0 %1083
      %v1085 = vrcp.pop %v1075
      %v1086 = vrcp.pop %v1078
      %v1087 = vrcp.pop %v1081
      %v1088 = vrcp.pop %v1084
      %v1089 = vmul.f32 %v1066, %v1085
      %v1090 = vmul.f32 %v1068, %v1086
      %v1091 = vmul.f32 %v1070, %v1087
      %v1092 = vmul.f32 %v1072, %v1088
      %v1093 = vpack.c.bf16 %v611, %v611
      %v1094 = vpack.c.bf16 %v1089, %v1089
      %v1096 = vsel %vm342, %v1093, 0
      %v1099 = vsel %vm342, %v1094, 0
      %1101 = vmatprep.subr.bf16.mxu0 0
      %1102 = vmatpush1.bf16.xpose.msra.mxu0 %v1099
      %1103 = vmatprep.subr.bf16.mxu0 0
      %1104 = vmatpush1.bf16.xpose.msra.mxu0 0
      %1105 = vmatprep.subr.bf16.mxu0 0
      %1106 = vmatpush1.bf16.xpose.msra.mxu0 0
      %1107 = vmatprep.subr.bf16.mxu0 0
      %1108 = vmatpush1.bf16.xpose.msra.mxu0 0
      %1109 = vmatprep.subr.bf16.mxu0 0
      %1110 = vmatpush1.bf16.xpose.msra.mxu0 0
      %1111 = vmatprep.subr.bf16.mxu0 0
      %1112 = vmatpush1.bf16.xpose.msra.mxu0 0
      %1113 = vmatprep.subr.bf16.mxu0 0
      %1114 = vmatpush1.bf16.xpose.msra.mxu0 0
      %1115 = vmatprep.subr.bf16.mxu0 0
      %1116 = vmatpush1.bf16.xpose.msra.mxu0 0
      %1117 = vmatprep.subr.bf16.mxu0 0
      %1118 = vmatpush1.bf16.xpose.msra.mxu0 0
      %1119 = vmatprep.subr.bf16.mxu0 0
      %1120 = vmatpush1.bf16.xpose.msra.mxu0 0
      %1121 = vmatprep.subr.bf16.mxu0 0
      %1122 = vmatpush1.bf16.xpose.msra.mxu0 0
      %1123 = vmatprep.subr.bf16.mxu0 0
      %1124 = vmatpush1.bf16.xpose.msra.mxu0 0
      %1125 = vmatprep.subr.bf16.mxu0 0
      %1126 = vmatpush1.bf16.xpose.msra.mxu0 0
      %1127 = vmatprep.subr.bf16.mxu0 0
      %1128 = vmatpush1.bf16.xpose.msra.mxu0 0
      %1129 = vmatprep.subr.bf16.mxu0 0
      %1130 = vmatpush1.bf16.xpose.msra.mxu0 0
      %1131 = vmatprep.subr.bf16.mxu0 0
      %1132 = vmatpush1.bf16.xpose.msra.mxu0 0
      %1133 = vmatprep.mubr.bf16.mxu0 0
      %1134 = vmatmul.mubr.bf16.gmra.mrb[0].mxu0 %v1096
      %v1135 = vpop.f32.mrb[0].mxu0
      %v1136 = vadd.f32 0.0, %v1135
      %v1137 = vpop.f32.mrb[0].mxu0
      %v1138 = vpop.f32.mrb[0].mxu0
      %v1139 = vpop.f32.mrb[0].mxu0
      %1140 = vdwg.mxu0
      %v1141 = vpack.c.bf16 %v614, %v614
      %v1142 = vpack.c.bf16 %v1090, %v1090
      %v1144 = vsel %vm342, %v1141, 0
      %v1147 = vsel %vm342, %v1142, 0
      %1149 = vmatprep.subr.bf16.mxu0 0
      %1150 = vmatpush1.bf16.xpose.msra.mxu0 %v1147
      %1151 = vmatprep.subr.bf16.mxu0 0
      %1152 = vmatpush1.bf16.xpose.msra.mxu0 0
      %1153 = vmatprep.subr.bf16.mxu0 0
      %1154 = vmatpush1.bf16.xpose.msra.mxu0 0
      %1155 = vmatprep.subr.bf16.mxu0 0
      %1156 = vmatpush1.bf16.xpose.msra.mxu0 0
      %1157 = vmatprep.subr.bf16.mxu0 0
      %1158 = vmatpush1.bf16.xpose.msra.mxu0 0
      %1159 = vmatprep.subr.bf16.mxu0 0
      %1160 = vmatpush1.bf16.xpose.msra.mxu0 0
      %1161 = vmatprep.subr.bf16.mxu0 0
      %1162 = vmatpush1.bf16.xpose.msra.mxu0 0
      %1163 = vmatprep.subr.bf16.mxu0 0
      %1164 = vmatpush1.bf16.xpose.msra.mxu0 0
      %1165 = vmatprep.subr.bf16.mxu0 0
      %1166 = vmatpush1.bf16.xpose.msra.mxu0 0
      %1167 = vmatprep.subr.bf16.mxu0 0
      %1168 = vmatpush1.bf16.xpose.msra.mxu0 0
      %1169 = vmatprep.subr.bf16.mxu0 0
      %1170 = vmatpush1.bf16.xpose.msra.mxu0 0
      %1171 = vmatprep.subr.bf16.mxu0 0
      %1172 = vmatpush1.bf16.xpose.msra.mxu0 0
      %1173 = vmatprep.subr.bf16.mxu0 0
      %1174 = vmatpush1.bf16.xpose.msra.mxu0 0
      %1175 = vmatprep.subr.bf16.mxu0 0
      %1176 = vmatpush1.bf16.xpose.msra.mxu0 0
      %1177 = vmatprep.subr.bf16.mxu0 0
      %1178 = vmatpush1.bf16.xpose.msra.mxu0 0
      %1179 = vmatprep.subr.bf16.mxu0 0
      %1180 = vmatpush1.bf16.xpose.msra.mxu0 0
      %1181 = vmatprep.mubr.bf16.mxu0 0
      %1182 = vmatmul.mubr.bf16.gmra.mrb[0].mxu0 %v1144
      %v1183 = vpop.f32.mrb[0].mxu0
      %v1184 = vadd.f32 0.0, %v1183
      %v1185 = vpop.f32.mrb[0].mxu0
      %v1186 = vpop.f32.mrb[0].mxu0
      %v1187 = vpop.f32.mrb[0].mxu0
      %1188 = vdwg.mxu0
      %v1189 = vpack.c.bf16 %v619, %v619
      %v1190 = vpack.c.bf16 %v1091, %v1091
      %v1192 = vsel %vm342, %v1189, 0
      %v1195 = vsel %vm342, %v1190, 0
      %1197 = vmatprep.subr.bf16.mxu0 0
      %1198 = vmatpush1.bf16.xpose.msra.mxu0 %v1195
      %1199 = vmatprep.subr.bf16.mxu0 0
      %1200 = vmatpush1.bf16.xpose.msra.mxu0 0
      %1201 = vmatprep.subr.bf16.mxu0 0
      %1202 = vmatpush1.bf16.xpose.msra.mxu0 0
      %1203 = vmatprep.subr.bf16.mxu0 0
      %1204 = vmatpush1.bf16.xpose.msra.mxu0 0
      %1205 = vmatprep.subr.bf16.mxu0 0
      %1206 = vmatpush1.bf16.xpose.msra.mxu0 0
      %1207 = vmatprep.subr.bf16.mxu0 0
      %1208 = vmatpush1.bf16.xpose.msra.mxu0 0
      %1209 = vmatprep.subr.bf16.mxu0 0
      %1210 = vmatpush1.bf16.xpose.msra.mxu0 0
      %1211 = vmatprep.subr.bf16.mxu0 0
      %1212 = vmatpush1.bf16.xpose.msra.mxu0 0
      %1213 = vmatprep.subr.bf16.mxu0 0
      %1214 = vmatpush1.bf16.xpose.msra.mxu0 0
      %1215 = vmatprep.subr.bf16.mxu0 0
      %1216 = vmatpush1.bf16.xpose.msra.mxu0 0
      %1217 = vmatprep.subr.bf16.mxu0 0
      %1218 = vmatpush1.bf16.xpose.msra.mxu0 0
      %1219 = vmatprep.subr.bf16.mxu0 0
      %1220 = vmatpush1.bf16.xpose.msra.mxu0 0
      %1221 = vmatprep.subr.bf16.mxu0 0
      %1222 = vmatpush1.bf16.xpose.msra.mxu0 0
      %1223 = vmatprep.subr.bf16.mxu0 0
      %1224 = vmatpush1.bf16.xpose.msra.mxu0 0
      %1225 = vmatprep.subr.bf16.mxu0 0
      %1226 = vmatpush1.bf16.xpose.msra.mxu0 0
      %1227 = vmatprep.subr.bf16.mxu0 0
      %1228 = vmatpush1.bf16.xpose.msra.mxu0 0
      %1229 = vmatprep.mubr.bf16.mxu0 0
      %1230 = vmatmul.mubr.bf16.gmra.mrb[0].mxu0 %v1192
      %v1231 = vpop.f32.mrb[0].mxu0
      %v1232 = vadd.f32 0.0, %v1231
      %v1233 = vpop.f32.mrb[0].mxu0
      %v1234 = vpop.f32.mrb[0].mxu0
      %v1235 = vpop.f32.mrb[0].mxu0
      %1236 = vdwg.mxu0
      %v1237 = vpack.c.bf16 %v622, %v622
      %v1238 = vpack.c.bf16 %v1092, %v1092
      %v1240 = vsel %vm342, %v1237, 0
      %v1243 = vsel %vm342, %v1238, 0
      %1245 = vmatprep.subr.bf16.mxu0 0
      %1246 = vmatpush1.bf16.xpose.msra.mxu0 %v1243
      %1247 = vmatprep.subr.bf16.mxu0 0
      %1248 = vmatpush1.bf16.xpose.msra.mxu0 0
      %1249 = vmatprep.subr.bf16.mxu0 0
      %1250 = vmatpush1.bf16.xpose.msra.mxu0 0
      %1251 = vmatprep.subr.bf16.mxu0 0
      %1252 = vmatpush1.bf16.xpose.msra.mxu0 0
      %1253 = vmatprep.subr.bf16.mxu0 0
      %1254 = vmatpush1.bf16.xpose.msra.mxu0 0
      %1255 = vmatprep.subr.bf16.mxu0 0
      %1256 = vmatpush1.bf16.xpose.msra.mxu0 0
      %1257 = vmatprep.subr.bf16.mxu0 0
      %1258 = vmatpush1.bf16.xpose.msra.mxu0 0
      %1259 = vmatprep.subr.bf16.mxu0 0
      %1260 = vmatpush1.bf16.xpose.msra.mxu0 0
      %1261 = vmatprep.subr.bf16.mxu0 0
      %1262 = vmatpush1.bf16.xpose.msra.mxu0 0
      %1263 = vmatprep.subr.bf16.mxu0 0
      %1264 = vmatpush1.bf16.xpose.msra.mxu0 0
      %1265 = vmatprep.subr.bf16.mxu0 0
      %1266 = vmatpush1.bf16.xpose.msra.mxu0 0
      %1267 = vmatprep.subr.bf16.mxu0 0
      %1268 = vmatpush1.bf16.xpose.msra.mxu0 0
      %1269 = vmatprep.subr.bf16.mxu0 0
      %1270 = vmatpush1.bf16.xpose.msra.mxu0 0
      %1271 = vmatprep.subr.bf16.mxu0 0
      %1272 = vmatpush1.bf16.xpose.msra.mxu0 0
      %1273 = vmatprep.subr.bf16.mxu0 0
      %1274 = vmatpush1.bf16.xpose.msra.mxu0 0
      %1275 = vmatprep.subr.bf16.mxu0 0
      %1276 = vmatpush1.bf16.xpose.msra.mxu0 0
      %1277 = vmatprep.mubr.bf16.mxu0 0
      %1278 = vmatmul.mubr.bf16.gmra.mrb[0].mxu0 %v1240
      %v1279 = vpop.f32.mrb[0].mxu0
      %v1280 = vadd.f32 0.0, %v1279
      %v1281 = vpop.f32.mrb[0].mxu0
      %v1282 = vpop.f32.mrb[0].mxu0
      %v1283 = vpop.f32.mrb[0].mxu0
      %1284 = vdwg.mxu0
      %v1285 = vpack.c.bf16 %v1184, %v1136
      %v1286 = vpack.c.bf16 %v1280, %v1232
      %v1291 = vunpack.c.l.b16 %v322
      %v1292 = vunpack.c.l.b16 %v323
      %v1293 = vunpack.c.l.b16 %v324
      %v1294 = vunpack.c.l.b16 %v325
      %v1295 = vpack.c.b16 %v1292, %v1291
      %v1296 = vpack.c.b16 %v1294, %v1293
      %v1298 = vsel %vm525, %v1295, 0
      %v1301 = vsel %vm525, %v1296, 0
      %1303 = vmatprep.subr.bf16.mxu0 0
      %1304 = vmatpush1.bf16.msra.mxu0 %v1285
      %1305 = vmatprep.subr.bf16.mxu0 0
      %1306 = vmatpush1.bf16.msra.mxu0 %v1286
      %1307 = vmatprep.subr.bf16.mxu0 0
      %1308 = vmatpush1.bf16.msra.mxu0 0
      %1309 = vmatprep.subr.bf16.mxu0 0
      %1310 = vmatpush1.bf16.msra.mxu0 0
      %1311 = vmatprep.subr.bf16.mxu0 0
      %1312 = vmatpush1.bf16.msra.mxu0 0
      %1313 = vmatprep.subr.bf16.mxu0 0
      %1314 = vmatpush1.bf16.msra.mxu0 0
      %1315 = vmatprep.subr.bf16.mxu0 0
      %1316 = vmatpush1.bf16.msra.mxu0 0
      %1317 = vmatprep.subr.bf16.mxu0 0
      %1318 = vmatpush1.bf16.msra.mxu0 0
      %1319 = vmatprep.subr.bf16.mxu0 0
      %1320 = vmatpush1.bf16.msra.mxu0 0
      %1321 = vmatprep.subr.bf16.mxu0 0
      %1322 = vmatpush1.bf16.msra.mxu0 0
      %1323 = vmatprep.subr.bf16.mxu0 0
      %1324 = vmatpush1.bf16.msra.mxu0 0
      %1325 = vmatprep.subr.bf16.mxu0 0
      %1326 = vmatpush1.bf16.msra.mxu0 0
      %1327 = vmatprep.subr.bf16.mxu0 0
      %1328 = vmatpush1.bf16.msra.mxu0 0
      %1329 = vmatprep.subr.bf16.mxu0 0
      %1330 = vmatpush1.bf16.msra.mxu0 0
      %1331 = vmatprep.subr.bf16.mxu0 0
      %1332 = vmatpush1.bf16.msra.mxu0 0
      %1333 = vmatprep.subr.bf16.mxu0 0
      %1334 = vmatpush1.bf16.msra.mxu0 0
      %1335 = vmatprep.mubr.bf16.mxu0 0
      %1336 = vmatmul.mubr.bf16.gmra.mrb[0].mxu0 %v1298
      %v1337 = vpop.f32.mrb[0].mxu0
      %v1338 = vadd.f32 0.0, %v1337
      %v1339 = vpop.f32.mrb[0].mxu0
      %v1340 = vpop.f32.mrb[0].mxu0
      %v1341 = vadd.f32 0.0, %v1340
      %v1342 = vpop.f32.mrb[0].mxu0
      %1343 = vmatprep.mubr.bf16.mxu0 0
      %1344 = vmatmul.mubr.bf16.gmra.mrb[0].mxu0 %v1301
      %v1345 = vpop.f32.mrb[0].mxu0
      %v1346 = vadd.f32 0.0, %v1345
      %v1347 = vpop.f32.mrb[0].mxu0
      %v1348 = vpop.f32.mrb[0].mxu0
      %v1349 = vadd.f32 0.0, %v1348
      %v1350 = vpop.f32.mrb[0].mxu0
      %1351 = vdwg.mxu0
      %v1352 = vadd.f32 %v297, %v1338
      %v1353 = vadd.f32 %v298, %v1341
      %v1354 = vadd.f32 %v299, %v1346
      %v1355 = vadd.f32 %v300, %v1349
      %1356 = vset.pattern.permute.xlu0 6
      %1357 = vperm.xlu0 %1356, %v330
      %v1358 = vpop.permute.xlu0 %1357
      %1360 = vset.pattern.permute.xlu0 6
      %1361 = vperm.xlu0 %1360, %v331
      %v1362 = vpop.permute.xlu0 %1361
      %1364 = vset.pattern.permute.xlu0 6
      %1365 = vperm.xlu0 %1364, %v332
      %v1366 = vpop.permute.xlu0 %1365
      %1368 = vset.pattern.permute.xlu0 6
      %1369 = vperm.xlu0 %1368, %v333
      %v1370 = vpop.permute.xlu0 %1369
      %v1372 = vadd.f32 %v1352, %v1358
      %v1373 = vadd.f32 %v1353, %v1362
      %v1374 = vadd.f32 %v1354, %v1366
      %v1375 = vadd.f32 %v1355, %v1370
      %v1376 = vsel %vm342, %v1372, 0.0
      %v1377 = vsel %vm342, %v1373, 0.0
      %v1378 = vadd.f32 %v1376, %v1377
      %v1379 = vsel %vm342, %v1374, 0.0
      %v1380 = vadd.f32 %v1378, %v1379
      %v1381 = vsel %vm342, %v1375, 0.0
      %v1382 = vadd.f32 %v1380, %v1381
      %v1383 = vrot.slane %v1382, 4
      %v1384 = vadd.f32 %v1382, %v1383
      %v1385 = vrot.slane %v1384, 2
      %v1386 = vadd.f32 %v1384, %v1385
      %v1387 = vrot.slane %v1386, 1
      %v1388 = vadd.f32 %v1386, %v1387
      %v1389 = vmul.f32 %v1388, %v356
      %v1390 = vsub.f32 %v1372, %v1389
      %v1391 = vsub.f32 %v1373, %v1389
      %v1392 = vsub.f32 %v1374, %v1389
      %v1393 = vsub.f32 %v1375, %v1389
      %v1394 = vmul.f32 %v1390, %v1390
      %v1395 = vmul.f32 %v1391, %v1391
      %v1396 = vmul.f32 %v1392, %v1392
      %v1397 = vmul.f32 %v1393, %v1393
      %v1398 = vsel %vm342, %v1394, 0.0
      %v1399 = vsel %vm342, %v1395, 0.0
      %v1400 = vadd.f32 %v1398, %v1399
      %v1401 = vsel %vm342, %v1396, 0.0
      %v1402 = vadd.f32 %v1400, %v1401
      %v1403 = vsel %vm342, %v1397, 0.0
      %v1404 = vadd.f32 %v1402, %v1403
      %v1405 = vrot.slane %v1404, 4
      %v1406 = vadd.f32 %v1404, %v1405
      %v1407 = vrot.slane %v1406, 2
      %v1408 = vadd.f32 %v1406, %v1407
      %v1409 = vrot.slane %v1408, 1
      %v1410 = vadd.f32 %v1408, %v1409
      %v1411 = vmul.f32 %v1410, 0.032258064
      %v1412 = vrsqrt.pop %v1411
      %v1413 = vmul.f32 %v1411, %v1412
      %vm1414 = vcmp.eq.f32.partialorder %v1411, inf
      %v1415 = vsel %vm1414, %v1411, %v1413
      %vm1416 = vcmp.eq.f32.partialorder %v1411, 0.0
      %v1417 = vand.u32 %v1411, 2147483648
      %v1418 = vsel %vm1416, %v1417, %v1415
      %1419 = vset.pattern.permute.xlu0 4
      %1420 = vperm.xlu0 %1419, %v330
      %v1421 = vpop.permute.xlu0 %1420
      %1423 = vset.pattern.permute.xlu0 4
      %1424 = vperm.xlu0 %1423, %v331
      %v1425 = vpop.permute.xlu0 %1424
      %1427 = vset.pattern.permute.xlu0 4
      %1428 = vperm.xlu0 %1427, %v332
      %v1429 = vpop.permute.xlu0 %1428
      %1431 = vset.pattern.permute.xlu0 4
      %1432 = vperm.xlu0 %1431, %v333
      %v1433 = vpop.permute.xlu0 %1432
      %v1435 = vmul.f32 %v1421, %v1390
      %v1436 = vmul.f32 %v1425, %v1391
      %v1437 = vmul.f32 %v1429, %v1392
      %v1438 = vmul.f32 %v1433, %v1393
      %v1439 = vadd.f32 %v1418, 1e-06
      %v1440 = vrcp.pop %v1439
      %v1441 = vmul.f32 %v1435, %v1440
      %v1442 = vmul.f32 %v1436, %v1440
      %v1443 = vmul.f32 %v1437, %v1440
      %v1444 = vmul.f32 %v1438, %v1440
      %1445 = vset.pattern.permute.xlu0 5
      %1446 = vperm.xlu0 %1445, %v330
      %v1447 = vpop.permute.xlu0 %1446
      %1449 = vset.pattern.permute.xlu0 5
      %1450 = vperm.xlu0 %1449, %v331
      %v1451 = vpop.permute.xlu0 %1450
      %1453 = vset.pattern.permute.xlu0 5
      %1454 = vperm.xlu0 %1453, %v332
      %v1455 = vpop.permute.xlu0 %1454
      %1457 = vset.pattern.permute.xlu0 5
      %1458 = vperm.xlu0 %1457, %v333
      %v1459 = vpop.permute.xlu0 %1458
      %v1461 = vadd.f32 %v1441, %v1447
      %v1462 = vadd.f32 %v1442, %v1451
      %v1463 = vadd.f32 %v1443, %v1455
      %v1464 = vadd.f32 %v1444, %v1459
      %v1465 = vpack.c.bf16 %v1462, %v1461
      %v1466 = vpack.c.bf16 %v1464, %v1463
      %1467 = vset.pattern.permute.xlu0 1
      %1468 = vperm.xlu0 %1467, %v330
      %v1469 = vpop.permute.xlu0 %1468
      %1471 = vset.pattern.permute.xlu0 1
      %1472 = vperm.xlu0 %1471, %v331
      %v1473 = vpop.permute.xlu0 %1472
      %1475 = vset.pattern.permute.xlu0 1
      %1476 = vperm.xlu0 %1475, %v332
      %v1477 = vpop.permute.xlu0 %1476
      %1479 = vset.pattern.permute.xlu0 1
      %1480 = vperm.xlu0 %1479, %v333
      %v1481 = vpop.permute.xlu0 %1480
      %1483 = vset.pattern.permute.xlu0 1
      %1484 = vperm.xlu0 %1483, %v334
      %v1485 = vpop.permute.xlu0 %1484
      %1487 = vset.pattern.permute.xlu0 1
      %1488 = vperm.xlu0 %1487, %v335
      %v1489 = vpop.permute.xlu0 %1488
      %1491 = vset.pattern.permute.xlu0 1
      %1492 = vperm.xlu0 %1491, %v336
      %v1493 = vpop.permute.xlu0 %1492
      %1495 = vset.pattern.permute.xlu0 1
      %1496 = vperm.xlu0 %1495, %v337
      %v1497 = vpop.permute.xlu0 %1496
      %v1507 = vunpack.c.l.b16 %v314
      %v1508 = vunpack.c.l.b16 %v315
      %v1509 = vunpack.c.l.b16 %v316
      %v1510 = vunpack.c.l.b16 %v317
      %v1511 = vunpack.c.l.b16 %v318
      %v1512 = vunpack.c.l.b16 %v319
      %v1513 = vunpack.c.l.b16 %v320
      %v1514 = vunpack.c.l.b16 %v321
      %v1515 = vpack.c.b16 %v1508, %v1507
      %v1516 = vpack.c.b16 %v1510, %v1509
      %v1517 = vpack.c.b16 %v1512, %v1511
      %v1518 = vpack.c.b16 %v1514, %v1513
      %v1520 = vsel %vm525, %v1515, 0
      %v1523 = vsel %vm525, %v1516, 0
      %v1526 = vsel %vm525, %v1517, 0
      %v1529 = vsel %vm525, %v1518, 0
      %1531 = vmatprep.subr.bf16.mxu0 0
      %1532 = vmatpush1.bf16.msra.mxu0 %v1465
      %1533 = vmatprep.subr.bf16.mxu0 0
      %1534 = vmatpush1.bf16.msra.mxu0 %v1466
      %1535 = vmatprep.subr.bf16.mxu0 0
      %1536 = vmatpush1.bf16.msra.mxu0 0
      %1537 = vmatprep.subr.bf16.mxu0 0
      %1538 = vmatpush1.bf16.msra.mxu0 0
      %1539 = vmatprep.subr.bf16.mxu0 0
      %1540 = vmatpush1.bf16.msra.mxu0 0
      %1541 = vmatprep.subr.bf16.mxu0 0
      %1542 = vmatpush1.bf16.msra.mxu0 0
      %1543 = vmatprep.subr.bf16.mxu0 0
      %1544 = vmatpush1.bf16.msra.mxu0 0
      %1545 = vmatprep.subr.bf16.mxu0 0
      %1546 = vmatpush1.bf16.msra.mxu0 0
      %1547 = vmatprep.subr.bf16.mxu0 0
      %1548 = vmatpush1.bf16.msra.mxu0 0
      %1549 = vmatprep.subr.bf16.mxu0 0
      %1550 = vmatpush1.bf16.msra.mxu0 0
      %1551 = vmatprep.subr.bf16.mxu0 0
      %1552 = vmatpush1.bf16.msra.mxu0 0
      %1553 = vmatprep.subr.bf16.mxu0 0
      %1554 = vmatpush1.bf16.msra.mxu0 0
      %1555 = vmatprep.subr.bf16.mxu0 0
      %1556 = vmatpush1.bf16.msra.mxu0 0
      %1557 = vmatprep.subr.bf16.mxu0 0
      %1558 = vmatpush1.bf16.msra.mxu0 0
      %1559 = vmatprep.subr.bf16.mxu0 0
      %1560 = vmatpush1.bf16.msra.mxu0 0
      %1561 = vmatprep.subr.bf16.mxu0 0
      %1562 = vmatpush1.bf16.msra.mxu0 0
      %1563 = vmatprep.mubr.bf16.mxu0 0
      %1564 = vmatmul.mubr.bf16.gmra.mrb[0].mxu0 %v1520
      %v1565 = vpop.f32.mrb[0].mxu0
      %v1566 = vadd.f32 %v1469, %v1565
      %v1567 = vpop.f32.mrb[0].mxu0
      %v1568 = vpop.f32.mrb[0].mxu0
      %v1569 = vadd.f32 %v1473, %v1568
      %v1570 = vpop.f32.mrb[0].mxu0
      %1571 = vmatprep.mubr.bf16.mxu0 0
      %1572 = vmatmul.mubr.bf16.gmra.mrb[0].mxu0 %v1523
      %v1573 = vpop.f32.mrb[0].mxu0
      %v1574 = vadd.f32 %v1477, %v1573
      %v1575 = vpop.f32.mrb[0].mxu0
      %v1576 = vpop.f32.mrb[0].mxu0
      %v1577 = vadd.f32 %v1481, %v1576
      %v1578 = vpop.f32.mrb[0].mxu0
      %1579 = vmatprep.mubr.bf16.mxu0 0
      %1580 = vmatmul.mubr.bf16.gmra.mrb[0].mxu0 %v1526
      %v1581 = vpop.f32.mrb[0].mxu0
      %v1582 = vadd.f32 %v1485, %v1581
      %v1583 = vpop.f32.mrb[0].mxu0
      %v1584 = vpop.f32.mrb[0].mxu0
      %v1585 = vadd.f32 %v1489, %v1584
      %v1586 = vpop.f32.mrb[0].mxu0
      %1587 = vmatprep.mubr.bf16.mxu0 0
      %1588 = vmatmul.mubr.bf16.gmra.mrb[0].mxu0 %v1529
      %v1589 = vpop.f32.mrb[0].mxu0
      %v1590 = vadd.f32 %v1493, %v1589
      %v1591 = vpop.f32.mrb[0].mxu0
      %v1592 = vpop.f32.mrb[0].mxu0
      %v1593 = vadd.f32 %v1497, %v1592
      %v1594 = vpop.f32.mrb[0].mxu0
      %1595 = vdwg.mxu0
      %v1596 = vmax.f32 %v1566, 0.0
      %v1597 = vmax.f32 %v1569, 0.0
      %v1598 = vmax.f32 %v1574, 0.0
      %v1599 = vmax.f32 %v1577, 0.0
      %v1600 = vmax.f32 %v1582, 0.0
      %v1601 = vmax.f32 %v1585, 0.0
      %v1602 = vmax.f32 %v1590, 0.0
      %v1603 = vmax.f32 %v1593, 0.0
      %v1604 = vpack.c.bf16 %v1597, %v1596
      %v1605 = vpack.c.bf16 %v1599, %v1598
      %v1606 = vpack.c.bf16 %v1601, %v1600
      %v1607 = vpack.c.bf16 %v1603, %v1602
      %v1612 = vunpack.c.l.b16 %v326
      %v1613 = vunpack.c.l.b16 %v327
      %v1614 = vunpack.c.l.b16 %v328
      %v1615 = vunpack.c.l.b16 %v329
      %v1616 = vpack.c.b16 %v1613, %v1612
      %v1617 = vpack.c.b16 %v1615, %v1614
      %vm1618 = vcmask 523264
      %v1620 = vsel %vm1618, %v1616, 0
      %v1623 = vsel %vm1618, %v1617, 0
      %1625 = vmatprep.subr.bf16.mxu0 0
      %1626 = vmatpush1.bf16.msra.mxu0 %v1604
      %1627 = vmatprep.subr.bf16.mxu0 0
      %1628 = vmatpush1.bf16.msra.mxu0 %v1605
      %1629 = vmatprep.subr.bf16.mxu0 0
      %1630 = vmatpush1.bf16.msra.mxu0 %v1606
      %1631 = vmatprep.subr.bf16.mxu0 0
      %1632 = vmatpush1.bf16.msra.mxu0 %v1607
      %1633 = vmatprep.subr.bf16.mxu0 0
      %1634 = vmatpush1.bf16.msra.mxu0 0
      %1635 = vmatprep.subr.bf16.mxu0 0
      %1636 = vmatpush1.bf16.msra.mxu0 0
      %1637 = vmatprep.subr.bf16.mxu0 0
      %1638 = vmatpush1.bf16.msra.mxu0 0
      %1639 = vmatprep.subr.bf16.mxu0 0
      %1640 = vmatpush1.bf16.msra.mxu0 0
      %1641 = vmatprep.subr.bf16.mxu0 0
      %1642 = vmatpush1.bf16.msra.mxu0 0
      %1643 = vmatprep.subr.bf16.mxu0 0
      %1644 = vmatpush1.bf16.msra.mxu0 0
      %1645 = vmatprep.subr.bf16.mxu0 0
      %1646 = vmatpush1.bf16.msra.mxu0 0
      %1647 = vmatprep.subr.bf16.mxu0 0
      %1648 = vmatpush1.bf16.msra.mxu0 0
      %1649 = vmatprep.subr.bf16.mxu0 0
      %1650 = vmatpush1.bf16.msra.mxu0 0
      %1651 = vmatprep.subr.bf16.mxu0 0
      %1652 = vmatpush1.bf16.msra.mxu0 0
      %1653 = vmatprep.subr.bf16.mxu0 0
      %1654 = vmatpush1.bf16.msra.mxu0 0
      %1655 = vmatprep.subr.bf16.mxu0 0
      %1656 = vmatpush1.bf16.msra.mxu0 0
      %1657 = vmatprep.mubr.bf16.mxu0 0
      %1658 = vmatmul.mubr.bf16.gmra.mrb[0].mxu0 %v1620
      %v1659 = vpop.f32.mrb[0].mxu0
      %v1660 = vadd.f32 0.0, %v1659
      %v1661 = vpop.f32.mrb[0].mxu0
      %v1662 = vpop.f32.mrb[0].mxu0
      %v1663 = vadd.f32 0.0, %v1662
      %v1664 = vpop.f32.mrb[0].mxu0
      %1665 = vmatprep.mubr.bf16.mxu0 0
      %1666 = vmatmul.mubr.bf16.gmra.mrb[0].mxu0 %v1623
      %v1667 = vpop.f32.mrb[0].mxu0
      %v1668 = vadd.f32 0.0, %v1667
      %v1669 = vpop.f32.mrb[0].mxu0
      %v1670 = vpop.f32.mrb[0].mxu0
      %v1671 = vadd.f32 0.0, %v1670
      %v1672 = vpop.f32.mrb[0].mxu0
      %1673 = vdwg.mxu0
      %v1674 = vadd.f32 %v1372, %v1660
      %v1675 = vadd.f32 %v1373, %v1663
      %v1676 = vadd.f32 %v1374, %v1668
      %v1677 = vadd.f32 %v1375, %v1671
      %1678 = vset.pattern.permute.xlu0 7
      %1679 = vperm.xlu0 %1678, %v330
      %v1680 = vpop.permute.xlu0 %1679
      %1682 = vset.pattern.permute.xlu0 7
      %1683 = vperm.xlu0 %1682, %v331
      %v1684 = vpop.permute.xlu0 %1683
      %1686 = vset.pattern.permute.xlu0 7
      %1687 = vperm.xlu0 %1686, %v332
      %v1688 = vpop.permute.xlu0 %1687
      %1690 = vset.pattern.permute.xlu0 7
      %1691 = vperm.xlu0 %1690, %v333
      %v1692 = vpop.permute.xlu0 %1691
      %v1694 = vadd.f32 %v1674, %v1680
      %v1695 = vadd.f32 %v1675, %v1684
      %v1696 = vadd.f32 %v1676, %v1688
      %v1697 = vadd.f32 %v1677, %v1692
      %s1698 = scalar_lea.vmem %s2, 48
      %v1699 = vld [vmem:[%s1698] sm:$0xf]
      %v1700 = vld [vmem:[%s1698 + $0x4] sm:$0xf]
      %v1701 = vld [vmem:[%s1698 + $0x8] sm:$0xf]
      %v1702 = vld [vmem:[%s1698 + $0xc] sm:$0xf]
      %v1703 = vld [vmem:[%s1698 + $0x10] sm:$0xf]
      %v1704 = vld [vmem:[%s1698 + $0x14] sm:$0xf]
      %v1705 = vld [vmem:[%s1698 + $0x18] sm:$0xf]
      %v1706 = vld [vmem:[%s1698 + $0x1c] sm:$0xf]
      %v1707 = vld [vmem:[%s1698 + $0x20] sm:$0xf]
      %v1708 = vld [vmem:[%s1698 + $0x24] sm:$0xf]
      %v1709 = vld [vmem:[%s1698 + $0x28] sm:$0xf]
      %v1710 = vld [vmem:[%s1698 + $0x2c] sm:$0xf]
      %s1711 = scalar_lea.vmem %s3, 32
      %v1712 = vld [vmem:[%s1711] sm:$0xf]
      %v1713 = vld [vmem:[%s1711 + $0x4] sm:$0xf]
      %v1714 = vld [vmem:[%s1711 + $0x8] sm:$0xf]
      %v1715 = vld [vmem:[%s1711 + $0xc] sm:$0xf]
      %v1716 = vld [vmem:[%s1711 + $0x10] sm:$0xf]
      %v1717 = vld [vmem:[%s1711 + $0x14] sm:$0xf]
      %v1718 = vld [vmem:[%s1711 + $0x18] sm:$0xf]
      %v1719 = vld [vmem:[%s1711 + $0x1c] sm:$0xf]
      %s1720 = scalar_lea.vmem %s4, 16
      %v1721 = vld [vmem:[%s1720] sm:$0xf]
      %v1722 = vld [vmem:[%s1720 + $0x4] sm:$0xf]
      %v1723 = vld [vmem:[%s1720 + $0x8] sm:$0xf]
      %v1724 = vld [vmem:[%s1720 + $0xc] sm:$0xf]
      %s1725 = scalar_lea.vmem %s5, 16
      %v1726 = vld [vmem:[%s1725] sm:$0xf]
      %v1727 = vld [vmem:[%s1725 + $0x4] sm:$0xf]
      %v1728 = vld [vmem:[%s1725 + $0x8] sm:$0xf]
      %v1729 = vld [vmem:[%s1725 + $0xc] sm:$0xf]
      %s1730 = scalar_lea.vmem %s6, 96
      %v1731 = vld [vmem:[%s1730] sm:$0xff]
      %v1732 = vld [vmem:[%s1730 + $0x8] sm:$0xff]
      %v1733 = vld [vmem:[%s1730 + $0x10] sm:$0xff]
      %v1734 = vld [vmem:[%s1730 + $0x18] sm:$0xff]
      %v1735 = vld [vmem:[%s1730 + $0x20] sm:$0xff]
      %v1736 = vld [vmem:[%s1730 + $0x28] sm:$0xff]
      %v1737 = vld [vmem:[%s1730 + $0x30] sm:$0xff]
      %v1738 = vld [vmem:[%s1730 + $0x38] sm:$0xff]
      %v1739 = vld [vmem:[%s1730 + $0x40] sm:$0xff]
      %v1740 = vld [vmem:[%s1730 + $0x48] sm:$0xff]
      %v1741 = vld [vmem:[%s1730 + $0x50] sm:$0xff]
      %v1742 = vld [vmem:[%s1730 + $0x58] sm:$0xff]
      %v1743 = vsel %vm342, %v1694, 0.0
      %v1744 = vsel %vm342, %v1695, 0.0
      %v1745 = vadd.f32 %v1743, %v1744
      %v1746 = vsel %vm342, %v1696, 0.0
      %v1747 = vadd.f32 %v1745, %v1746
      %v1748 = vsel %vm342, %v1697, 0.0
      %v1749 = vadd.f32 %v1747, %v1748
      %v1750 = vrot.slane %v1749, 4
      %v1751 = vadd.f32 %v1749, %v1750
      %v1752 = vrot.slane %v1751, 2
      %v1753 = vadd.f32 %v1751, %v1752
      %v1754 = vrot.slane %v1753, 1
      %v1755 = vadd.f32 %v1753, %v1754
      %v1756 = vmul.f32 %v1755, %v356
      %v1757 = vsub.f32 %v1694, %v1756
      %v1758 = vsub.f32 %v1695, %v1756
      %v1759 = vsub.f32 %v1696, %v1756
      %v1760 = vsub.f32 %v1697, %v1756
      %v1761 = vmul.f32 %v1757, %v1757
      %v1762 = vmul.f32 %v1758, %v1758
      %v1763 = vmul.f32 %v1759, %v1759
      %v1764 = vmul.f32 %v1760, %v1760
      %v1765 = vsel %vm342, %v1761, 0.0
      %v1766 = vsel %vm342, %v1762, 0.0
      %v1767 = vadd.f32 %v1765, %v1766
      %v1768 = vsel %vm342, %v1763, 0.0
      %v1769 = vadd.f32 %v1767, %v1768
      %v1770 = vsel %vm342, %v1764, 0.0
      %v1771 = vadd.f32 %v1769, %v1770
      %v1772 = vrot.slane %v1771, 4
      %v1773 = vadd.f32 %v1771, %v1772
      %v1774 = vrot.slane %v1773, 2
      %v1775 = vadd.f32 %v1773, %v1774
      %v1776 = vrot.slane %v1775, 1
      %v1777 = vadd.f32 %v1775, %v1776
      %v1778 = vmul.f32 %v1777, 0.032258064
      %v1779 = vrsqrt.pop %v1778
      %v1780 = vmul.f32 %v1778, %v1779
      %vm1781 = vcmp.eq.f32.partialorder %v1778, inf
      %v1782 = vsel %vm1781, %v1778, %v1780
      %vm1783 = vcmp.eq.f32.partialorder %v1778, 0.0
      %v1784 = vand.u32 %v1778, 2147483648
      %v1785 = vsel %vm1783, %v1784, %v1782
      %1787 = vset.pattern.permute.xlu0 2
      %1788 = vperm.xlu0 %1787, %v1731
      %v1789 = vpop.permute.xlu0 %1788
      %1792 = vset.pattern.permute.xlu0 2
      %1793 = vperm.xlu0 %1792, %v1732
      %v1794 = vpop.permute.xlu0 %1793
      %1797 = vset.pattern.permute.xlu0 2
      %1798 = vperm.xlu0 %1797, %v1733
      %v1799 = vpop.permute.xlu0 %1798
      %1802 = vset.pattern.permute.xlu0 2
      %1803 = vperm.xlu0 %1802, %v1734
      %v1804 = vpop.permute.xlu0 %1803
      %v1806 = vmul.f32 %v1789, %v1757
      %v1807 = vmul.f32 %v1794, %v1758
      %v1808 = vmul.f32 %v1799, %v1759
      %v1809 = vmul.f32 %v1804, %v1760
      %v1810 = vadd.f32 %v1785, 1e-06
      %v1811 = vrcp.pop %v1810
      %v1812 = vmul.f32 %v1806, %v1811
      %v1813 = vmul.f32 %v1807, %v1811
      %v1814 = vmul.f32 %v1808, %v1811
      %v1815 = vmul.f32 %v1809, %v1811
      %1816 = vset.pattern.permute.xlu0 3
      %1817 = vperm.xlu0 %1816, %v1731
      %v1818 = vpop.permute.xlu0 %1817
      %1820 = vset.pattern.permute.xlu0 3
      %1821 = vperm.xlu0 %1820, %v1732
      %v1822 = vpop.permute.xlu0 %1821
      %1824 = vset.pattern.permute.xlu0 3
      %1825 = vperm.xlu0 %1824, %v1733
      %v1826 = vpop.permute.xlu0 %1825
      %1828 = vset.pattern.permute.xlu0 3
      %1829 = vperm.xlu0 %1828, %v1734
      %v1830 = vpop.permute.xlu0 %1829
      %v1832 = vadd.f32 %v1812, %v1818
      %v1833 = vadd.f32 %v1813, %v1822
      %v1834 = vadd.f32 %v1814, %v1826
      %v1835 = vadd.f32 %v1815, %v1830
      %v1836 = vpack.c.bf16 %v1833, %v1832
      %v1837 = vpack.c.bf16 %v1835, %v1834
      %1838 = vset.pattern.permute.xlu0 0
      %1839 = vperm.xlu0 %1838, %v1731
      %v1840 = vpop.permute.xlu0 %1839
      %1842 = vset.pattern.permute.xlu0 0
      %1843 = vperm.xlu0 %1842, %v1732
      %v1844 = vpop.permute.xlu0 %1843
      %1846 = vset.pattern.permute.xlu0 0
      %1847 = vperm.xlu0 %1846, %v1733
      %v1848 = vpop.permute.xlu0 %1847
      %1850 = vset.pattern.permute.xlu0 0
      %1851 = vperm.xlu0 %1850, %v1734
      %v1852 = vpop.permute.xlu0 %1851
      %1855 = vset.pattern.permute.xlu0 0
      %1856 = vperm.xlu0 %1855, %v1735
      %v1857 = vpop.permute.xlu0 %1856
      %1860 = vset.pattern.permute.xlu0 0
      %1861 = vperm.xlu0 %1860, %v1736
      %v1862 = vpop.permute.xlu0 %1861
      %1865 = vset.pattern.permute.xlu0 0
      %1866 = vperm.xlu0 %1865, %v1737
      %v1867 = vpop.permute.xlu0 %1866
      %1870 = vset.pattern.permute.xlu0 0
      %1871 = vperm.xlu0 %1870, %v1738
      %v1872 = vpop.permute.xlu0 %1871
      %1875 = vset.pattern.permute.xlu0 0
      %1876 = vperm.xlu0 %1875, %v1739
      %v1877 = vpop.permute.xlu0 %1876
      %1880 = vset.pattern.permute.xlu0 0
      %1881 = vperm.xlu0 %1880, %v1740
      %v1882 = vpop.permute.xlu0 %1881
      %1885 = vset.pattern.permute.xlu0 0
      %1886 = vperm.xlu0 %1885, %v1741
      %v1887 = vpop.permute.xlu0 %1886
      %1890 = vset.pattern.permute.xlu0 0
      %1891 = vperm.xlu0 %1890, %v1742
      %v1892 = vpop.permute.xlu0 %1891
      %v1906 = vunpack.c.l.b16 %v1699
      %v1907 = vunpack.c.l.b16 %v1700
      %v1908 = vunpack.c.l.b16 %v1701
      %v1909 = vunpack.c.l.b16 %v1702
      %v1910 = vunpack.c.l.b16 %v1703
      %v1911 = vunpack.c.l.b16 %v1704
      %v1912 = vunpack.c.l.b16 %v1705
      %v1913 = vunpack.c.l.b16 %v1706
      %v1914 = vunpack.c.l.b16 %v1707
      %v1915 = vunpack.c.l.b16 %v1708
      %v1916 = vunpack.c.l.b16 %v1709
      %v1917 = vunpack.c.l.b16 %v1710
      %v1918 = vpack.c.b16 %v1907, %v1906
      %v1919 = vpack.c.b16 %v1909, %v1908
      %v1920 = vpack.c.b16 %v1911, %v1910
      %v1921 = vpack.c.b16 %v1913, %v1912
      %v1922 = vpack.c.b16 %v1915, %v1914
      %v1923 = vpack.c.b16 %v1917, %v1916
      %v1925 = vsel %vm525, %v1918, 0
      %v1928 = vsel %vm525, %v1919, 0
      %v1931 = vsel %vm525, %v1920, 0
      %v1934 = vsel %vm525, %v1921, 0
      %v1937 = vsel %vm525, %v1922, 0
      %v1940 = vsel %vm525, %v1923, 0
      %1942 = vmatprep.subr.bf16.mxu0 0
      %1943 = vmatpush1.bf16.msra.mxu0 %v1836
      %1944 = vmatprep.subr.bf16.mxu0 0
      %1945 = vmatpush1.bf16.msra.mxu0 %v1837
      %1946 = vmatprep.subr.bf16.mxu0 0
      %1947 = vmatpush1.bf16.msra.mxu0 0
      %1948 = vmatprep.subr.bf16.mxu0 0
      %1949 = vmatpush1.bf16.msra.mxu0 0
      %1950 = vmatprep.subr.bf16.mxu0 0
      %1951 = vmatpush1.bf16.msra.mxu0 0
      %1952 = vmatprep.subr.bf16.mxu0 0
      %1953 = vmatpush1.bf16.msra.mxu0 0
      %1954 = vmatprep.subr.bf16.mxu0 0
      %1955 = vmatpush1.bf16.msra.mxu0 0
      %1956 = vmatprep.subr.bf16.mxu0 0
      %1957 = vmatpush1.bf16.msra.mxu0 0
      %1958 = vmatprep.subr.bf16.mxu0 0
      %1959 = vmatpush1.bf16.msra.mxu0 0
      %1960 = vmatprep.subr.bf16.mxu0 0
      %1961 = vmatpush1.bf16.msra.mxu0 0
      %1962 = vmatprep.subr.bf16.mxu0 0
      %1963 = vmatpush1.bf16.msra.mxu0 0
      %1964 = vmatprep.subr.bf16.mxu0 0
      %1965 = vmatpush1.bf16.msra.mxu0 0
      %1966 = vmatprep.subr.bf16.mxu0 0
      %1967 = vmatpush1.bf16.msra.mxu0 0
      %1968 = vmatprep.subr.bf16.mxu0 0
      %1969 = vmatpush1.bf16.msra.mxu0 0
      %1970 = vmatprep.subr.bf16.mxu0 0
      %1971 = vmatpush1.bf16.msra.mxu0 0
      %1972 = vmatprep.subr.bf16.mxu0 0
      %1973 = vmatpush1.bf16.msra.mxu0 0
      %1974 = vmatprep.mubr.bf16.mxu0 0
      %1975 = vmatmul.mubr.bf16.gmra.mrb[0].mxu0 %v1925
      %v1976 = vpop.f32.mrb[0].mxu0
      %v1977 = vadd.f32 %v1840, %v1976
      %v1978 = vpop.f32.mrb[0].mxu0
      %v1979 = vpop.f32.mrb[0].mxu0
      %v1980 = vadd.f32 %v1844, %v1979
      %v1981 = vpop.f32.mrb[0].mxu0
      %1982 = vmatprep.mubr.bf16.mxu0 0
      %1983 = vmatmul.mubr.bf16.gmra.mrb[0].mxu0 %v1928
      %v1984 = vpop.f32.mrb[0].mxu0
      %v1985 = vadd.f32 %v1848, %v1984
      %v1986 = vpop.f32.mrb[0].mxu0
      %v1987 = vpop.f32.mrb[0].mxu0
      %v1988 = vadd.f32 %v1852, %v1987
      %v1989 = vpop.f32.mrb[0].mxu0
      %1990 = vmatprep.mubr.bf16.mxu0 0
      %1991 = vmatmul.mubr.bf16.gmra.mrb[0].mxu0 %v1931
      %v1992 = vpop.f32.mrb[0].mxu0
      %v1993 = vadd.f32 %v1857, %v1992
      %v1994 = vpop.f32.mrb[0].mxu0
      %v1995 = vpop.f32.mrb[0].mxu0
      %v1996 = vadd.f32 %v1862, %v1995
      %v1997 = vpop.f32.mrb[0].mxu0
      %1998 = vmatprep.mubr.bf16.mxu0 0
      %1999 = vmatmul.mubr.bf16.gmra.mrb[0].mxu0 %v1934
      %v2000 = vpop.f32.mrb[0].mxu0
      %v2001 = vadd.f32 %v1867, %v2000
      %v2002 = vpop.f32.mrb[0].mxu0
      %v2003 = vpop.f32.mrb[0].mxu0
      %v2004 = vadd.f32 %v1872, %v2003
      %v2005 = vpop.f32.mrb[0].mxu0
      %2006 = vmatprep.mubr.bf16.mxu0 0
      %2007 = vmatmul.mubr.bf16.gmra.mrb[0].mxu0 %v1937
      %v2008 = vpop.f32.mrb[0].mxu0
      %v2009 = vadd.f32 %v1877, %v2008
      %v2010 = vpop.f32.mrb[0].mxu0
      %v2011 = vpop.f32.mrb[0].mxu0
      %v2012 = vadd.f32 %v1882, %v2011
      %v2013 = vpop.f32.mrb[0].mxu0
      %2014 = vmatprep.mubr.bf16.mxu0 0
      %2015 = vmatmul.mubr.bf16.gmra.mrb[0].mxu0 %v1940
      %v2016 = vpop.f32.mrb[0].mxu0
      %v2017 = vadd.f32 %v1887, %v2016
      %v2018 = vpop.f32.mrb[0].mxu0
      %v2019 = vpop.f32.mrb[0].mxu0
      %v2020 = vadd.f32 %v1892, %v2019
      %v2021 = vpop.f32.mrb[0].mxu0
      %2022 = vdwg.mxu0
      %2023 = vxpose.xlu0.b32.start [1/16] %v1977, 128
      %2024 = vxpose.xlu0.b32.cont [2/16] 0.0, 128
      %2025 = vxpose.xlu0.b32.cont [3/16] 0.0, 128
      %2026 = vxpose.xlu0.b32.cont [4/16] 0.0, 128
      %2027 = vxpose.xlu0.b32.cont [5/16] 0.0, 128
      %2028 = vxpose.xlu0.b32.cont [6/16] 0.0, 128
      %2029 = vxpose.xlu0.b32.cont [7/16] 0.0, 128
      %2030 = vxpose.xlu0.b32.cont [8/16] 0.0, 128
      %2031 = vxpose.xlu0.b32.cont [9/16] 0.0, 128
      %2032 = vxpose.xlu0.b32.cont [10/16] 0.0, 128
      %2033 = vxpose.xlu0.b32.cont [11/16] 0.0, 128
      %2034 = vxpose.xlu0.b32.cont [12/16] 0.0, 128
      %2035 = vxpose.xlu0.b32.cont [13/16] 0.0, 128
      %2036 = vxpose.xlu0.b32.cont [14/16] 0.0, 128
      %2037 = vxpose.xlu0.b32.cont [15/16] 0.0, 128
      %2038 = vxpose.xlu0.b32.end [16/16] 0.0, 128
      %v2039 = vpop.trf.xlu0
      %v2040 = vpop.trf.xlu0
      %v2041 = vpop.trf.xlu0
      %v2042 = vpop.trf.xlu0
      %v2043 = vpop.trf.xlu0
      %v2044 = vpop.trf.xlu0
      %v2045 = vpop.trf.xlu0
      %v2046 = vpop.trf.xlu0
      %v2047 = vpop.trf.xlu0
      %v2048 = vpop.trf.xlu0
      %v2049 = vpop.trf.xlu0
      %v2050 = vpop.trf.xlu0
      %v2051 = vpop.trf.xlu0
      %v2052 = vpop.trf.xlu0
      %v2053 = vpop.trf.xlu0
      %v2054 = vpop.trf.xlu0
      %v2056 = vsel %vm342, %v2039, 0
      %2058 = vmatprep.subr.mxu0 0.0
      %2059 = vmatpush1.msra.mxu0 %v1993
      %2060 = vmatprep.subr.mxu0 0.0
      %2061 = vmatpush1.msra.mxu0 0.0
      %2062 = vmatprep.subr.mxu0 0.0
      %2063 = vmatpush1.msra.mxu0 0.0
      %2064 = vmatprep.subr.mxu0 0.0
      %2065 = vmatpush1.msra.mxu0 0.0
      %2066 = vmatprep.subr.mxu0 0.0
      %2067 = vmatpush1.msra.mxu0 0.0
      %2068 = vmatprep.subr.mxu0 0.0
      %2069 = vmatpush1.msra.mxu0 0.0
      %2070 = vmatprep.subr.mxu0 0.0
      %2071 = vmatpush1.msra.mxu0 0.0
      %2072 = vmatprep.subr.mxu0 0.0
      %2073 = vmatpush1.msra.mxu0 0.0
      %2074 = vmatprep.subr.mxu0 0.0
      %2075 = vmatpush1.msra.mxu0 0.0
      %2076 = vmatprep.subr.mxu0 0.0
      %2077 = vmatpush1.msra.mxu0 0.0
      %2078 = vmatprep.subr.mxu0 0.0
      %2079 = vmatpush1.msra.mxu0 0.0
      %2080 = vmatprep.subr.mxu0 0.0
      %2081 = vmatpush1.msra.mxu0 0.0
      %2082 = vmatprep.subr.mxu0 0.0
      %2083 = vmatpush1.msra.mxu0 0.0
      %2084 = vmatprep.subr.mxu0 0.0
      %2085 = vmatpush1.msra.mxu0 0.0
      %2086 = vmatprep.subr.mxu0 0.0
      %2087 = vmatpush1.msra.mxu0 0.0
      %2088 = vmatprep.subr.mxu0 0.0
      %2089 = vmatpush1.msra.mxu0 0.0
      %2090 = vmatprep.subr.mxu0 0.0
      %2091 = vmatpush1.msra.mxu0 0.0
      %2092 = vmatprep.subr.mxu0 0.0
      %2093 = vmatpush1.msra.mxu0 0.0
      %2094 = vmatprep.subr.mxu0 0.0
      %2095 = vmatpush1.msra.mxu0 0.0
      %2096 = vmatprep.subr.mxu0 0.0
      %2097 = vmatpush1.msra.mxu0 0.0
      %2098 = vmatprep.subr.mxu0 0.0
      %2099 = vmatpush1.msra.mxu0 0.0
      %2100 = vmatprep.subr.mxu0 0.0
      %2101 = vmatpush1.msra.mxu0 0.0
      %2102 = vmatprep.subr.mxu0 0.0
      %2103 = vmatpush1.msra.mxu0 0.0
      %2104 = vmatprep.subr.mxu0 0.0
      %2105 = vmatpush1.msra.mxu0 0.0
      %2106 = vmatprep.subr.mxu0 0.0
      %2107 = vmatpush1.msra.mxu0 0.0
      %2108 = vmatprep.subr.mxu0 0.0
      %2109 = vmatpush1.msra.mxu0 0.0
      %2110 = vmatprep.subr.mxu0 0.0
      %2111 = vmatpush1.msra.mxu0 0.0
      %2112 = vmatprep.subr.mxu0 0.0
      %2113 = vmatpush1.msra.mxu0 0.0
      %2114 = vmatprep.subr.mxu0 0.0
      %2115 = vmatpush1.msra.mxu0 0.0
      %2116 = vmatprep.subr.mxu0 0.0
      %2117 = vmatpush1.msra.mxu0 0.0
      %2118 = vmatprep.subr.mxu0 0.0
      %2119 = vmatpush1.msra.mxu0 0.0
      %2120 = vmatprep.subr.mxu0 0.0
      %2121 = vmatpush1.msra.mxu0 0.0
      %2122 = vmatprep.mubr.f32.mxu0 0.0
      %2123 = vmatmul.mubr.f32.gmra.mrb[0].mxu0 %v2056
      %v2124 = vpop.f32.mrb[0].mxu0
      %v2125 = vadd.f32 0.0, %v2124
      %v2126 = vpop.f32.mrb[0].mxu0
      %2127 = vdwg.mxu0
      %2128 = vxpose.xlu0.b32.start [1/16] %v1980, 128
      %2129 = vxpose.xlu0.b32.cont [2/16] 0.0, 128
      %2130 = vxpose.xlu0.b32.cont [3/16] 0.0, 128
      %2131 = vxpose.xlu0.b32.cont [4/16] 0.0, 128
      %2132 = vxpose.xlu0.b32.cont [5/16] 0.0, 128
      %2133 = vxpose.xlu0.b32.cont [6/16] 0.0, 128
      %2134 = vxpose.xlu0.b32.cont [7/16] 0.0, 128
      %2135 = vxpose.xlu0.b32.cont [8/16] 0.0, 128
      %2136 = vxpose.xlu0.b32.cont [9/16] 0.0, 128
      %2137 = vxpose.xlu0.b32.cont [10/16] 0.0, 128
      %2138 = vxpose.xlu0.b32.cont [11/16] 0.0, 128
      %2139 = vxpose.xlu0.b32.cont [12/16] 0.0, 128
      %2140 = vxpose.xlu0.b32.cont [13/16] 0.0, 128
      %2141 = vxpose.xlu0.b32.cont [14/16] 0.0, 128
      %2142 = vxpose.xlu0.b32.cont [15/16] 0.0, 128
      %2143 = vxpose.xlu0.b32.end [16/16] 0.0, 128
      %v2144 = vpop.trf.xlu0
      %v2145 = vpop.trf.xlu0
      %v2146 = vpop.trf.xlu0
      %v2147 = vpop.trf.xlu0
      %v2148 = vpop.trf.xlu0
      %v2149 = vpop.trf.xlu0
      %v2150 = vpop.trf.xlu0
      %v2151 = vpop.trf.xlu0
      %v2152 = vpop.trf.xlu0
      %v2153 = vpop.trf.xlu0
      %v2154 = vpop.trf.xlu0
      %v2155 = vpop.trf.xlu0
      %v2156 = vpop.trf.xlu0
      %v2157 = vpop.trf.xlu0
      %v2158 = vpop.trf.xlu0
      %v2159 = vpop.trf.xlu0
      %v2161 = vsel %vm342, %v2144, 0
      %2163 = vmatprep.subr.mxu0 0.0
      %2164 = vmatpush1.msra.mxu0 %v1996
      %2165 = vmatprep.subr.mxu0 0.0
      %2166 = vmatpush1.msra.mxu0 0.0
      %2167 = vmatprep.subr.mxu0 0.0
      %2168 = vmatpush1.msra.mxu0 0.0
      %2169 = vmatprep.subr.mxu0 0.0
      %2170 = vmatpush1.msra.mxu0 0.0
      %2171 = vmatprep.subr.mxu0 0.0
      %2172 = vmatpush1.msra.mxu0 0.0
      %2173 = vmatprep.subr.mxu0 0.0
      %2174 = vmatpush1.msra.mxu0 0.0
      %2175 = vmatprep.subr.mxu0 0.0
      %2176 = vmatpush1.msra.mxu0 0.0
      %2177 = vmatprep.subr.mxu0 0.0
      %2178 = vmatpush1.msra.mxu0 0.0
      %2179 = vmatprep.subr.mxu0 0.0
      %2180 = vmatpush1.msra.mxu0 0.0
      %2181 = vmatprep.subr.mxu0 0.0
      %2182 = vmatpush1.msra.mxu0 0.0
      %2183 = vmatprep.subr.mxu0 0.0
      %2184 = vmatpush1.msra.mxu0 0.0
      %2185 = vmatprep.subr.mxu0 0.0
      %2186 = vmatpush1.msra.mxu0 0.0
      %2187 = vmatprep.subr.mxu0 0.0
      %2188 = vmatpush1.msra.mxu0 0.0
      %2189 = vmatprep.subr.mxu0 0.0
      %2190 = vmatpush1.msra.mxu0 0.0
      %2191 = vmatprep.subr.mxu0 0.0
      %2192 = vmatpush1.msra.mxu0 0.0
      %2193 = vmatprep.subr.mxu0 0.0
      %2194 = vmatpush1.msra.mxu0 0.0
      %2195 = vmatprep.subr.mxu0 0.0
      %2196 = vmatpush1.msra.mxu0 0.0
      %2197 = vmatprep.subr.mxu0 0.0
      %2198 = vmatpush1.msra.mxu0 0.0
      %2199 = vmatprep.subr.mxu0 0.0
      %2200 = vmatpush1.msra.mxu0 0.0
      %2201 = vmatprep.subr.mxu0 0.0
      %2202 = vmatpush1.msra.mxu0 0.0
      %2203 = vmatprep.subr.mxu0 0.0
      %2204 = vmatpush1.msra.mxu0 0.0
      %2205 = vmatprep.subr.mxu0 0.0
      %2206 = vmatpush1.msra.mxu0 0.0
      %2207 = vmatprep.subr.mxu0 0.0
      %2208 = vmatpush1.msra.mxu0 0.0
      %2209 = vmatprep.subr.mxu0 0.0
      %2210 = vmatpush1.msra.mxu0 0.0
      %2211 = vmatprep.subr.mxu0 0.0
      %2212 = vmatpush1.msra.mxu0 0.0
      %2213 = vmatprep.subr.mxu0 0.0
      %2214 = vmatpush1.msra.mxu0 0.0
      %2215 = vmatprep.subr.mxu0 0.0
      %2216 = vmatpush1.msra.mxu0 0.0
      %2217 = vmatprep.subr.mxu0 0.0
      %2218 = vmatpush1.msra.mxu0 0.0
      %2219 = vmatprep.subr.mxu0 0.0
      %2220 = vmatpush1.msra.mxu0 0.0
      %2221 = vmatprep.subr.mxu0 0.0
      %2222 = vmatpush1.msra.mxu0 0.0
      %2223 = vmatprep.subr.mxu0 0.0
      %2224 = vmatpush1.msra.mxu0 0.0
      %2225 = vmatprep.subr.mxu0 0.0
      %2226 = vmatpush1.msra.mxu0 0.0
      %2227 = vmatprep.mubr.f32.mxu0 0.0
      %2228 = vmatmul.mubr.f32.gmra.mrb[0].mxu0 %v2161
      %v2229 = vpop.f32.mrb[0].mxu0
      %v2230 = vadd.f32 0.0, %v2229
      %v2231 = vpop.f32.mrb[0].mxu0
      %2232 = vdwg.mxu0
      %2233 = vxpose.xlu0.b32.start [1/16] %v1985, 128
      %2234 = vxpose.xlu0.b32.cont [2/16] 0.0, 128
      %2235 = vxpose.xlu0.b32.cont [3/16] 0.0, 128
      %2236 = vxpose.xlu0.b32.cont [4/16] 0.0, 128
      %2237 = vxpose.xlu0.b32.cont [5/16] 0.0, 128
      %2238 = vxpose.xlu0.b32.cont [6/16] 0.0, 128
      %2239 = vxpose.xlu0.b32.cont [7/16] 0.0, 128
      %2240 = vxpose.xlu0.b32.cont [8/16] 0.0, 128
      %2241 = vxpose.xlu0.b32.cont [9/16] 0.0, 128
      %2242 = vxpose.xlu0.b32.cont [10/16] 0.0, 128
      %2243 = vxpose.xlu0.b32.cont [11/16] 0.0, 128
      %2244 = vxpose.xlu0.b32.cont [12/16] 0.0, 128
      %2245 = vxpose.xlu0.b32.cont [13/16] 0.0, 128
      %2246 = vxpose.xlu0.b32.cont [14/16] 0.0, 128
      %2247 = vxpose.xlu0.b32.cont [15/16] 0.0, 128
      %2248 = vxpose.xlu0.b32.end [16/16] 0.0, 128
      %v2249 = vpop.trf.xlu0
      %v2250 = vpop.trf.xlu0
      %v2251 = vpop.trf.xlu0
      %v2252 = vpop.trf.xlu0
      %v2253 = vpop.trf.xlu0
      %v2254 = vpop.trf.xlu0
      %v2255 = vpop.trf.xlu0
      %v2256 = vpop.trf.xlu0
      %v2257 = vpop.trf.xlu0
      %v2258 = vpop.trf.xlu0
      %v2259 = vpop.trf.xlu0
      %v2260 = vpop.trf.xlu0
      %v2261 = vpop.trf.xlu0
      %v2262 = vpop.trf.xlu0
      %v2263 = vpop.trf.xlu0
      %v2264 = vpop.trf.xlu0
      %v2266 = vsel %vm342, %v2249, 0
      %2268 = vmatprep.subr.mxu0 0.0
      %2269 = vmatpush1.msra.mxu0 %v2001
      %2270 = vmatprep.subr.mxu0 0.0
      %2271 = vmatpush1.msra.mxu0 0.0
      %2272 = vmatprep.subr.mxu0 0.0
      %2273 = vmatpush1.msra.mxu0 0.0
      %2274 = vmatprep.subr.mxu0 0.0
      %2275 = vmatpush1.msra.mxu0 0.0
      %2276 = vmatprep.subr.mxu0 0.0
      %2277 = vmatpush1.msra.mxu0 0.0
      %2278 = vmatprep.subr.mxu0 0.0
      %2279 = vmatpush1.msra.mxu0 0.0
      %2280 = vmatprep.subr.mxu0 0.0
      %2281 = vmatpush1.msra.mxu0 0.0
      %2282 = vmatprep.subr.mxu0 0.0
      %2283 = vmatpush1.msra.mxu0 0.0
      %2284 = vmatprep.subr.mxu0 0.0
      %2285 = vmatpush1.msra.mxu0 0.0
      %2286 = vmatprep.subr.mxu0 0.0
      %2287 = vmatpush1.msra.mxu0 0.0
      %2288 = vmatprep.subr.mxu0 0.0
      %2289 = vmatpush1.msra.mxu0 0.0
      %2290 = vmatprep.subr.mxu0 0.0
      %2291 = vmatpush1.msra.mxu0 0.0
      %2292 = vmatprep.subr.mxu0 0.0
      %2293 = vmatpush1.msra.mxu0 0.0
      %2294 = vmatprep.subr.mxu0 0.0
      %2295 = vmatpush1.msra.mxu0 0.0
      %2296 = vmatprep.subr.mxu0 0.0
      %2297 = vmatpush1.msra.mxu0 0.0
      %2298 = vmatprep.subr.mxu0 0.0
      %2299 = vmatpush1.msra.mxu0 0.0
      %2300 = vmatprep.subr.mxu0 0.0
      %2301 = vmatpush1.msra.mxu0 0.0
      %2302 = vmatprep.subr.mxu0 0.0
      %2303 = vmatpush1.msra.mxu0 0.0
      %2304 = vmatprep.subr.mxu0 0.0
      %2305 = vmatpush1.msra.mxu0 0.0
      %2306 = vmatprep.subr.mxu0 0.0
      %2307 = vmatpush1.msra.mxu0 0.0
      %2308 = vmatprep.subr.mxu0 0.0
      %2309 = vmatpush1.msra.mxu0 0.0
      %2310 = vmatprep.subr.mxu0 0.0
      %2311 = vmatpush1.msra.mxu0 0.0
      %2312 = vmatprep.subr.mxu0 0.0
      %2313 = vmatpush1.msra.mxu0 0.0
      %2314 = vmatprep.subr.mxu0 0.0
      %2315 = vmatpush1.msra.mxu0 0.0
      %2316 = vmatprep.subr.mxu0 0.0
      %2317 = vmatpush1.msra.mxu0 0.0
      %2318 = vmatprep.subr.mxu0 0.0
      %2319 = vmatpush1.msra.mxu0 0.0
      %2320 = vmatprep.subr.mxu0 0.0
      %2321 = vmatpush1.msra.mxu0 0.0
      %2322 = vmatprep.subr.mxu0 0.0
      %2323 = vmatpush1.msra.mxu0 0.0
      %2324 = vmatprep.subr.mxu0 0.0
      %2325 = vmatpush1.msra.mxu0 0.0
      %2326 = vmatprep.subr.mxu0 0.0
      %2327 = vmatpush1.msra.mxu0 0.0
      %2328 = vmatprep.subr.mxu0 0.0
      %2329 = vmatpush1.msra.mxu0 0.0
      %2330 = vmatprep.subr.mxu0 0.0
      %2331 = vmatpush1.msra.mxu0 0.0
      %2332 = vmatprep.mubr.f32.mxu0 0.0
      %2333 = vmatmul.mubr.f32.gmra.mrb[0].mxu0 %v2266
      %v2334 = vpop.f32.mrb[0].mxu0
      %v2335 = vadd.f32 0.0, %v2334
      %v2336 = vpop.f32.mrb[0].mxu0
      %2337 = vdwg.mxu0
      %2338 = vxpose.xlu0.b32.start [1/16] %v1988, 128
      %2339 = vxpose.xlu0.b32.cont [2/16] 0.0, 128
      %2340 = vxpose.xlu0.b32.cont [3/16] 0.0, 128
      %2341 = vxpose.xlu0.b32.cont [4/16] 0.0, 128
      %2342 = vxpose.xlu0.b32.cont [5/16] 0.0, 128
      %2343 = vxpose.xlu0.b32.cont [6/16] 0.0, 128
      %2344 = vxpose.xlu0.b32.cont [7/16] 0.0, 128
      %2345 = vxpose.xlu0.b32.cont [8/16] 0.0, 128
      %2346 = vxpose.xlu0.b32.cont [9/16] 0.0, 128
      %2347 = vxpose.xlu0.b32.cont [10/16] 0.0, 128
      %2348 = vxpose.xlu0.b32.cont [11/16] 0.0, 128
      %2349 = vxpose.xlu0.b32.cont [12/16] 0.0, 128
      %2350 = vxpose.xlu0.b32.cont [13/16] 0.0, 128
      %2351 = vxpose.xlu0.b32.cont [14/16] 0.0, 128
      %2352 = vxpose.xlu0.b32.cont [15/16] 0.0, 128
      %2353 = vxpose.xlu0.b32.end [16/16] 0.0, 128
      %v2354 = vpop.trf.xlu0
      %v2355 = vpop.trf.xlu0
      %v2356 = vpop.trf.xlu0
      %v2357 = vpop.trf.xlu0
      %v2358 = vpop.trf.xlu0
      %v2359 = vpop.trf.xlu0
      %v2360 = vpop.trf.xlu0
      %v2361 = vpop.trf.xlu0
      %v2362 = vpop.trf.xlu0
      %v2363 = vpop.trf.xlu0
      %v2364 = vpop.trf.xlu0
      %v2365 = vpop.trf.xlu0
      %v2366 = vpop.trf.xlu0
      %v2367 = vpop.trf.xlu0
      %v2368 = vpop.trf.xlu0
      %v2369 = vpop.trf.xlu0
      %v2371 = vsel %vm342, %v2354, 0
      %2373 = vmatprep.subr.mxu0 0.0
      %2374 = vmatpush1.msra.mxu0 %v2004
      %2375 = vmatprep.subr.mxu0 0.0
      %2376 = vmatpush1.msra.mxu0 0.0
      %2377 = vmatprep.subr.mxu0 0.0
      %2378 = vmatpush1.msra.mxu0 0.0
      %2379 = vmatprep.subr.mxu0 0.0
      %2380 = vmatpush1.msra.mxu0 0.0
      %2381 = vmatprep.subr.mxu0 0.0
      %2382 = vmatpush1.msra.mxu0 0.0
      %2383 = vmatprep.subr.mxu0 0.0
      %2384 = vmatpush1.msra.mxu0 0.0
      %2385 = vmatprep.subr.mxu0 0.0
      %2386 = vmatpush1.msra.mxu0 0.0
      %2387 = vmatprep.subr.mxu0 0.0
      %2388 = vmatpush1.msra.mxu0 0.0
      %2389 = vmatprep.subr.mxu0 0.0
      %2390 = vmatpush1.msra.mxu0 0.0
      %2391 = vmatprep.subr.mxu0 0.0
      %2392 = vmatpush1.msra.mxu0 0.0
      %2393 = vmatprep.subr.mxu0 0.0
      %2394 = vmatpush1.msra.mxu0 0.0
      %2395 = vmatprep.subr.mxu0 0.0
      %2396 = vmatpush1.msra.mxu0 0.0
      %2397 = vmatprep.subr.mxu0 0.0
      %2398 = vmatpush1.msra.mxu0 0.0
      %2399 = vmatprep.subr.mxu0 0.0
      %2400 = vmatpush1.msra.mxu0 0.0
      %2401 = vmatprep.subr.mxu0 0.0
      %2402 = vmatpush1.msra.mxu0 0.0
      %2403 = vmatprep.subr.mxu0 0.0
      %2404 = vmatpush1.msra.mxu0 0.0
      %2405 = vmatprep.subr.mxu0 0.0
      %2406 = vmatpush1.msra.mxu0 0.0
      %2407 = vmatprep.subr.mxu0 0.0
      %2408 = vmatpush1.msra.mxu0 0.0
      %2409 = vmatprep.subr.mxu0 0.0
      %2410 = vmatpush1.msra.mxu0 0.0
      %2411 = vmatprep.subr.mxu0 0.0
      %2412 = vmatpush1.msra.mxu0 0.0
      %2413 = vmatprep.subr.mxu0 0.0
      %2414 = vmatpush1.msra.mxu0 0.0
      %2415 = vmatprep.subr.mxu0 0.0
      %2416 = vmatpush1.msra.mxu0 0.0
      %2417 = vmatprep.subr.mxu0 0.0
      %2418 = vmatpush1.msra.mxu0 0.0
      %2419 = vmatprep.subr.mxu0 0.0
      %2420 = vmatpush1.msra.mxu0 0.0
      %2421 = vmatprep.subr.mxu0 0.0
      %2422 = vmatpush1.msra.mxu0 0.0
      %2423 = vmatprep.subr.mxu0 0.0
      %2424 = vmatpush1.msra.mxu0 0.0
      %2425 = vmatprep.subr.mxu0 0.0
      %2426 = vmatpush1.msra.mxu0 0.0
      %2427 = vmatprep.subr.mxu0 0.0
      %2428 = vmatpush1.msra.mxu0 0.0
      %2429 = vmatprep.subr.mxu0 0.0
      %2430 = vmatpush1.msra.mxu0 0.0
      %2431 = vmatprep.subr.mxu0 0.0
      %2432 = vmatpush1.msra.mxu0 0.0
      %2433 = vmatprep.subr.mxu0 0.0
      %2434 = vmatpush1.msra.mxu0 0.0
      %2435 = vmatprep.subr.mxu0 0.0
      %2436 = vmatpush1.msra.mxu0 0.0
      %2437 = vmatprep.mubr.f32.mxu0 0.0
      %2438 = vmatmul.mubr.f32.gmra.mrb[0].mxu0 %v2371
      %v2439 = vpop.f32.mrb[0].mxu0
      %v2440 = vadd.f32 0.0, %v2439
      %v2441 = vpop.f32.mrb[0].mxu0
      %2442 = vdwg.mxu0
      %v2443 = vadd.f32 %v2125, %v301
      %v2444 = vadd.f32 %v2230, %v301
      %v2445 = vadd.f32 %v2335, %v301
      %v2446 = vadd.f32 %v2440, %v301
      %v2447 = vsel %vm342, %v2443, -inf
      %2448 = vmax.xlane.f32.xlu0 %v2447
      %v2449 = vpop.xlane.xlu0 %2448
      %v2450 = vsel %vm342, %v2444, -inf
      %2451 = vmax.xlane.f32.xlu0 %v2450
      %v2452 = vpop.xlane.xlu0 %2451
      %v2453 = vsel %vm342, %v2445, -inf
      %2454 = vmax.xlane.f32.xlu0 %v2453
      %v2455 = vpop.xlane.xlu0 %2454
      %v2456 = vsel %vm342, %v2446, -inf
      %2457 = vmax.xlane.f32.xlu0 %v2456
      %v2458 = vpop.xlane.xlu0 %2457
      %v2459 = vsub.f32 %v2443, %v2449
      %v2460 = vsub.f32 %v2444, %v2452
      %v2461 = vsub.f32 %v2445, %v2455
      %v2462 = vsub.f32 %v2446, %v2458
      %v2463 = vmul.f32 %v2459, 1.442695
      %v2464 = vpow.pop %v2463
      %v2465 = vmul.f32 %v2460, 1.442695
      %v2466 = vpow.pop %v2465
      %v2467 = vmul.f32 %v2461, 1.442695
      %v2468 = vpow.pop %v2467
      %v2469 = vmul.f32 %v2462, 1.442695
      %v2470 = vpow.pop %v2469
      %v2471 = vsel %vm342, %v2464, 0.0
      %2472 = vadd.xlane.f32.xlu0 %v2471
      %v2473 = vpop.xlane.xlu0 %2472
      %v2474 = vsel %vm342, %v2466, 0.0
      %2475 = vadd.xlane.f32.xlu0 %v2474
      %v2476 = vpop.xlane.xlu0 %2475
      %v2477 = vsel %vm342, %v2468, 0.0
      %2478 = vadd.xlane.f32.xlu0 %v2477
      %v2479 = vpop.xlane.xlu0 %2478
      %v2480 = vsel %vm342, %v2470, 0.0
      %2481 = vadd.xlane.f32.xlu0 %v2480
      %v2482 = vpop.xlane.xlu0 %2481
      %v2483 = vrcp.pop %v2473
      %v2484 = vrcp.pop %v2476
      %v2485 = vrcp.pop %v2479
      %v2486 = vrcp.pop %v2482
      %v2487 = vmul.f32 %v2464, %v2483
      %v2488 = vmul.f32 %v2466, %v2484
      %v2489 = vmul.f32 %v2468, %v2485
      %v2490 = vmul.f32 %v2470, %v2486
      %v2491 = vpack.c.bf16 %v2009, %v2009
      %v2492 = vpack.c.bf16 %v2487, %v2487
      %v2494 = vsel %vm342, %v2491, 0
      %v2497 = vsel %vm342, %v2492, 0
      %2499 = vmatprep.subr.bf16.mxu0 0
      %2500 = vmatpush1.bf16.xpose.msra.mxu0 %v2497
      %2501 = vmatprep.subr.bf16.mxu0 0
      %2502 = vmatpush1.bf16.xpose.msra.mxu0 0
      %2503 = vmatprep.subr.bf16.mxu0 0
      %2504 = vmatpush1.bf16.xpose.msra.mxu0 0
      %2505 = vmatprep.subr.bf16.mxu0 0
      %2506 = vmatpush1.bf16.xpose.msra.mxu0 0
      %2507 = vmatprep.subr.bf16.mxu0 0
      %2508 = vmatpush1.bf16.xpose.msra.mxu0 0
      %2509 = vmatprep.subr.bf16.mxu0 0
      %2510 = vmatpush1.bf16.xpose.msra.mxu0 0
      %2511 = vmatprep.subr.bf16.mxu0 0
      %2512 = vmatpush1.bf16.xpose.msra.mxu0 0
      %2513 = vmatprep.subr.bf16.mxu0 0
      %2514 = vmatpush1.bf16.xpose.msra.mxu0 0
      %2515 = vmatprep.subr.bf16.mxu0 0
      %2516 = vmatpush1.bf16.xpose.msra.mxu0 0
      %2517 = vmatprep.subr.bf16.mxu0 0
      %2518 = vmatpush1.bf16.xpose.msra.mxu0 0
      %2519 = vmatprep.subr.bf16.mxu0 0
      %2520 = vmatpush1.bf16.xpose.msra.mxu0 0
      %2521 = vmatprep.subr.bf16.mxu0 0
      %2522 = vmatpush1.bf16.xpose.msra.mxu0 0
      %2523 = vmatprep.subr.bf16.mxu0 0
      %2524 = vmatpush1.bf16.xpose.msra.mxu0 0
      %2525 = vmatprep.subr.bf16.mxu0 0
      %2526 = vmatpush1.bf16.xpose.msra.mxu0 0
      %2527 = vmatprep.subr.bf16.mxu0 0
      %2528 = vmatpush1.bf16.xpose.msra.mxu0 0
      %2529 = vmatprep.subr.bf16.mxu0 0
      %2530 = vmatpush1.bf16.xpose.msra.mxu0 0
      %2531 = vmatprep.mubr.bf16.mxu0 0
      %2532 = vmatmul.mubr.bf16.gmra.mrb[0].mxu0 %v2494
      %v2533 = vpop.f32.mrb[0].mxu0
      %v2534 = vadd.f32 0.0, %v2533
      %v2535 = vpop.f32.mrb[0].mxu0
      %v2536 = vpop.f32.mrb[0].mxu0
      %v2537 = vpop.f32.mrb[0].mxu0
      %2538 = vdwg.mxu0
      %v2539 = vpack.c.bf16 %v2012, %v2012
      %v2540 = vpack.c.bf16 %v2488, %v2488
      %v2542 = vsel %vm342, %v2539, 0
      %v2545 = vsel %vm342, %v2540, 0
      %2547 = vmatprep.subr.bf16.mxu0 0
      %2548 = vmatpush1.bf16.xpose.msra.mxu0 %v2545
      %2549 = vmatprep.subr.bf16.mxu0 0
      %2550 = vmatpush1.bf16.xpose.msra.mxu0 0
      %2551 = vmatprep.subr.bf16.mxu0 0
      %2552 = vmatpush1.bf16.xpose.msra.mxu0 0
      %2553 = vmatprep.subr.bf16.mxu0 0
      %2554 = vmatpush1.bf16.xpose.msra.mxu0 0
      %2555 = vmatprep.subr.bf16.mxu0 0
      %2556 = vmatpush1.bf16.xpose.msra.mxu0 0
      %2557 = vmatprep.subr.bf16.mxu0 0
      %2558 = vmatpush1.bf16.xpose.msra.mxu0 0
      %2559 = vmatprep.subr.bf16.mxu0 0
      %2560 = vmatpush1.bf16.xpose.msra.mxu0 0
      %2561 = vmatprep.subr.bf16.mxu0 0
      %2562 = vmatpush1.bf16.xpose.msra.mxu0 0
      %2563 = vmatprep.subr.bf16.mxu0 0
      %2564 = vmatpush1.bf16.xpose.msra.mxu0 0
      %2565 = vmatprep.subr.bf16.mxu0 0
      %2566 = vmatpush1.bf16.xpose.msra.mxu0 0
      %2567 = vmatprep.subr.bf16.mxu0 0
      %2568 = vmatpush1.bf16.xpose.msra.mxu0 0
      %2569 = vmatprep.subr.bf16.mxu0 0
      %2570 = vmatpush1.bf16.xpose.msra.mxu0 0
      %2571 = vmatprep.subr.bf16.mxu0 0
      %2572 = vmatpush1.bf16.xpose.msra.mxu0 0
      %2573 = vmatprep.subr.bf16.mxu0 0
      %2574 = vmatpush1.bf16.xpose.msra.mxu0 0
      %2575 = vmatprep.subr.bf16.mxu0 0
      %2576 = vmatpush1.bf16.xpose.msra.mxu0 0
      %2577 = vmatprep.subr.bf16.mxu0 0
      %2578 = vmatpush1.bf16.xpose.msra.mxu0 0
      %2579 = vmatprep.mubr.bf16.mxu0 0
      %2580 = vmatmul.mubr.bf16.gmra.mrb[0].mxu0 %v2542
      %v2581 = vpop.f32.mrb[0].mxu0
      %v2582 = vadd.f32 0.0, %v2581
      %v2583 = vpop.f32.mrb[0].mxu0
      %v2584 = vpop.f32.mrb[0].mxu0
      %v2585 = vpop.f32.mrb[0].mxu0
      %2586 = vdwg.mxu0
      %v2587 = vpack.c.bf16 %v2017, %v2017
      %v2588 = vpack.c.bf16 %v2489, %v2489
      %v2590 = vsel %vm342, %v2587, 0
      %v2593 = vsel %vm342, %v2588, 0
      %2595 = vmatprep.subr.bf16.mxu0 0
      %2596 = vmatpush1.bf16.xpose.msra.mxu0 %v2593
      %2597 = vmatprep.subr.bf16.mxu0 0
      %2598 = vmatpush1.bf16.xpose.msra.mxu0 0
      %2599 = vmatprep.subr.bf16.mxu0 0
      %2600 = vmatpush1.bf16.xpose.msra.mxu0 0
      %2601 = vmatprep.subr.bf16.mxu0 0
      %2602 = vmatpush1.bf16.xpose.msra.mxu0 0
      %2603 = vmatprep.subr.bf16.mxu0 0
      %2604 = vmatpush1.bf16.xpose.msra.mxu0 0
      %2605 = vmatprep.subr.bf16.mxu0 0
      %2606 = vmatpush1.bf16.xpose.msra.mxu0 0
      %2607 = vmatprep.subr.bf16.mxu0 0
      %2608 = vmatpush1.bf16.xpose.msra.mxu0 0
      %2609 = vmatprep.subr.bf16.mxu0 0
      %2610 = vmatpush1.bf16.xpose.msra.mxu0 0
      %2611 = vmatprep.subr.bf16.mxu0 0
      %2612 = vmatpush1.bf16.xpose.msra.mxu0 0
      %2613 = vmatprep.subr.bf16.mxu0 0
      %2614 = vmatpush1.bf16.xpose.msra.mxu0 0
      %2615 = vmatprep.subr.bf16.mxu0 0
      %2616 = vmatpush1.bf16.xpose.msra.mxu0 0
      %2617 = vmatprep.subr.bf16.mxu0 0
      %2618 = vmatpush1.bf16.xpose.msra.mxu0 0
      %2619 = vmatprep.subr.bf16.mxu0 0
      %2620 = vmatpush1.bf16.xpose.msra.mxu0 0
      %2621 = vmatprep.subr.bf16.mxu0 0
      %2622 = vmatpush1.bf16.xpose.msra.mxu0 0
      %2623 = vmatprep.subr.bf16.mxu0 0
      %2624 = vmatpush1.bf16.xpose.msra.mxu0 0
      %2625 = vmatprep.subr.bf16.mxu0 0
      %2626 = vmatpush1.bf16.xpose.msra.mxu0 0
      %2627 = vmatprep.mubr.bf16.mxu0 0
      %2628 = vmatmul.mubr.bf16.gmra.mrb[0].mxu0 %v2590
      %v2629 = vpop.f32.mrb[0].mxu0
      %v2630 = vadd.f32 0.0, %v2629
      %v2631 = vpop.f32.mrb[0].mxu0
      %v2632 = vpop.f32.mrb[0].mxu0
      %v2633 = vpop.f32.mrb[0].mxu0
      %2634 = vdwg.mxu0
      %v2635 = vpack.c.bf16 %v2020, %v2020
      %v2636 = vpack.c.bf16 %v2490, %v2490
      %v2638 = vsel %vm342, %v2635, 0
      %v2641 = vsel %vm342, %v2636, 0
      %2643 = vmatprep.subr.bf16.mxu0 0
      %2644 = vmatpush1.bf16.xpose.msra.mxu0 %v2641
      %2645 = vmatprep.subr.bf16.mxu0 0
      %2646 = vmatpush1.bf16.xpose.msra.mxu0 0
      %2647 = vmatprep.subr.bf16.mxu0 0
      %2648 = vmatpush1.bf16.xpose.msra.mxu0 0
      %2649 = vmatprep.subr.bf16.mxu0 0
      %2650 = vmatpush1.bf16.xpose.msra.mxu0 0
      %2651 = vmatprep.subr.bf16.mxu0 0
      %2652 = vmatpush1.bf16.xpose.msra.mxu0 0
      %2653 = vmatprep.subr.bf16.mxu0 0
      %2654 = vmatpush1.bf16.xpose.msra.mxu0 0
      %2655 = vmatprep.subr.bf16.mxu0 0
      %2656 = vmatpush1.bf16.xpose.msra.mxu0 0
      %2657 = vmatprep.subr.bf16.mxu0 0
      %2658 = vmatpush1.bf16.xpose.msra.mxu0 0
      %2659 = vmatprep.subr.bf16.mxu0 0
      %2660 = vmatpush1.bf16.xpose.msra.mxu0 0
      %2661 = vmatprep.subr.bf16.mxu0 0
      %2662 = vmatpush1.bf16.xpose.msra.mxu0 0
      %2663 = vmatprep.subr.bf16.mxu0 0
      %2664 = vmatpush1.bf16.xpose.msra.mxu0 0
      %2665 = vmatprep.subr.bf16.mxu0 0
      %2666 = vmatpush1.bf16.xpose.msra.mxu0 0
      %2667 = vmatprep.subr.bf16.mxu0 0
      %2668 = vmatpush1.bf16.xpose.msra.mxu0 0
      %2669 = vmatprep.subr.bf16.mxu0 0
      %2670 = vmatpush1.bf16.xpose.msra.mxu0 0
      %2671 = vmatprep.subr.bf16.mxu0 0
      %2672 = vmatpush1.bf16.xpose.msra.mxu0 0
      %2673 = vmatprep.subr.bf16.mxu0 0
      %2674 = vmatpush1.bf16.xpose.msra.mxu0 0
      %2675 = vmatprep.mubr.bf16.mxu0 0
      %2676 = vmatmul.mubr.bf16.gmra.mrb[0].mxu0 %v2638
      %v2677 = vpop.f32.mrb[0].mxu0
      %v2678 = vadd.f32 0.0, %v2677
      %v2679 = vpop.f32.mrb[0].mxu0
      %v2680 = vpop.f32.mrb[0].mxu0
      %v2681 = vpop.f32.mrb[0].mxu0
      %2682 = vdwg.mxu0
      %v2683 = vpack.c.bf16 %v2582, %v2534
      %v2684 = vpack.c.bf16 %v2678, %v2630
      %v2689 = vunpack.c.l.b16 %v1721
      %v2690 = vunpack.c.l.b16 %v1722
      %v2691 = vunpack.c.l.b16 %v1723
      %v2692 = vunpack.c.l.b16 %v1724
      %v2693 = vpack.c.b16 %v2690, %v2689
      %v2694 = vpack.c.b16 %v2692, %v2691
      %v2696 = vsel %vm525, %v2693, 0
      %v2699 = vsel %vm525, %v2694, 0
      %2701 = vmatprep.subr.bf16.mxu0 0
      %2702 = vmatpush1.bf16.msra.mxu0 %v2683
      %2703 = vmatprep.subr.bf16.mxu0 0
      %2704 = vmatpush1.bf16.msra.mxu0 %v2684
      %2705 = vmatprep.subr.bf16.mxu0 0
      %2706 = vmatpush1.bf16.msra.mxu0 0
      %2707 = vmatprep.subr.bf16.mxu0 0
      %2708 = vmatpush1.bf16.msra.mxu0 0
      %2709 = vmatprep.subr.bf16.mxu0 0
      %2710 = vmatpush1.bf16.msra.mxu0 0
      %2711 = vmatprep.subr.bf16.mxu0 0
      %2712 = vmatpush1.bf16.msra.mxu0 0
      %2713 = vmatprep.subr.bf16.mxu0 0
      %2714 = vmatpush1.bf16.msra.mxu0 0
      %2715 = vmatprep.subr.bf16.mxu0 0
      %2716 = vmatpush1.bf16.msra.mxu0 0
      %2717 = vmatprep.subr.bf16.mxu0 0
      %2718 = vmatpush1.bf16.msra.mxu0 0
      %2719 = vmatprep.subr.bf16.mxu0 0
      %2720 = vmatpush1.bf16.msra.mxu0 0
      %2721 = vmatprep.subr.bf16.mxu0 0
      %2722 = vmatpush1.bf16.msra.mxu0 0
      %2723 = vmatprep.subr.bf16.mxu0 0
      %2724 = vmatpush1.bf16.msra.mxu0 0
      %2725 = vmatprep.subr.bf16.mxu0 0
      %2726 = vmatpush1.bf16.msra.mxu0 0
      %2727 = vmatprep.subr.bf16.mxu0 0
      %2728 = vmatpush1.bf16.msra.mxu0 0
      %2729 = vmatprep.subr.bf16.mxu0 0
      %2730 = vmatpush1.bf16.msra.mxu0 0
      %2731 = vmatprep.subr.bf16.mxu0 0
      %2732 = vmatpush1.bf16.msra.mxu0 0
      %2733 = vmatprep.mubr.bf16.mxu0 0
      %2734 = vmatmul.mubr.bf16.gmra.mrb[0].mxu0 %v2696
      %v2735 = vpop.f32.mrb[0].mxu0
      %v2736 = vadd.f32 0.0, %v2735
      %v2737 = vpop.f32.mrb[0].mxu0
      %v2738 = vpop.f32.mrb[0].mxu0
      %v2739 = vadd.f32 0.0, %v2738
      %v2740 = vpop.f32.mrb[0].mxu0
      %2741 = vmatprep.mubr.bf16.mxu0 0
      %2742 = vmatmul.mubr.bf16.gmra.mrb[0].mxu0 %v2699
      %v2743 = vpop.f32.mrb[0].mxu0
      %v2744 = vadd.f32 0.0, %v2743
      %v2745 = vpop.f32.mrb[0].mxu0
      %v2746 = vpop.f32.mrb[0].mxu0
      %v2747 = vadd.f32 0.0, %v2746
      %v2748 = vpop.f32.mrb[0].mxu0
      %2749 = vdwg.mxu0
      %v2750 = vadd.f32 %v1694, %v2736
      %v2751 = vadd.f32 %v1695, %v2739
      %v2752 = vadd.f32 %v1696, %v2744
      %v2753 = vadd.f32 %v1697, %v2747
      %2754 = vset.pattern.permute.xlu0 6
      %2755 = vperm.xlu0 %2754, %v1731
      %v2756 = vpop.permute.xlu0 %2755
      %2758 = vset.pattern.permute.xlu0 6
      %2759 = vperm.xlu0 %2758, %v1732
      %v2760 = vpop.permute.xlu0 %2759
      %2762 = vset.pattern.permute.xlu0 6
      %2763 = vperm.xlu0 %2762, %v1733
      %v2764 = vpop.permute.xlu0 %2763
      %2766 = vset.pattern.permute.xlu0 6
      %2767 = vperm.xlu0 %2766, %v1734
      %v2768 = vpop.permute.xlu0 %2767
      %v2770 = vadd.f32 %v2750, %v2756
      %v2771 = vadd.f32 %v2751, %v2760
      %v2772 = vadd.f32 %v2752, %v2764
      %v2773 = vadd.f32 %v2753, %v2768
      %v2774 = vsel %vm342, %v2770, 0.0
      %v2775 = vsel %vm342, %v2771, 0.0
      %v2776 = vadd.f32 %v2774, %v2775
      %v2777 = vsel %vm342, %v2772, 0.0
      %v2778 = vadd.f32 %v2776, %v2777
      %v2779 = vsel %vm342, %v2773, 0.0
      %v2780 = vadd.f32 %v2778, %v2779
      %v2781 = vrot.slane %v2780, 4
      %v2782 = vadd.f32 %v2780, %v2781
      %v2783 = vrot.slane %v2782, 2
      %v2784 = vadd.f32 %v2782, %v2783
      %v2785 = vrot.slane %v2784, 1
      %v2786 = vadd.f32 %v2784, %v2785
      %v2787 = vmul.f32 %v2786, %v356
      %v2788 = vsub.f32 %v2770, %v2787
      %v2789 = vsub.f32 %v2771, %v2787
      %v2790 = vsub.f32 %v2772, %v2787
      %v2791 = vsub.f32 %v2773, %v2787
      %v2792 = vmul.f32 %v2788, %v2788
      %v2793 = vmul.f32 %v2789, %v2789
      %v2794 = vmul.f32 %v2790, %v2790
      %v2795 = vmul.f32 %v2791, %v2791
      %v2796 = vsel %vm342, %v2792, 0.0
      %v2797 = vsel %vm342, %v2793, 0.0
      %v2798 = vadd.f32 %v2796, %v2797
      %v2799 = vsel %vm342, %v2794, 0.0
      %v2800 = vadd.f32 %v2798, %v2799
      %v2801 = vsel %vm342, %v2795, 0.0
      %v2802 = vadd.f32 %v2800, %v2801
      %v2803 = vrot.slane %v2802, 4
      %v2804 = vadd.f32 %v2802, %v2803
      %v2805 = vrot.slane %v2804, 2
      %v2806 = vadd.f32 %v2804, %v2805
      %v2807 = vrot.slane %v2806, 1
      %v2808 = vadd.f32 %v2806, %v2807
      %v2809 = vmul.f32 %v2808, 0.032258064
      %v2810 = vrsqrt.pop %v2809
      %v2811 = vmul.f32 %v2809, %v2810
      %vm2812 = vcmp.eq.f32.partialorder %v2809, inf
      %v2813 = vsel %vm2812, %v2809, %v2811
      %vm2814 = vcmp.eq.f32.partialorder %v2809, 0.0
      %v2815 = vand.u32 %v2809, 2147483648
      %v2816 = vsel %vm2814, %v2815, %v2813
      %2817 = vset.pattern.permute.xlu0 4
      %2818 = vperm.xlu0 %2817, %v1731
      %v2819 = vpop.permute.xlu0 %2818
      %2821 = vset.pattern.permute.xlu0 4
      %2822 = vperm.xlu0 %2821, %v1732
      %v2823 = vpop.permute.xlu0 %2822
      %2825 = vset.pattern.permute.xlu0 4
      %2826 = vperm.xlu0 %2825, %v1733
      %v2827 = vpop.permute.xlu0 %2826
      %2829 = vset.pattern.permute.xlu0 4
      %2830 = vperm.xlu0 %2829, %v1734
      %v2831 = vpop.permute.xlu0 %2830
      %v2833 = vmul.f32 %v2819, %v2788
      %v2834 = vmul.f32 %v2823, %v2789
      %v2835 = vmul.f32 %v2827, %v2790
      %v2836 = vmul.f32 %v2831, %v2791
      %v2837 = vadd.f32 %v2816, 1e-06
      %v2838 = vrcp.pop %v2837
      %v2839 = vmul.f32 %v2833, %v2838
      %v2840 = vmul.f32 %v2834, %v2838
      %v2841 = vmul.f32 %v2835, %v2838
      %v2842 = vmul.f32 %v2836, %v2838
      %2843 = vset.pattern.permute.xlu0 5
      %2844 = vperm.xlu0 %2843, %v1731
      %v2845 = vpop.permute.xlu0 %2844
      %2847 = vset.pattern.permute.xlu0 5
      %2848 = vperm.xlu0 %2847, %v1732
      %v2849 = vpop.permute.xlu0 %2848
      %2851 = vset.pattern.permute.xlu0 5
      %2852 = vperm.xlu0 %2851, %v1733
      %v2853 = vpop.permute.xlu0 %2852
      %2855 = vset.pattern.permute.xlu0 5
      %2856 = vperm.xlu0 %2855, %v1734
      %v2857 = vpop.permute.xlu0 %2856
      %v2859 = vadd.f32 %v2839, %v2845
      %v2860 = vadd.f32 %v2840, %v2849
      %v2861 = vadd.f32 %v2841, %v2853
      %v2862 = vadd.f32 %v2842, %v2857
      %v2863 = vpack.c.bf16 %v2860, %v2859
      %v2864 = vpack.c.bf16 %v2862, %v2861
      %2865 = vset.pattern.permute.xlu0 1
      %2866 = vperm.xlu0 %2865, %v1731
      %v2867 = vpop.permute.xlu0 %2866
      %2869 = vset.pattern.permute.xlu0 1
      %2870 = vperm.xlu0 %2869, %v1732
      %v2871 = vpop.permute.xlu0 %2870
      %2873 = vset.pattern.permute.xlu0 1
      %2874 = vperm.xlu0 %2873, %v1733
      %v2875 = vpop.permute.xlu0 %2874
      %2877 = vset.pattern.permute.xlu0 1
      %2878 = vperm.xlu0 %2877, %v1734
      %v2879 = vpop.permute.xlu0 %2878
      %2881 = vset.pattern.permute.xlu0 1
      %2882 = vperm.xlu0 %2881, %v1735
      %v2883 = vpop.permute.xlu0 %2882
      %2885 = vset.pattern.permute.xlu0 1
      %2886 = vperm.xlu0 %2885, %v1736
      %v2887 = vpop.permute.xlu0 %2886
      %2889 = vset.pattern.permute.xlu0 1
      %2890 = vperm.xlu0 %2889, %v1737
      %v2891 = vpop.permute.xlu0 %2890
      %2893 = vset.pattern.permute.xlu0 1
      %2894 = vperm.xlu0 %2893, %v1738
      %v2895 = vpop.permute.xlu0 %2894
      %v2905 = vunpack.c.l.b16 %v1712
      %v2906 = vunpack.c.l.b16 %v1713
      %v2907 = vunpack.c.l.b16 %v1714
      %v2908 = vunpack.c.l.b16 %v1715
      %v2909 = vunpack.c.l.b16 %v1716
      %v2910 = vunpack.c.l.b16 %v1717
      %v2911 = vunpack.c.l.b16 %v1718
      %v2912 = vunpack.c.l.b16 %v1719
      %v2913 = vpack.c.b16 %v2906, %v2905
      %v2914 = vpack.c.b16 %v2908, %v2907
      %v2915 = vpack.c.b16 %v2910, %v2909
      %v2916 = vpack.c.b16 %v2912, %v2911
      %v2918 = vsel %vm525, %v2913, 0
      %v2921 = vsel %vm525, %v2914, 0
      %v2924 = vsel %vm525, %v2915, 0
      %v2927 = vsel %vm525, %v2916, 0
      %2929 = vmatprep.subr.bf16.mxu0 0
      %2930 = vmatpush1.bf16.msra.mxu0 %v2863
      %2931 = vmatprep.subr.bf16.mxu0 0
      %2932 = vmatpush1.bf16.msra.mxu0 %v2864
      %2933 = vmatprep.subr.bf16.mxu0 0
      %2934 = vmatpush1.bf16.msra.mxu0 0
      %2935 = vmatprep.subr.bf16.mxu0 0
      %2936 = vmatpush1.bf16.msra.mxu0 0
      %2937 = vmatprep.subr.bf16.mxu0 0
      %2938 = vmatpush1.bf16.msra.mxu0 0
      %2939 = vmatprep.subr.bf16.mxu0 0
      %2940 = vmatpush1.bf16.msra.mxu0 0
      %2941 = vmatprep.subr.bf16.mxu0 0
      %2942 = vmatpush1.bf16.msra.mxu0 0
      %2943 = vmatprep.subr.bf16.mxu0 0
      %2944 = vmatpush1.bf16.msra.mxu0 0
      %2945 = vmatprep.subr.bf16.mxu0 0
      %2946 = vmatpush1.bf16.msra.mxu0 0
      %2947 = vmatprep.subr.bf16.mxu0 0
      %2948 = vmatpush1.bf16.msra.mxu0 0
      %2949 = vmatprep.subr.bf16.mxu0 0
      %2950 = vmatpush1.bf16.msra.mxu0 0
      %2951 = vmatprep.subr.bf16.mxu0 0
      %2952 = vmatpush1.bf16.msra.mxu0 0
      %2953 = vmatprep.subr.bf16.mxu0 0
      %2954 = vmatpush1.bf16.msra.mxu0 0
      %2955 = vmatprep.subr.bf16.mxu0 0
      %2956 = vmatpush1.bf16.msra.mxu0 0
      %2957 = vmatprep.subr.bf16.mxu0 0
      %2958 = vmatpush1.bf16.msra.mxu0 0
      %2959 = vmatprep.subr.bf16.mxu0 0
      %2960 = vmatpush1.bf16.msra.mxu0 0
      %2961 = vmatprep.mubr.bf16.mxu0 0
      %2962 = vmatmul.mubr.bf16.gmra.mrb[0].mxu0 %v2918
      %v2963 = vpop.f32.mrb[0].mxu0
      %v2964 = vadd.f32 %v2867, %v2963
      %v2965 = vpop.f32.mrb[0].mxu0
      %v2966 = vpop.f32.mrb[0].mxu0
      %v2967 = vadd.f32 %v2871, %v2966
      %v2968 = vpop.f32.mrb[0].mxu0
      %2969 = vmatprep.mubr.bf16.mxu0 0
      %2970 = vmatmul.mubr.bf16.gmra.mrb[0].mxu0 %v2921
      %v2971 = vpop.f32.mrb[0].mxu0
      %v2972 = vadd.f32 %v2875, %v2971
      %v2973 = vpop.f32.mrb[0].mxu0
      %v2974 = vpop.f32.mrb[0].mxu0
      %v2975 = vadd.f32 %v2879, %v2974
      %v2976 = vpop.f32.mrb[0].mxu0
      %2977 = vmatprep.mubr.bf16.mxu0 0
      %2978 = vmatmul.mubr.bf16.gmra.mrb[0].mxu0 %v2924
      %v2979 = vpop.f32.mrb[0].mxu0
      %v2980 = vadd.f32 %v2883, %v2979
      %v2981 = vpop.f32.mrb[0].mxu0
      %v2982 = vpop.f32.mrb[0].mxu0
      %v2983 = vadd.f32 %v2887, %v2982
      %v2984 = vpop.f32.mrb[0].mxu0
      %2985 = vmatprep.mubr.bf16.mxu0 0
      %2986 = vmatmul.mubr.bf16.gmra.mrb[0].mxu0 %v2927
      %v2987 = vpop.f32.mrb[0].mxu0
      %v2988 = vadd.f32 %v2891, %v2987
      %v2989 = vpop.f32.mrb[0].mxu0
      %v2990 = vpop.f32.mrb[0].mxu0
      %v2991 = vadd.f32 %v2895, %v2990
      %v2992 = vpop.f32.mrb[0].mxu0
      %2993 = vdwg.mxu0
      %v2994 = vmax.f32 %v2964, 0.0
      %v2995 = vmax.f32 %v2967, 0.0
      %v2996 = vmax.f32 %v2972, 0.0
      %v2997 = vmax.f32 %v2975, 0.0
      %v2998 = vmax.f32 %v2980, 0.0
      %v2999 = vmax.f32 %v2983, 0.0
      %v3000 = vmax.f32 %v2988, 0.0
      %v3001 = vmax.f32 %v2991, 0.0
      %v3002 = vpack.c.bf16 %v2995, %v2994
      %v3003 = vpack.c.bf16 %v2997, %v2996
      %v3004 = vpack.c.bf16 %v2999, %v2998
      %v3005 = vpack.c.bf16 %v3001, %v3000
      %v3010 = vunpack.c.l.b16 %v1726
      %v3011 = vunpack.c.l.b16 %v1727
      %v3012 = vunpack.c.l.b16 %v1728
      %v3013 = vunpack.c.l.b16 %v1729
      %v3014 = vpack.c.b16 %v3011, %v3010
      %v3015 = vpack.c.b16 %v3013, %v3012
      %v3017 = vsel %vm1618, %v3014, 0
      %v3020 = vsel %vm1618, %v3015, 0
      %3022 = vmatprep.subr.bf16.mxu0 0
      %3023 = vmatpush1.bf16.msra.mxu0 %v3002
      %3024 = vmatprep.subr.bf16.mxu0 0
      %3025 = vmatpush1.bf16.msra.mxu0 %v3003
      %3026 = vmatprep.subr.bf16.mxu0 0
      %3027 = vmatpush1.bf16.msra.mxu0 %v3004
      %3028 = vmatprep.subr.bf16.mxu0 0
      %3029 = vmatpush1.bf16.msra.mxu0 %v3005
      %3030 = vmatprep.subr.bf16.mxu0 0
      %3031 = vmatpush1.bf16.msra.mxu0 0
      %3032 = vmatprep.subr.bf16.mxu0 0
      %3033 = vmatpush1.bf16.msra.mxu0 0
      %3034 = vmatprep.subr.bf16.mxu0 0
      %3035 = vmatpush1.bf16.msra.mxu0 0
      %3036 = vmatprep.subr.bf16.mxu0 0
      %3037 = vmatpush1.bf16.msra.mxu0 0
      %3038 = vmatprep.subr.bf16.mxu0 0
      %3039 = vmatpush1.bf16.msra.mxu0 0
      %3040 = vmatprep.subr.bf16.mxu0 0
      %3041 = vmatpush1.bf16.msra.mxu0 0
      %3042 = vmatprep.subr.bf16.mxu0 0
      %3043 = vmatpush1.bf16.msra.mxu0 0
      %3044 = vmatprep.subr.bf16.mxu0 0
      %3045 = vmatpush1.bf16.msra.mxu0 0
      %3046 = vmatprep.subr.bf16.mxu0 0
      %3047 = vmatpush1.bf16.msra.mxu0 0
      %3048 = vmatprep.subr.bf16.mxu0 0
      %3049 = vmatpush1.bf16.msra.mxu0 0
      %3050 = vmatprep.subr.bf16.mxu0 0
      %3051 = vmatpush1.bf16.msra.mxu0 0
      %3052 = vmatprep.subr.bf16.mxu0 0
      %3053 = vmatpush1.bf16.msra.mxu0 0
      %3054 = vmatprep.mubr.bf16.mxu0 0
      %3055 = vmatmul.mubr.bf16.gmra.mrb[0].mxu0 %v3017
      %v3056 = vpop.f32.mrb[0].mxu0
      %v3057 = vadd.f32 0.0, %v3056
      %v3058 = vpop.f32.mrb[0].mxu0
      %v3059 = vpop.f32.mrb[0].mxu0
      %v3060 = vadd.f32 0.0, %v3059
      %v3061 = vpop.f32.mrb[0].mxu0
      %3062 = vmatprep.mubr.bf16.mxu0 0
      %3063 = vmatmul.mubr.bf16.gmra.mrb[0].mxu0 %v3020
      %v3064 = vpop.f32.mrb[0].mxu0
      %v3065 = vadd.f32 0.0, %v3064
      %v3066 = vpop.f32.mrb[0].mxu0
      %v3067 = vpop.f32.mrb[0].mxu0
      %v3068 = vadd.f32 0.0, %v3067
      %v3069 = vpop.f32.mrb[0].mxu0
      %3070 = vdwg.mxu0
      %v3071 = vadd.f32 %v2770, %v3057
      %v3072 = vadd.f32 %v2771, %v3060
      %v3073 = vadd.f32 %v2772, %v3065
      %v3074 = vadd.f32 %v2773, %v3068
      %3075 = vset.pattern.permute.xlu0 7
      %3076 = vperm.xlu0 %3075, %v1731
      %v3077 = vpop.permute.xlu0 %3076
      %3079 = vset.pattern.permute.xlu0 7
      %3080 = vperm.xlu0 %3079, %v1732
      %v3081 = vpop.permute.xlu0 %3080
      %3083 = vset.pattern.permute.xlu0 7
      %3084 = vperm.xlu0 %3083, %v1733
      %v3085 = vpop.permute.xlu0 %3084
      %3087 = vset.pattern.permute.xlu0 7
      %3088 = vperm.xlu0 %3087, %v1734
      %v3089 = vpop.permute.xlu0 %3088
      %v3091 = vadd.f32 %v3071, %v3077
      %v3092 = vadd.f32 %v3072, %v3081
      %v3093 = vadd.f32 %v3073, %v3085
      %v3094 = vadd.f32 %v3074, %v3089
      %s3095 = scalar_lea.vmem %s6, 192
      %v3096 = vld [vmem:[%s3095] sm:$0xff]
      %v3097 = vld [vmem:[%s3095 + $0x8] sm:$0xff]
      %v3098 = vld [vmem:[%s3095 + $0x10] sm:$0xff]
      %v3099 = vld [vmem:[%s3095 + $0x18] sm:$0xff]
      %v3100 = vsel %vm342, %v3091, 0.0
      %v3101 = vsel %vm342, %v3092, 0.0
      %v3102 = vadd.f32 %v3100, %v3101
      %v3103 = vsel %vm342, %v3093, 0.0
      %v3104 = vadd.f32 %v3102, %v3103
      %v3105 = vsel %vm342, %v3094, 0.0
      %v3106 = vadd.f32 %v3104, %v3105
      %v3107 = vrot.slane %v3106, 4
      %v3108 = vadd.f32 %v3106, %v3107
      %v3109 = vrot.slane %v3108, 2
      %v3110 = vadd.f32 %v3108, %v3109
      %v3111 = vrot.slane %v3110, 1
      %v3112 = vadd.f32 %v3110, %v3111
      %v3113 = vmul.f32 %v3112, %v356
      %v3114 = vsub.f32 %v3091, %v3113
      %v3115 = vsub.f32 %v3092, %v3113
      %v3116 = vsub.f32 %v3093, %v3113
      %v3117 = vsub.f32 %v3094, %v3113
      %v3118 = vmul.f32 %v3114, %v3114
      %v3119 = vmul.f32 %v3115, %v3115
      %v3120 = vmul.f32 %v3116, %v3116
      %v3121 = vmul.f32 %v3117, %v3117
      %v3122 = vsel %vm342, %v3118, 0.0
      %v3123 = vsel %vm342, %v3119, 0.0
      %v3124 = vadd.f32 %v3122, %v3123
      %v3125 = vsel %vm342, %v3120, 0.0
      %v3126 = vadd.f32 %v3124, %v3125
      %v3127 = vsel %vm342, %v3121, 0.0
      %v3128 = vadd.f32 %v3126, %v3127
      %v3129 = vrot.slane %v3128, 4
      %v3130 = vadd.f32 %v3128, %v3129
      %v3131 = vrot.slane %v3130, 2
      %v3132 = vadd.f32 %v3130, %v3131
      %v3133 = vrot.slane %v3132, 1
      %v3134 = vadd.f32 %v3132, %v3133
      %v3135 = vmul.f32 %v3134, 0.032258064
      %v3136 = vrsqrt.pop %v3135
      %v3137 = vmul.f32 %v3135, %v3136
      %vm3138 = vcmp.eq.f32.partialorder %v3135, inf
      %v3139 = vsel %vm3138, %v3135, %v3137
      %vm3140 = vcmp.eq.f32.partialorder %v3135, 0.0
      %v3141 = vand.u32 %v3135, 2147483648
      %v3142 = vsel %vm3140, %v3141, %v3139
      %3144 = vset.pattern.permute.xlu0 0
      %3145 = vperm.xlu0 %3144, %v3096
      %v3146 = vpop.permute.xlu0 %3145
      %3149 = vset.pattern.permute.xlu0 0
      %3150 = vperm.xlu0 %3149, %v3097
      %v3151 = vpop.permute.xlu0 %3150
      %3154 = vset.pattern.permute.xlu0 0
      %3155 = vperm.xlu0 %3154, %v3098
      %v3156 = vpop.permute.xlu0 %3155
      %3159 = vset.pattern.permute.xlu0 0
      %3160 = vperm.xlu0 %3159, %v3099
      %v3161 = vpop.permute.xlu0 %3160
      %v3163 = vmul.f32 %v3146, %v3114
      %v3164 = vmul.f32 %v3151, %v3115
      %v3165 = vmul.f32 %v3156, %v3116
      %v3166 = vmul.f32 %v3161, %v3117
      %v3167 = vadd.f32 %v3142, 1e-06
      %v3168 = vrcp.pop %v3167
      %v3169 = vmul.f32 %v3163, %v3168
      %v3170 = vmul.f32 %v3164, %v3168
      %v3171 = vmul.f32 %v3165, %v3168
      %v3172 = vmul.f32 %v3166, %v3168
      %3173 = vset.pattern.permute.xlu0 1
      %3174 = vperm.xlu0 %3173, %v3096
      %v3175 = vpop.permute.xlu0 %3174
      %3177 = vset.pattern.permute.xlu0 1
      %3178 = vperm.xlu0 %3177, %v3097
      %v3179 = vpop.permute.xlu0 %3178
      %3181 = vset.pattern.permute.xlu0 1
      %3182 = vperm.xlu0 %3181, %v3098
      %v3183 = vpop.permute.xlu0 %3182
      %3185 = vset.pattern.permute.xlu0 1
      %3186 = vperm.xlu0 %3185, %v3099
      %v3187 = vpop.permute.xlu0 %3186
      %v3189 = vadd.f32 %v3169, %v3175
      %v3190 = vadd.f32 %v3170, %v3179
      %v3191 = vadd.f32 %v3171, %v3183
      %v3192 = vadd.f32 %v3172, %v3187
      %3193 = vst.msk [vmem:[%s295] sm:$0xff] %vm342, %v3189
      %3194 = vst.msk [vmem:[%s295 + $0x8] sm:$0xff] %vm342, %v3190
      %3195 = vst.msk [vmem:[%s295 + $0x10] sm:$0xff] %vm342, %v3191
      %3196 = vst.msk [vmem:[%s295 + $0x18] sm:$0xff] %vm342, %v3192
      %p3197 = scmp.lt.s32.totalorder %s18, 1
      %s3198 = scalar_select %p3197, %s18, 1
      %s3199 = smul.addr %s3198, 4
      %s3200 = smul.addr %s3199, 8
      %s3201 = scalar_lea.vmem %s7, %s3200
      // Predicated region
      $region49: #{tpu_custom_call.1} parent=47 // pred_check
        %p3202 = pneg %p193
      $region50: #{tpu_custom_call.1} parent=47 // pred_check_branch
        %3204 = sbr.rel (%p3202) target = $region52
      $region51: #{tpu_custom_call.1} parent=47 // pred_region
        _
      $region52: #{tpu_custom_call.1} parent=47 // pred_fallthru
        _
    $region48: #{tpu_custom_call.1} parent=5 // pred_fallthru
      _
    %p3205 = scmp.le.s32.totalorder 2, %s13
    // Predicated region
    $region53: #{tpu_custom_call.1} parent=5 // pred_check
      %p3206 = pneg %p3205
    $region54: #{tpu_custom_call.1} parent=5 // pred_check_branch
      %3208 = sbr.rel (%p3206) target = $region56
    $region55: #{tpu_custom_call.1} parent=5 // pred_region
      %s3209 = ssub.s32 %s13, 2
      // Predicated region
      $region57: #{tpu_custom_call.1} parent=55 // pred_check
        %p3210 = pneg %p199
      $region58: #{tpu_custom_call.1} parent=55 // pred_check_branch
        %3212 = sbr.rel (%p3210) target = $region60
      $region59: #{tpu_custom_call.1} parent=55 // pred_region
        %p3213 = scmp.lt.s32.totalorder %s19, 1
        %s3214 = scalar_select %p3213, %s19, 1
        %s3215 = smul.addr %s3214, 4
        %s3216 = smul.addr %s3215, 8
        %s3217 = scalar_lea.vmem %s7, %s3216
      $region60: #{tpu_custom_call.1} parent=55 // pred_fallthru
        _
    $region56: #{tpu_custom_call.1} parent=5 // pred_fallthru
      _
  $region6: #{tpu_custom_call.1} parent=0 // loop_footer
    %s17 = sadd.s32 1, %s13
  $region7: #{tpu_custom_call.1} parent=0 // loop_footer_branch
    %12 = sbr.rel target = $region3
  $region8: #{tpu_custom_call.1} parent=0 // loop_exit
    _

</llo_original>
